<compile_context>
chip_gen: v7x
topology: tpu7x:2x2x1
jax: 0.10.0
libtpu: 0.0.40
codegen_flags: <defaults>
</compile_context>

<pallas_src>
import jax
import jax.numpy as jnp
from jax.experimental import pallas as pl
from jax.experimental.pallas import tpu as pltpu

# ---------------- config (small synthetic CLIP-text) ----------------
VOCAB = 64
SEQ = 8
D_MODEL = 32
N_HEADS = 4
HEAD_DIM = D_MODEL // N_HEADS
N_LAYERS = 2
PROJ_DIM = 16
LN_EPS = 1e-5
NEG_INF = -1e9            # stands in for -inf in the causal mask
MXU_DTYPE = jnp.bfloat16  # matmul operand dtype (f32 accumulation)


# ---------------- in-kernel helpers ----------------
def _mm(a, w):
    """MXU matmul: bf16 operands, f32 accumulation."""
    return jnp.dot(a.astype(MXU_DTYPE), w.astype(MXU_DTYPE),
                   preferred_element_type=jnp.float32)


def _layernorm(x, g, b):
    mu = jnp.mean(x, axis=-1, keepdims=True)
    var = jnp.mean((x - mu) ** 2, axis=-1, keepdims=True)
    xn = (x - mu) * jax.lax.rsqrt(var + LN_EPS)
    return xn * g.reshape(1, -1) + b.reshape(1, -1)


# ---------------- fused encoder kernel ----------------
def _encoder_kernel(eot_ref,                      # scalar prefetch (SMEM, (B,))
                    x_ref,                        # (1, S, D) activation block
                    in_w_ref, in_b_ref, out_w_ref, out_b_ref,
                    ln1_g_ref, ln1_b_ref, ln2_g_ref, ln2_b_ref,
                    fc_w_ref, fc_b_ref, pr_w_ref, pr_b_ref,
                    lnf_g_ref, lnf_b_ref, tproj_ref,
                    o_ref):                       # (1, 1, PROJ_DIM)
    b = pl.program_id(0)
    x = x_ref[0].astype(jnp.float32)              # (S, D)

    # causal additive mask built in-kernel (no HBM input needed)
    rows = jax.lax.broadcasted_iota(jnp.int32, (SEQ, SEQ), 0)
    cols = jax.lax.broadcasted_iota(jnp.int32, (SEQ, SEQ), 1)
    causal = jnp.where(cols <= rows, 0.0, NEG_INF).astype(jnp.float32)

    scale = HEAD_DIM ** -0.5

    for l in range(N_LAYERS):                     # statically unrolled (L = 2)
        # ---- multi-head self-attention sub-block (pre-LN) ----
        h = _layernorm(x, ln1_g_ref[l], ln1_b_ref[l])
        qkv = _mm(h, in_w_ref[l]) + in_b_ref[l]   # (S, 3D)
        q = qkv[:, 0:D_MODEL] * scale
        k = qkv[:, D_MODEL:2 * D_MODEL]
        v = qkv[:, 2 * D_MODEL:3 * D_MODEL]

        # per-head attention fused with the output projection:
        #   attn_out = sum_h softmax(q_h k_h^T + mask) v_h @ W_out[h]
        attn = jnp.zeros((SEQ, D_MODEL), jnp.float32) + out_b_ref[l]
        for hh in range(N_HEADS):
            lo, hi = hh * HEAD_DIM, (hh + 1) * HEAD_DIM
            qh, kh, vh = q[:, lo:hi], k[:, lo:hi], v[:, lo:hi]
            s = jax.lax.dot_general(qh, kh, (((1,), (1,)), ((), ())),
                                    preferred_element_type=jnp.float32)
            s = s + causal
            s = s - jnp.max(s, axis=-1, keepdims=True)
            p = jnp.exp(s)                        # EUP
            p = p * pl.reciprocal(jnp.sum(p, axis=-1, keepdims=True),
                                  approx=True)    # EUP, frees the VALU slot
            oh = jnp.dot(p, vh, preferred_element_type=jnp.float32)
            attn = attn + _mm(oh, out_w_ref[l][lo:hi, :])
        x = x + attn                              # fused residual

        # ---- MLP sub-block (pre-LN, QuickGELU) ----
        h = _layernorm(x, ln2_g_ref[l], ln2_b_ref[l])
        h = _mm(h, fc_w_ref[l]) + fc_b_ref[l]     # (S, 4D)
        h = h * jax.nn.sigmoid(1.702 * h)         # QuickGELU
        x = x + _mm(h, pr_w_ref[l]) + pr_b_ref[l]  # fused residual

    # ---- final LN, EOT pooling, text projection ----
    x = _layernorm(x, lnf_g_ref[...], lnf_b_ref[...])
    e = eot_ref[b]                                # EOT position for this batch
    sel = (jax.lax.broadcasted_iota(jnp.int32, (SEQ, 1), 0) == e)
    pooled = jnp.sum(sel.astype(jnp.float32) * x, axis=0, keepdims=True)  # (1, D)
    feat = _mm(pooled, tproj_ref[...])            # (1, PROJ_DIM), no bias
    o_ref[0] = feat.astype(o_ref.dtype)


# ---------------- wrapper ----------------
def clip_text_encoder(text, params):
    """text: (B, 1, S) int32 token ids  ->  (B, PROJ_DIM) float32 features."""
    text = jnp.squeeze(text, axis=1)              # matches text.squeeze(1)
    B, S = text.shape

    # token embedding gather + positional embedding (plain-JAX glue)
    x = jnp.take(params['token_embedding'], text, axis=0)       # (B, S, D)
    x = x + params['positional_embedding'][None]
    eot = jnp.argmax(text, axis=-1).astype(jnp.int32)           # (B,)

    inputs = (x,
              params['in_w'], params['in_b'],
              params['out_w'], params['out_b'],
              params['ln1_g'], params['ln1_b'],
              params['ln2_g'], params['ln2_b'],
              params['fc_w'], params['fc_b'],
              params['proj_w'], params['proj_b'],
              params['lnf_g'], params['lnf_b'],
              params['text_projection'])

    def full_spec(a):
        nd = a.ndim
        return pl.BlockSpec(a.shape, lambda b, e, nd=nd: (0,) * nd)

    in_specs = [pl.BlockSpec((1, S, D_MODEL), lambda b, e: (b, 0, 0))]
    in_specs += [full_spec(a) for a in inputs[1:]]

    out = pl.pallas_call(
        _encoder_kernel,
        grid_spec=pltpu.PrefetchScalarGridSpec(
            num_scalar_prefetch=1,
            grid=(B,),
            in_specs=in_specs,
            out_specs=pl.BlockSpec((1, 1, PROJ_DIM), lambda b, e: (b, 0, 0)),
        ),
        out_shape=jax.ShapeDtypeStruct((B, 1, PROJ_DIM), jnp.float32),
        compiler_params=pltpu.CompilerParams(
            dimension_semantics=("parallel",)),
    )(eot, *inputs)
    return out[:, 0, :]


# ---------------- deterministic parameter init ----------------
def init_params(key):
    keys = jax.random.split(key, 3 + N_LAYERS)

    def nrm(k, shape, scale=0.02):
        return (scale * jax.random.normal(k, shape)).astype(jnp.float32)

    layer_keys = [jax.random.split(keys[3 + l], 4) for l in range(N_LAYERS)]
    stack = lambda fn: jnp.stack([fn(l) for l in range(N_LAYERS)])

    params = {
        'token_embedding': nrm(keys[0], (VOCAB, D_MODEL)),
        'positional_embedding': nrm(keys[1], (SEQ, D_MODEL), 0.01),
        'text_projection': nrm(keys[2], (D_MODEL, PROJ_DIM)),
        'lnf_g': jnp.ones((1, D_MODEL), jnp.float32),
        'lnf_b': jnp.zeros((1, D_MODEL), jnp.float32),
        # per-layer weights stacked along a leading layer dim
        'in_w': stack(lambda l: nrm(layer_keys[l][0], (D_MODEL, 3 * D_MODEL))),
        'in_b': jnp.zeros((N_LAYERS, 1, 3 * D_MODEL), jnp.float32),
        'out_w': stack(lambda l: nrm(layer_keys[l][1], (D_MODEL, D_MODEL))),
        'out_b': jnp.zeros((N_LAYERS, 1, D_MODEL), jnp.float32),
        'ln1_g': jnp.ones((N_LAYERS, 1, D_MODEL), jnp.float32),
        'ln1_b': jnp.zeros((N_LAYERS, 1, D_MODEL), jnp.float32),
        'ln2_g': jnp.ones((N_LAYERS, 1, D_MODEL), jnp.float32),
        'ln2_b': jnp.zeros((N_LAYERS, 1, D_MODEL), jnp.float32),
        'fc_w': stack(lambda l: nrm(layer_keys[l][2], (D_MODEL, 4 * D_MODEL))),
        'fc_b': jnp.zeros((N_LAYERS, 1, 4 * D_MODEL), jnp.float32),
        'proj_w': stack(lambda l: nrm(layer_keys[l][3], (4 * D_MODEL, D_MODEL))),
        'proj_b': jnp.zeros((N_LAYERS, 1, D_MODEL), jnp.float32),
    }
    return params


if __name__ == "__main__":
    key = jax.random.PRNGKey(0)
    pkey, tkey = jax.random.split(key)
    params = init_params(pkey)
    text = jax.random.randint(tkey, (2, 1, SEQ), 0, VOCAB, dtype=jnp.int32)

    out = jax.jit(clip_text_encoder)(text, params)
    out = jax.block_until_ready(out)

    assert out.shape == (2, PROJ_DIM), out.shape
    assert bool(jnp.all(jnp.isfinite(out)))
    print("KERNEL_OK")
</pallas_src>

<mosaic_0001>
module attributes {stable_mosaic.version = 11 : i64} {
  func.func @_encoder_kernel(%arg0: i32, %arg1: memref<2xi32, #tpu.memory_space<smem>>, %arg2: memref<1x8x32xf32, #tpu.memory_space<vmem>>, %arg3: memref<2x32x96xf32, #tpu.memory_space<vmem>>, %arg4: memref<2x1x96xf32, #tpu.memory_space<vmem>>, %arg5: memref<2x32x32xf32, #tpu.memory_space<vmem>>, %arg6: memref<2x1x32xf32, #tpu.memory_space<vmem>>, %arg7: memref<2x1x32xf32, #tpu.memory_space<vmem>>, %arg8: memref<2x1x32xf32, #tpu.memory_space<vmem>>, %arg9: memref<2x1x32xf32, #tpu.memory_space<vmem>>, %arg10: memref<2x1x32xf32, #tpu.memory_space<vmem>>, %arg11: memref<2x32x128xf32, #tpu.memory_space<vmem>>, %arg12: memref<2x1x128xf32, #tpu.memory_space<vmem>>, %arg13: memref<2x128x32xf32, #tpu.memory_space<vmem>>, %arg14: memref<2x1x32xf32, #tpu.memory_space<vmem>>, %arg15: memref<1x32xf32, #tpu.memory_space<vmem>>, %arg16: memref<1x32xf32, #tpu.memory_space<vmem>>, %arg17: memref<32x16xf32, #tpu.memory_space<vmem>>, %arg18: memref<1x1x16xf32, #tpu.memory_space<vmem>>) attributes {dimension_semantics = [#tpu.dimension_semantics<parallel>], iteration_bounds = array<i64: 2>, scalar_prefetch = 1 : i64, scratch_operands = 0 : i64, tpu.core_type = #tpu.core_type<tc>, window_params = [{transform_indices = @transform_0, window_bounds = array<i64: 1, 8, 32>}, {pipeline_mode = #tpu.pipeline_mode<synchronous>, transform_indices = @transform_1, window_bounds = array<i64: 2, 32, 96>}, {pipeline_mode = #tpu.pipeline_mode<synchronous>, transform_indices = @transform_2, window_bounds = array<i64: 2, 1, 96>}, {pipeline_mode = #tpu.pipeline_mode<synchronous>, transform_indices = @transform_3, window_bounds = array<i64: 2, 32, 32>}, {pipeline_mode = #tpu.pipeline_mode<synchronous>, transform_indices = @transform_4, window_bounds = array<i64: 2, 1, 32>}, {pipeline_mode = #tpu.pipeline_mode<synchronous>, transform_indices = @transform_5, window_bounds = array<i64: 2, 1, 32>}, {pipeline_mode = #tpu.pipeline_mode<synchronous>, transform_indices = @transform_6, window_bounds = array<i64: 2, 1, 32>}, {pipeline_mode = #tpu.pipeline_mode<synchronous>, transform_indices = @transform_7, window_bounds = array<i64: 2, 1, 32>}, {pipeline_mode = #tpu.pipeline_mode<synchronous>, transform_indices = @transform_8, window_bounds = array<i64: 2, 1, 32>}, {pipeline_mode = #tpu.pipeline_mode<synchronous>, transform_indices = @transform_9, window_bounds = array<i64: 2, 32, 128>}, {pipeline_mode = #tpu.pipeline_mode<synchronous>, transform_indices = @transform_10, window_bounds = array<i64: 2, 1, 128>}, {pipeline_mode = #tpu.pipeline_mode<synchronous>, transform_indices = @transform_11, window_bounds = array<i64: 2, 128, 32>}, {pipeline_mode = #tpu.pipeline_mode<synchronous>, transform_indices = @transform_12, window_bounds = array<i64: 2, 1, 32>}, {pipeline_mode = #tpu.pipeline_mode<synchronous>, transform_indices = @transform_13, window_bounds = array<i64: 1, 32>}, {pipeline_mode = #tpu.pipeline_mode<synchronous>, transform_indices = @transform_14, window_bounds = array<i64: 1, 32>}, {pipeline_mode = #tpu.pipeline_mode<synchronous>, transform_indices = @transform_15, window_bounds = array<i64: 32, 16>}, {transform_indices = @transform_16, window_bounds = array<i64: 1, 1, 16>}]} {
    %c0 = arith.constant 0 : index
    %c0_0 = arith.constant 0 : index
    %c0_1 = arith.constant 0 : index
    %0 = vector.load %arg2[%c0, %c0_0, %c0_1] : memref<1x8x32xf32, #tpu.memory_space<vmem>>, vector<1x8x32xf32>
    %1 = vector.shape_cast %0 : vector<1x8x32xf32> to vector<8x32xf32>
    %2 = tpu.iota {dimensions = array<i32: 0>} : vector<8x8xi32>
    %3 = tpu.iota {dimensions = array<i32: 1>} : vector<8x8xi32>
    %4 = arith.cmpi sle, %3, %2 : vector<8x8xi32>
    %cst = arith.constant 0.000000e+00 : f32
    %cst_2 = arith.constant -1.000000e+09 : f32
    %5 = vector.broadcast %cst : f32 to vector<8x8xf32>
    %6 = vector.broadcast %cst_2 : f32 to vector<8x8xf32>
    %7 = arith.select %4, %5, %6 : vector<8x8xi1>, vector<8x8xf32>
    %c0_3 = arith.constant 0 : index
    %c0_4 = arith.constant 0 : index
    %c0_5 = arith.constant 0 : index
    %8 = vector.load %arg7[%c0_3, %c0_4, %c0_5] : memref<2x1x32xf32, #tpu.memory_space<vmem>>, vector<1x1x32xf32>
    %9 = vector.shape_cast %8 : vector<1x1x32xf32> to vector<1x32xf32>
    %c0_6 = arith.constant 0 : index
    %c0_7 = arith.constant 0 : index
    %c0_8 = arith.constant 0 : index
    %10 = vector.load %arg8[%c0_6, %c0_7, %c0_8] : memref<2x1x32xf32, #tpu.memory_space<vmem>>, vector<1x1x32xf32>
    %11 = vector.shape_cast %10 : vector<1x1x32xf32> to vector<1x32xf32>
    %cst_9 = arith.constant dense<0.000000e+00> : vector<8xf32>
    %12 = vector.multi_reduction <add>, %1, %cst_9 [1] : vector<8x32xf32> to vector<8xf32>
    %13 = vector.shape_cast %12 : vector<8xf32> to vector<8x1xf32>
    %cst_10 = arith.constant 3.200000e+01 : f32
    %14 = vector.broadcast %cst_10 : f32 to vector<8x1xf32>
    %15 = arith.divf %13, %14 : vector<8x1xf32>
    %16 = vector.broadcast %15 : vector<8x1xf32> to vector<8x32xf32>
    %17 = arith.subf %1, %16 : vector<8x32xf32>
    %18 = arith.mulf %17, %17 : vector<8x32xf32>
    %cst_11 = arith.constant dense<0.000000e+00> : vector<8xf32>
    %19 = vector.multi_reduction <add>, %18, %cst_11 [1] : vector<8x32xf32> to vector<8xf32>
    %20 = vector.shape_cast %19 : vector<8xf32> to vector<8x1xf32>
    %cst_12 = arith.constant 3.200000e+01 : f32
    %21 = vector.broadcast %cst_12 : f32 to vector<8x1xf32>
    %22 = arith.divf %20, %21 : vector<8x1xf32>
    %23 = vector.broadcast %15 : vector<8x1xf32> to vector<8x32xf32>
    %24 = arith.subf %1, %23 : vector<8x32xf32>
    %cst_13 = arith.constant 9.99999974E-6 : f32
    %25 = vector.broadcast %cst_13 : f32 to vector<8x1xf32>
    %26 = arith.addf %22, %25 : vector<8x1xf32>
    %27 = math.rsqrt %26 : vector<8x1xf32>
    %28 = vector.broadcast %27 : vector<8x1xf32> to vector<8x32xf32>
    %29 = arith.mulf %24, %28 : vector<8x32xf32>
    %30 = vector.broadcast %9 : vector<1x32xf32> to vector<8x32xf32>
    %31 = arith.mulf %29, %30 : vector<8x32xf32>
    %32 = vector.broadcast %11 : vector<1x32xf32> to vector<8x32xf32>
    %33 = arith.addf %31, %32 : vector<8x32xf32>
    %c0_14 = arith.constant 0 : index
    %c0_15 = arith.constant 0 : index
    %c0_16 = arith.constant 0 : index
    %34 = vector.load %arg3[%c0_14, %c0_15, %c0_16] : memref<2x32x96xf32, #tpu.memory_space<vmem>>, vector<1x32x96xf32>
    %35 = vector.shape_cast %34 : vector<1x32x96xf32> to vector<32x96xf32>
    %36 = arith.truncf %33 : vector<8x32xf32> to vector<8x32xbf16>
    %37 = arith.truncf %35 : vector<32x96xf32> to vector<32x96xbf16>
    %cst_17 = arith.constant dense<0.000000e+00> : vector<8x96xf32>
    %38 = tpu.matmul %36, %37, %cst_17 {dimension_numbers = #tpu.dot_dimension_numbers<[1], [0], [0], [1], [0, 0, 1, 1], [], []>} : vector<8x32xbf16>, vector<32x96xbf16>, vector<8x96xf32> -> vector<8x96xf32>
    %c0_18 = arith.constant 0 : index
    %c0_19 = arith.constant 0 : index
    %c0_20 = arith.constant 0 : index
    %39 = vector.load %arg4[%c0_18, %c0_19, %c0_20] : memref<2x1x96xf32, #tpu.memory_space<vmem>>, vector<1x1x96xf32>
    %40 = vector.shape_cast %39 : vector<1x1x96xf32> to vector<1x96xf32>
    %41 = vector.broadcast %40 : vector<1x96xf32> to vector<8x96xf32>
    %42 = arith.addf %38, %41 : vector<8x96xf32>
    %43 = vector.extract_strided_slice %42 {offsets = [0, 0], sizes = [8, 32], strides = [1, 1]} : vector<8x96xf32> to vector<8x32xf32>
    %cst_21 = arith.constant 0.353553385 : f32
    %44 = vector.broadcast %cst_21 : f32 to vector<8x32xf32>
    %45 = arith.mulf %43, %44 : vector<8x32xf32>
    %46 = vector.extract_strided_slice %42 {offsets = [0, 32], sizes = [8, 32], strides = [1, 1]} : vector<8x96xf32> to vector<8x32xf32>
    %47 = vector.extract_strided_slice %42 {offsets = [0, 64], sizes = [8, 32], strides = [1, 1]} : vector<8x96xf32> to vector<8x32xf32>
    %cst_22 = arith.constant 0.000000e+00 : f32
    %48 = vector.broadcast %cst_22 : f32 to vector<8x32xf32>
    %c0_23 = arith.constant 0 : index
    %c0_24 = arith.constant 0 : index
    %c0_25 = arith.constant 0 : index
    %49 = vector.load %arg6[%c0_23, %c0_24, %c0_25] : memref<2x1x32xf32, #tpu.memory_space<vmem>>, vector<1x1x32xf32>
    %50 = vector.shape_cast %49 : vector<1x1x32xf32> to vector<1x32xf32>
    %51 = vector.broadcast %50 : vector<1x32xf32> to vector<8x32xf32>
    %52 = arith.addf %48, %51 : vector<8x32xf32>
    %53 = vector.extract_strided_slice %45 {offsets = [0, 0], sizes = [8, 8], strides = [1, 1]} : vector<8x32xf32> to vector<8x8xf32>
    %54 = vector.extract_strided_slice %46 {offsets = [0, 0], sizes = [8, 8], strides = [1, 1]} : vector<8x32xf32> to vector<8x8xf32>
    %55 = vector.extract_strided_slice %47 {offsets = [0, 0], sizes = [8, 8], strides = [1, 1]} : vector<8x32xf32> to vector<8x8xf32>
    %cst_26 = arith.constant dense<0.000000e+00> : vector<8x8xf32>
    %56 = tpu.matmul %53, %54, %cst_26 {dimension_numbers = #tpu.dot_dimension_numbers<[1], [1], [0], [0], [0, 0, 1, 0], [], []>} : vector<8x8xf32>, vector<8x8xf32>, vector<8x8xf32> -> vector<8x8xf32>
    %57 = arith.addf %56, %7 : vector<8x8xf32>
    %cst_27 = arith.constant dense<0xFF800000> : vector<8xf32>
    %58 = vector.multi_reduction <maximumf>, %57, %cst_27 [1] : vector<8x8xf32> to vector<8xf32>
    %59 = vector.shape_cast %58 : vector<8xf32> to vector<8x1xf32>
    %60 = vector.broadcast %59 : vector<8x1xf32> to vector<8x8xf32>
    %61 = arith.subf %57, %60 : vector<8x8xf32>
    %62 = math.exp %61 : vector<8x8xf32>
    %cst_28 = arith.constant dense<0.000000e+00> : vector<8xf32>
    %63 = vector.multi_reduction <add>, %62, %cst_28 [1] : vector<8x8xf32> to vector<8xf32>
    %64 = vector.shape_cast %63 : vector<8xf32> to vector<8x1xf32>
    %65 = tpu.reciprocal %64 {approx = true} : vector<8x1xf32> -> vector<8x1xf32>
    %66 = vector.broadcast %65 : vector<8x1xf32> to vector<8x8xf32>
    %67 = arith.mulf %62, %66 : vector<8x8xf32>
    %cst_29 = arith.constant dense<0.000000e+00> : vector<8x8xf32>
    %68 = tpu.matmul %67, %55, %cst_29 {dimension_numbers = #tpu.dot_dimension_numbers<[1], [0], [0], [1], [0, 0, 1, 1], [], []>} : vector<8x8xf32>, vector<8x8xf32>, vector<8x8xf32> -> vector<8x8xf32>
    %c0_30 = arith.constant 0 : index
    %c0_31 = arith.constant 0 : index
    %c0_32 = arith.constant 0 : index
    %69 = vector.load %arg5[%c0_30, %c0_31, %c0_32] : memref<2x32x32xf32, #tpu.memory_space<vmem>>, vector<1x32x32xf32>
    %70 = vector.shape_cast %69 : vector<1x32x32xf32> to vector<32x32xf32>
    %71 = vector.extract_strided_slice %70 {offsets = [0, 0], sizes = [8, 32], strides = [1, 1]} : vector<32x32xf32> to vector<8x32xf32>
    %72 = arith.truncf %68 : vector<8x8xf32> to vector<8x8xbf16>
    %73 = arith.truncf %71 : vector<8x32xf32> to vector<8x32xbf16>
    %cst_33 = arith.constant dense<0.000000e+00> : vector<8x32xf32>
    %74 = tpu.matmul %72, %73, %cst_33 {dimension_numbers = #tpu.dot_dimension_numbers<[1], [0], [0], [1], [0, 0, 1, 1], [], []>} : vector<8x8xbf16>, vector<8x32xbf16>, vector<8x32xf32> -> vector<8x32xf32>
    %75 = arith.addf %52, %74 : vector<8x32xf32>
    %76 = vector.extract_strided_slice %45 {offsets = [0, 8], sizes = [8, 8], strides = [1, 1]} : vector<8x32xf32> to vector<8x8xf32>
    %77 = vector.extract_strided_slice %46 {offsets = [0, 8], sizes = [8, 8], strides = [1, 1]} : vector<8x32xf32> to vector<8x8xf32>
    %78 = vector.extract_strided_slice %47 {offsets = [0, 8], sizes = [8, 8], strides = [1, 1]} : vector<8x32xf32> to vector<8x8xf32>
    %cst_34 = arith.constant dense<0.000000e+00> : vector<8x8xf32>
    %79 = tpu.matmul %76, %77, %cst_34 {dimension_numbers = #tpu.dot_dimension_numbers<[1], [1], [0], [0], [0, 0, 1, 0], [], []>} : vector<8x8xf32>, vector<8x8xf32>, vector<8x8xf32> -> vector<8x8xf32>
    %80 = arith.addf %79, %7 : vector<8x8xf32>
    %cst_35 = arith.constant dense<0xFF800000> : vector<8xf32>
    %81 = vector.multi_reduction <maximumf>, %80, %cst_35 [1] : vector<8x8xf32> to vector<8xf32>
    %82 = vector.shape_cast %81 : vector<8xf32> to vector<8x1xf32>
    %83 = vector.broadcast %82 : vector<8x1xf32> to vector<8x8xf32>
    %84 = arith.subf %80, %83 : vector<8x8xf32>
    %85 = math.exp %84 : vector<8x8xf32>
    %cst_36 = arith.constant dense<0.000000e+00> : vector<8xf32>
    %86 = vector.multi_reduction <add>, %85, %cst_36 [1] : vector<8x8xf32> to vector<8xf32>
    %87 = vector.shape_cast %86 : vector<8xf32> to vector<8x1xf32>
    %88 = tpu.reciprocal %87 {approx = true} : vector<8x1xf32> -> vector<8x1xf32>
    %89 = vector.broadcast %88 : vector<8x1xf32> to vector<8x8xf32>
    %90 = arith.mulf %85, %89 : vector<8x8xf32>
    %cst_37 = arith.constant dense<0.000000e+00> : vector<8x8xf32>
    %91 = tpu.matmul %90, %78, %cst_37 {dimension_numbers = #tpu.dot_dimension_numbers<[1], [0], [0], [1], [0, 0, 1, 1], [], []>} : vector<8x8xf32>, vector<8x8xf32>, vector<8x8xf32> -> vector<8x8xf32>
    %c0_38 = arith.constant 0 : index
    %c0_39 = arith.constant 0 : index
    %c0_40 = arith.constant 0 : index
    %92 = vector.load %arg5[%c0_38, %c0_39, %c0_40] : memref<2x32x32xf32, #tpu.memory_space<vmem>>, vector<1x32x32xf32>
    %93 = vector.shape_cast %92 : vector<1x32x32xf32> to vector<32x32xf32>
    %94 = vector.extract_strided_slice %93 {offsets = [8, 0], sizes = [8, 32], strides = [1, 1]} : vector<32x32xf32> to vector<8x32xf32>
    %95 = arith.truncf %91 : vector<8x8xf32> to vector<8x8xbf16>
    %96 = arith.truncf %94 : vector<8x32xf32> to vector<8x32xbf16>
    %cst_41 = arith.constant dense<0.000000e+00> : vector<8x32xf32>
    %97 = tpu.matmul %95, %96, %cst_41 {dimension_numbers = #tpu.dot_dimension_numbers<[1], [0], [0], [1], [0, 0, 1, 1], [], []>} : vector<8x8xbf16>, vector<8x32xbf16>, vector<8x32xf32> -> vector<8x32xf32>
    %98 = arith.addf %75, %97 : vector<8x32xf32>
    %99 = vector.extract_strided_slice %45 {offsets = [0, 16], sizes = [8, 8], strides = [1, 1]} : vector<8x32xf32> to vector<8x8xf32>
    %100 = vector.extract_strided_slice %46 {offsets = [0, 16], sizes = [8, 8], strides = [1, 1]} : vector<8x32xf32> to vector<8x8xf32>
    %101 = vector.extract_strided_slice %47 {offsets = [0, 16], sizes = [8, 8], strides = [1, 1]} : vector<8x32xf32> to vector<8x8xf32>
    %cst_42 = arith.constant dense<0.000000e+00> : vector<8x8xf32>
    %102 = tpu.matmul %99, %100, %cst_42 {dimension_numbers = #tpu.dot_dimension_numbers<[1], [1], [0], [0], [0, 0, 1, 0], [], []>} : vector<8x8xf32>, vector<8x8xf32>, vector<8x8xf32> -> vector<8x8xf32>
    %103 = arith.addf %102, %7 : vector<8x8xf32>
    %cst_43 = arith.constant dense<0xFF800000> : vector<8xf32>
    %104 = vector.multi_reduction <maximumf>, %103, %cst_43 [1] : vector<8x8xf32> to vector<8xf32>
    %105 = vector.shape_cast %104 : vector<8xf32> to vector<8x1xf32>
    %106 = vector.broadcast %105 : vector<8x1xf32> to vector<8x8xf32>
    %107 = arith.subf %103, %106 : vector<8x8xf32>
    %108 = math.exp %107 : vector<8x8xf32>
    %cst_44 = arith.constant dense<0.000000e+00> : vector<8xf32>
    %109 = vector.multi_reduction <add>, %108, %cst_44 [1] : vector<8x8xf32> to vector<8xf32>
    %110 = vector.shape_cast %109 : vector<8xf32> to vector<8x1xf32>
    %111 = tpu.reciprocal %110 {approx = true} : vector<8x1xf32> -> vector<8x1xf32>
    %112 = vector.broadcast %111 : vector<8x1xf32> to vector<8x8xf32>
    %113 = arith.mulf %108, %112 : vector<8x8xf32>
    %cst_45 = arith.constant dense<0.000000e+00> : vector<8x8xf32>
    %114 = tpu.matmul %113, %101, %cst_45 {dimension_numbers = #tpu.dot_dimension_numbers<[1], [0], [0], [1], [0, 0, 1, 1], [], []>} : vector<8x8xf32>, vector<8x8xf32>, vector<8x8xf32> -> vector<8x8xf32>
    %c0_46 = arith.constant 0 : index
    %c0_47 = arith.constant 0 : index
    %c0_48 = arith.constant 0 : index
    %115 = vector.load %arg5[%c0_46, %c0_47, %c0_48] : memref<2x32x32xf32, #tpu.memory_space<vmem>>, vector<1x32x32xf32>
    %116 = vector.shape_cast %115 : vector<1x32x32xf32> to vector<32x32xf32>
    %117 = vector.extract_strided_slice %116 {offsets = [16, 0], sizes = [8, 32], strides = [1, 1]} : vector<32x32xf32> to vector<8x32xf32>
    %118 = arith.truncf %114 : vector<8x8xf32> to vector<8x8xbf16>
    %119 = arith.truncf %117 : vector<8x32xf32> to vector<8x32xbf16>
    %cst_49 = arith.constant dense<0.000000e+00> : vector<8x32xf32>
    %120 = tpu.matmul %118, %119, %cst_49 {dimension_numbers = #tpu.dot_dimension_numbers<[1], [0], [0], [1], [0, 0, 1, 1], [], []>} : vector<8x8xbf16>, vector<8x32xbf16>, vector<8x32xf32> -> vector<8x32xf32>
    %121 = arith.addf %98, %120 : vector<8x32xf32>
    %122 = vector.extract_strided_slice %45 {offsets = [0, 24], sizes = [8, 8], strides = [1, 1]} : vector<8x32xf32> to vector<8x8xf32>
    %123 = vector.extract_strided_slice %46 {offsets = [0, 24], sizes = [8, 8], strides = [1, 1]} : vector<8x32xf32> to vector<8x8xf32>
    %124 = vector.extract_strided_slice %47 {offsets = [0, 24], sizes = [8, 8], strides = [1, 1]} : vector<8x32xf32> to vector<8x8xf32>
    %cst_50 = arith.constant dense<0.000000e+00> : vector<8x8xf32>
    %125 = tpu.matmul %122, %123, %cst_50 {dimension_numbers = #tpu.dot_dimension_numbers<[1], [1], [0], [0], [0, 0, 1, 0], [], []>} : vector<8x8xf32>, vector<8x8xf32>, vector<8x8xf32> -> vector<8x8xf32>
    %126 = arith.addf %125, %7 : vector<8x8xf32>
    %cst_51 = arith.constant dense<0xFF800000> : vector<8xf32>
    %127 = vector.multi_reduction <maximumf>, %126, %cst_51 [1] : vector<8x8xf32> to vector<8xf32>
    %128 = vector.shape_cast %127 : vector<8xf32> to vector<8x1xf32>
    %129 = vector.broadcast %128 : vector<8x1xf32> to vector<8x8xf32>
    %130 = arith.subf %126, %129 : vector<8x8xf32>
    %131 = math.exp %130 : vector<8x8xf32>
    %cst_52 = arith.constant dense<0.000000e+00> : vector<8xf32>
    %132 = vector.multi_reduction <add>, %131, %cst_52 [1] : vector<8x8xf32> to vector<8xf32>
    %133 = vector.shape_cast %132 : vector<8xf32> to vector<8x1xf32>
    %134 = tpu.reciprocal %133 {approx = true} : vector<8x1xf32> -> vector<8x1xf32>
    %135 = vector.broadcast %134 : vector<8x1xf32> to vector<8x8xf32>
    %136 = arith.mulf %131, %135 : vector<8x8xf32>
    %cst_53 = arith.constant dense<0.000000e+00> : vector<8x8xf32>
    %137 = tpu.matmul %136, %124, %cst_53 {dimension_numbers = #tpu.dot_dimension_numbers<[1], [0], [0], [1], [0, 0, 1, 1], [], []>} : vector<8x8xf32>, vector<8x8xf32>, vector<8x8xf32> -> vector<8x8xf32>
    %c0_54 = arith.constant 0 : index
    %c0_55 = arith.constant 0 : index
    %c0_56 = arith.constant 0 : index
    %138 = vector.load %arg5[%c0_54, %c0_55, %c0_56] : memref<2x32x32xf32, #tpu.memory_space<vmem>>, vector<1x32x32xf32>
    %139 = vector.shape_cast %138 : vector<1x32x32xf32> to vector<32x32xf32>
    %140 = vector.extract_strided_slice %139 {offsets = [24, 0], sizes = [8, 32], strides = [1, 1]} : vector<32x32xf32> to vector<8x32xf32>
    %141 = arith.truncf %137 : vector<8x8xf32> to vector<8x8xbf16>
    %142 = arith.truncf %140 : vector<8x32xf32> to vector<8x32xbf16>
    %cst_57 = arith.constant dense<0.000000e+00> : vector<8x32xf32>
    %143 = tpu.matmul %141, %142, %cst_57 {dimension_numbers = #tpu.dot_dimension_numbers<[1], [0], [0], [1], [0, 0, 1, 1], [], []>} : vector<8x8xbf16>, vector<8x32xbf16>, vector<8x32xf32> -> vector<8x32xf32>
    %144 = arith.addf %121, %143 : vector<8x32xf32>
    %145 = arith.addf %1, %144 : vector<8x32xf32>
    %c0_58 = arith.constant 0 : index
    %c0_59 = arith.constant 0 : index
    %c0_60 = arith.constant 0 : index
    %146 = vector.load %arg9[%c0_58, %c0_59, %c0_60] : memref<2x1x32xf32, #tpu.memory_space<vmem>>, vector<1x1x32xf32>
    %147 = vector.shape_cast %146 : vector<1x1x32xf32> to vector<1x32xf32>
    %c0_61 = arith.constant 0 : index
    %c0_62 = arith.constant 0 : index
    %c0_63 = arith.constant 0 : index
    %148 = vector.load %arg10[%c0_61, %c0_62, %c0_63] : memref<2x1x32xf32, #tpu.memory_space<vmem>>, vector<1x1x32xf32>
    %149 = vector.shape_cast %148 : vector<1x1x32xf32> to vector<1x32xf32>
    %cst_64 = arith.constant dense<0.000000e+00> : vector<8xf32>
    %150 = vector.multi_reduction <add>, %145, %cst_64 [1] : vector<8x32xf32> to vector<8xf32>
    %151 = vector.shape_cast %150 : vector<8xf32> to vector<8x1xf32>
    %cst_65 = arith.constant 3.200000e+01 : f32
    %152 = vector.broadcast %cst_65 : f32 to vector<8x1xf32>
    %153 = arith.divf %151, %152 : vector<8x1xf32>
    %154 = vector.broadcast %153 : vector<8x1xf32> to vector<8x32xf32>
    %155 = arith.subf %145, %154 : vector<8x32xf32>
    %156 = arith.mulf %155, %155 : vector<8x32xf32>
    %cst_66 = arith.constant dense<0.000000e+00> : vector<8xf32>
    %157 = vector.multi_reduction <add>, %156, %cst_66 [1] : vector<8x32xf32> to vector<8xf32>
    %158 = vector.shape_cast %157 : vector<8xf32> to vector<8x1xf32>
    %cst_67 = arith.constant 3.200000e+01 : f32
    %159 = vector.broadcast %cst_67 : f32 to vector<8x1xf32>
    %160 = arith.divf %158, %159 : vector<8x1xf32>
    %161 = vector.broadcast %153 : vector<8x1xf32> to vector<8x32xf32>
    %162 = arith.subf %145, %161 : vector<8x32xf32>
    %cst_68 = arith.constant 9.99999974E-6 : f32
    %163 = vector.broadcast %cst_68 : f32 to vector<8x1xf32>
    %164 = arith.addf %160, %163 : vector<8x1xf32>
    %165 = math.rsqrt %164 : vector<8x1xf32>
    %166 = vector.broadcast %165 : vector<8x1xf32> to vector<8x32xf32>
    %167 = arith.mulf %162, %166 : vector<8x32xf32>
    %168 = vector.broadcast %147 : vector<1x32xf32> to vector<8x32xf32>
    %169 = arith.mulf %167, %168 : vector<8x32xf32>
    %170 = vector.broadcast %149 : vector<1x32xf32> to vector<8x32xf32>
    %171 = arith.addf %169, %170 : vector<8x32xf32>
    %c0_69 = arith.constant 0 : index
    %c0_70 = arith.constant 0 : index
    %c0_71 = arith.constant 0 : index
    %172 = vector.load %arg11[%c0_69, %c0_70, %c0_71] : memref<2x32x128xf32, #tpu.memory_space<vmem>>, vector<1x32x128xf32>
    %173 = vector.shape_cast %172 : vector<1x32x128xf32> to vector<32x128xf32>
    %174 = arith.truncf %171 : vector<8x32xf32> to vector<8x32xbf16>
    %175 = arith.truncf %173 : vector<32x128xf32> to vector<32x128xbf16>
    %cst_72 = arith.constant dense<0.000000e+00> : vector<8x128xf32>
    %176 = tpu.matmul %174, %175, %cst_72 {dimension_numbers = #tpu.dot_dimension_numbers<[1], [0], [0], [1], [0, 0, 1, 1], [], []>} : vector<8x32xbf16>, vector<32x128xbf16>, vector<8x128xf32> -> vector<8x128xf32>
    %c0_73 = arith.constant 0 : index
    %c0_74 = arith.constant 0 : index
    %c0_75 = arith.constant 0 : index
    %177 = vector.load %arg12[%c0_73, %c0_74, %c0_75] : memref<2x1x128xf32, #tpu.memory_space<vmem>>, vector<1x1x128xf32>
    %178 = vector.shape_cast %177 : vector<1x1x128xf32> to vector<1x128xf32>
    %179 = vector.broadcast %178 : vector<1x128xf32> to vector<8x128xf32>
    %180 = arith.addf %176, %179 : vector<8x128xf32>
    %cst_76 = arith.constant 1.702000e+00 : f32
    %181 = vector.broadcast %cst_76 : f32 to vector<8x128xf32>
    %182 = arith.mulf %181, %180 : vector<8x128xf32>
    %183 = arith.negf %182 : vector<8x128xf32>
    %184 = math.exp %183 : vector<8x128xf32>
    %cst_77 = arith.constant 1.000000e+00 : f32
    %185 = vector.broadcast %cst_77 : f32 to vector<8x128xf32>
    %186 = arith.addf %185, %184 : vector<8x128xf32>
    %187 = arith.divf %185, %186 : vector<8x128xf32>
    %188 = arith.mulf %180, %187 : vector<8x128xf32>
    %c0_78 = arith.constant 0 : index
    %c0_79 = arith.constant 0 : index
    %c0_80 = arith.constant 0 : index
    %189 = vector.load %arg13[%c0_78, %c0_79, %c0_80] : memref<2x128x32xf32, #tpu.memory_space<vmem>>, vector<1x128x32xf32>
    %190 = vector.shape_cast %189 : vector<1x128x32xf32> to vector<128x32xf32>
    %191 = arith.truncf %188 : vector<8x128xf32> to vector<8x128xbf16>
    %192 = arith.truncf %190 : vector<128x32xf32> to vector<128x32xbf16>
    %cst_81 = arith.constant dense<0.000000e+00> : vector<8x32xf32>
    %193 = tpu.matmul %191, %192, %cst_81 {dimension_numbers = #tpu.dot_dimension_numbers<[1], [0], [0], [1], [0, 0, 1, 1], [], []>} : vector<8x128xbf16>, vector<128x32xbf16>, vector<8x32xf32> -> vector<8x32xf32>
    %194 = arith.addf %145, %193 : vector<8x32xf32>
    %c0_82 = arith.constant 0 : index
    %c0_83 = arith.constant 0 : index
    %c0_84 = arith.constant 0 : index
    %195 = vector.load %arg14[%c0_82, %c0_83, %c0_84] : memref<2x1x32xf32, #tpu.memory_space<vmem>>, vector<1x1x32xf32>
    %196 = vector.shape_cast %195 : vector<1x1x32xf32> to vector<1x32xf32>
    %197 = vector.broadcast %196 : vector<1x32xf32> to vector<8x32xf32>
    %198 = arith.addf %194, %197 : vector<8x32xf32>
    %c1 = arith.constant 1 : index
    %c0_85 = arith.constant 0 : index
    %c0_86 = arith.constant 0 : index
    %199 = vector.load %arg7[%c1, %c0_85, %c0_86] : memref<2x1x32xf32, #tpu.memory_space<vmem>>, vector<1x1x32xf32>
    %200 = vector.shape_cast %199 : vector<1x1x32xf32> to vector<1x32xf32>
    %c1_87 = arith.constant 1 : index
    %c0_88 = arith.constant 0 : index
    %c0_89 = arith.constant 0 : index
    %201 = vector.load %arg8[%c1_87, %c0_88, %c0_89] : memref<2x1x32xf32, #tpu.memory_space<vmem>>, vector<1x1x32xf32>
    %202 = vector.shape_cast %201 : vector<1x1x32xf32> to vector<1x32xf32>
    %cst_90 = arith.constant dense<0.000000e+00> : vector<8xf32>
    %203 = vector.multi_reduction <add>, %198, %cst_90 [1] : vector<8x32xf32> to vector<8xf32>
    %204 = vector.shape_cast %203 : vector<8xf32> to vector<8x1xf32>
    %cst_91 = arith.constant 3.200000e+01 : f32
    %205 = vector.broadcast %cst_91 : f32 to vector<8x1xf32>
    %206 = arith.divf %204, %205 : vector<8x1xf32>
    %207 = vector.broadcast %206 : vector<8x1xf32> to vector<8x32xf32>
    %208 = arith.subf %198, %207 : vector<8x32xf32>
    %209 = arith.mulf %208, %208 : vector<8x32xf32>
    %cst_92 = arith.constant dense<0.000000e+00> : vector<8xf32>
    %210 = vector.multi_reduction <add>, %209, %cst_92 [1] : vector<8x32xf32> to vector<8xf32>
    %211 = vector.shape_cast %210 : vector<8xf32> to vector<8x1xf32>
    %cst_93 = arith.constant 3.200000e+01 : f32
    %212 = vector.broadcast %cst_93 : f32 to vector<8x1xf32>
    %213 = arith.divf %211, %212 : vector<8x1xf32>
    %214 = vector.broadcast %206 : vector<8x1xf32> to vector<8x32xf32>
    %215 = arith.subf %198, %214 : vector<8x32xf32>
    %cst_94 = arith.constant 9.99999974E-6 : f32
    %216 = vector.broadcast %cst_94 : f32 to vector<8x1xf32>
    %217 = arith.addf %213, %216 : vector<8x1xf32>
    %218 = math.rsqrt %217 : vector<8x1xf32>
    %219 = vector.broadcast %218 : vector<8x1xf32> to vector<8x32xf32>
    %220 = arith.mulf %215, %219 : vector<8x32xf32>
    %221 = vector.broadcast %200 : vector<1x32xf32> to vector<8x32xf32>
    %222 = arith.mulf %220, %221 : vector<8x32xf32>
    %223 = vector.broadcast %202 : vector<1x32xf32> to vector<8x32xf32>
    %224 = arith.addf %222, %223 : vector<8x32xf32>
    %c1_95 = arith.constant 1 : index
    %c0_96 = arith.constant 0 : index
    %c0_97 = arith.constant 0 : index
    %225 = vector.load %arg3[%c1_95, %c0_96, %c0_97] : memref<2x32x96xf32, #tpu.memory_space<vmem>>, vector<1x32x96xf32>
    %226 = vector.shape_cast %225 : vector<1x32x96xf32> to vector<32x96xf32>
    %227 = arith.truncf %224 : vector<8x32xf32> to vector<8x32xbf16>
    %228 = arith.truncf %226 : vector<32x96xf32> to vector<32x96xbf16>
    %cst_98 = arith.constant dense<0.000000e+00> : vector<8x96xf32>
    %229 = tpu.matmul %227, %228, %cst_98 {dimension_numbers = #tpu.dot_dimension_numbers<[1], [0], [0], [1], [0, 0, 1, 1], [], []>} : vector<8x32xbf16>, vector<32x96xbf16>, vector<8x96xf32> -> vector<8x96xf32>
    %c1_99 = arith.constant 1 : index
    %c0_100 = arith.constant 0 : index
    %c0_101 = arith.constant 0 : index
    %230 = vector.load %arg4[%c1_99, %c0_100, %c0_101] : memref<2x1x96xf32, #tpu.memory_space<vmem>>, vector<1x1x96xf32>
    %231 = vector.shape_cast %230 : vector<1x1x96xf32> to vector<1x96xf32>
    %232 = vector.broadcast %231 : vector<1x96xf32> to vector<8x96xf32>
    %233 = arith.addf %229, %232 : vector<8x96xf32>
    %234 = vector.extract_strided_slice %233 {offsets = [0, 0], sizes = [8, 32], strides = [1, 1]} : vector<8x96xf32> to vector<8x32xf32>
    %cst_102 = arith.constant 0.353553385 : f32
    %235 = vector.broadcast %cst_102 : f32 to vector<8x32xf32>
    %236 = arith.mulf %234, %235 : vector<8x32xf32>
    %237 = vector.extract_strided_slice %233 {offsets = [0, 32], sizes = [8, 32], strides = [1, 1]} : vector<8x96xf32> to vector<8x32xf32>
    %238 = vector.extract_strided_slice %233 {offsets = [0, 64], sizes = [8, 32], strides = [1, 1]} : vector<8x96xf32> to vector<8x32xf32>
    %cst_103 = arith.constant 0.000000e+00 : f32
    %239 = vector.broadcast %cst_103 : f32 to vector<8x32xf32>
    %c1_104 = arith.constant 1 : index
    %c0_105 = arith.constant 0 : index
    %c0_106 = arith.constant 0 : index
    %240 = vector.load %arg6[%c1_104, %c0_105, %c0_106] : memref<2x1x32xf32, #tpu.memory_space<vmem>>, vector<1x1x32xf32>
    %241 = vector.shape_cast %240 : vector<1x1x32xf32> to vector<1x32xf32>
    %242 = vector.broadcast %241 : vector<1x32xf32> to vector<8x32xf32>
    %243 = arith.addf %239, %242 : vector<8x32xf32>
    %244 = vector.extract_strided_slice %236 {offsets = [0, 0], sizes = [8, 8], strides = [1, 1]} : vector<8x32xf32> to vector<8x8xf32>
    %245 = vector.extract_strided_slice %237 {offsets = [0, 0], sizes = [8, 8], strides = [1, 1]} : vector<8x32xf32> to vector<8x8xf32>
    %246 = vector.extract_strided_slice %238 {offsets = [0, 0], sizes = [8, 8], strides = [1, 1]} : vector<8x32xf32> to vector<8x8xf32>
    %cst_107 = arith.constant dense<0.000000e+00> : vector<8x8xf32>
    %247 = tpu.matmul %244, %245, %cst_107 {dimension_numbers = #tpu.dot_dimension_numbers<[1], [1], [0], [0], [0, 0, 1, 0], [], []>} : vector<8x8xf32>, vector<8x8xf32>, vector<8x8xf32> -> vector<8x8xf32>
    %248 = arith.addf %247, %7 : vector<8x8xf32>
    %cst_108 = arith.constant dense<0xFF800000> : vector<8xf32>
    %249 = vector.multi_reduction <maximumf>, %248, %cst_108 [1] : vector<8x8xf32> to vector<8xf32>
    %250 = vector.shape_cast %249 : vector<8xf32> to vector<8x1xf32>
    %251 = vector.broadcast %250 : vector<8x1xf32> to vector<8x8xf32>
    %252 = arith.subf %248, %251 : vector<8x8xf32>
    %253 = math.exp %252 : vector<8x8xf32>
    %cst_109 = arith.constant dense<0.000000e+00> : vector<8xf32>
    %254 = vector.multi_reduction <add>, %253, %cst_109 [1] : vector<8x8xf32> to vector<8xf32>
    %255 = vector.shape_cast %254 : vector<8xf32> to vector<8x1xf32>
    %256 = tpu.reciprocal %255 {approx = true} : vector<8x1xf32> -> vector<8x1xf32>
    %257 = vector.broadcast %256 : vector<8x1xf32> to vector<8x8xf32>
    %258 = arith.mulf %253, %257 : vector<8x8xf32>
    %cst_110 = arith.constant dense<0.000000e+00> : vector<8x8xf32>
    %259 = tpu.matmul %258, %246, %cst_110 {dimension_numbers = #tpu.dot_dimension_numbers<[1], [0], [0], [1], [0, 0, 1, 1], [], []>} : vector<8x8xf32>, vector<8x8xf32>, vector<8x8xf32> -> vector<8x8xf32>
    %c1_111 = arith.constant 1 : index
    %c0_112 = arith.constant 0 : index
    %c0_113 = arith.constant 0 : index
    %260 = vector.load %arg5[%c1_111, %c0_112, %c0_113] : memref<2x32x32xf32, #tpu.memory_space<vmem>>, vector<1x32x32xf32>
    %261 = vector.shape_cast %260 : vector<1x32x32xf32> to vector<32x32xf32>
    %262 = vector.extract_strided_slice %261 {offsets = [0, 0], sizes = [8, 32], strides = [1, 1]} : vector<32x32xf32> to vector<8x32xf32>
    %263 = arith.truncf %259 : vector<8x8xf32> to vector<8x8xbf16>
    %264 = arith.truncf %262 : vector<8x32xf32> to vector<8x32xbf16>
    %cst_114 = arith.constant dense<0.000000e+00> : vector<8x32xf32>
    %265 = tpu.matmul %263, %264, %cst_114 {dimension_numbers = #tpu.dot_dimension_numbers<[1], [0], [0], [1], [0, 0, 1, 1], [], []>} : vector<8x8xbf16>, vector<8x32xbf16>, vector<8x32xf32> -> vector<8x32xf32>
    %266 = arith.addf %243, %265 : vector<8x32xf32>
    %267 = vector.extract_strided_slice %236 {offsets = [0, 8], sizes = [8, 8], strides = [1, 1]} : vector<8x32xf32> to vector<8x8xf32>
    %268 = vector.extract_strided_slice %237 {offsets = [0, 8], sizes = [8, 8], strides = [1, 1]} : vector<8x32xf32> to vector<8x8xf32>
    %269 = vector.extract_strided_slice %238 {offsets = [0, 8], sizes = [8, 8], strides = [1, 1]} : vector<8x32xf32> to vector<8x8xf32>
    %cst_115 = arith.constant dense<0.000000e+00> : vector<8x8xf32>
    %270 = tpu.matmul %267, %268, %cst_115 {dimension_numbers = #tpu.dot_dimension_numbers<[1], [1], [0], [0], [0, 0, 1, 0], [], []>} : vector<8x8xf32>, vector<8x8xf32>, vector<8x8xf32> -> vector<8x8xf32>
    %271 = arith.addf %270, %7 : vector<8x8xf32>
    %cst_116 = arith.constant dense<0xFF800000> : vector<8xf32>
    %272 = vector.multi_reduction <maximumf>, %271, %cst_116 [1] : vector<8x8xf32> to vector<8xf32>
    %273 = vector.shape_cast %272 : vector<8xf32> to vector<8x1xf32>
    %274 = vector.broadcast %273 : vector<8x1xf32> to vector<8x8xf32>
    %275 = arith.subf %271, %274 : vector<8x8xf32>
    %276 = math.exp %275 : vector<8x8xf32>
    %cst_117 = arith.constant dense<0.000000e+00> : vector<8xf32>
    %277 = vector.multi_reduction <add>, %276, %cst_117 [1] : vector<8x8xf32> to vector<8xf32>
    %278 = vector.shape_cast %277 : vector<8xf32> to vector<8x1xf32>
    %279 = tpu.reciprocal %278 {approx = true} : vector<8x1xf32> -> vector<8x1xf32>
    %280 = vector.broadcast %279 : vector<8x1xf32> to vector<8x8xf32>
    %281 = arith.mulf %276, %280 : vector<8x8xf32>
    %cst_118 = arith.constant dense<0.000000e+00> : vector<8x8xf32>
    %282 = tpu.matmul %281, %269, %cst_118 {dimension_numbers = #tpu.dot_dimension_numbers<[1], [0], [0], [1], [0, 0, 1, 1], [], []>} : vector<8x8xf32>, vector<8x8xf32>, vector<8x8xf32> -> vector<8x8xf32>
    %c1_119 = arith.constant 1 : index
    %c0_120 = arith.constant 0 : index
    %c0_121 = arith.constant 0 : index
    %283 = vector.load %arg5[%c1_119, %c0_120, %c0_121] : memref<2x32x32xf32, #tpu.memory_space<vmem>>, vector<1x32x32xf32>
    %284 = vector.shape_cast %283 : vector<1x32x32xf32> to vector<32x32xf32>
    %285 = vector.extract_strided_slice %284 {offsets = [8, 0], sizes = [8, 32], strides = [1, 1]} : vector<32x32xf32> to vector<8x32xf32>
    %286 = arith.truncf %282 : vector<8x8xf32> to vector<8x8xbf16>
    %287 = arith.truncf %285 : vector<8x32xf32> to vector<8x32xbf16>
    %cst_122 = arith.constant dense<0.000000e+00> : vector<8x32xf32>
    %288 = tpu.matmul %286, %287, %cst_122 {dimension_numbers = #tpu.dot_dimension_numbers<[1], [0], [0], [1], [0, 0, 1, 1], [], []>} : vector<8x8xbf16>, vector<8x32xbf16>, vector<8x32xf32> -> vector<8x32xf32>
    %289 = arith.addf %266, %288 : vector<8x32xf32>
    %290 = vector.extract_strided_slice %236 {offsets = [0, 16], sizes = [8, 8], strides = [1, 1]} : vector<8x32xf32> to vector<8x8xf32>
    %291 = vector.extract_strided_slice %237 {offsets = [0, 16], sizes = [8, 8], strides = [1, 1]} : vector<8x32xf32> to vector<8x8xf32>
    %292 = vector.extract_strided_slice %238 {offsets = [0, 16], sizes = [8, 8], strides = [1, 1]} : vector<8x32xf32> to vector<8x8xf32>
    %cst_123 = arith.constant dense<0.000000e+00> : vector<8x8xf32>
    %293 = tpu.matmul %290, %291, %cst_123 {dimension_numbers = #tpu.dot_dimension_numbers<[1], [1], [0], [0], [0, 0, 1, 0], [], []>} : vector<8x8xf32>, vector<8x8xf32>, vector<8x8xf32> -> vector<8x8xf32>
    %294 = arith.addf %293, %7 : vector<8x8xf32>
    %cst_124 = arith.constant dense<0xFF800000> : vector<8xf32>
    %295 = vector.multi_reduction <maximumf>, %294, %cst_124 [1] : vector<8x8xf32> to vector<8xf32>
    %296 = vector.shape_cast %295 : vector<8xf32> to vector<8x1xf32>
    %297 = vector.broadcast %296 : vector<8x1xf32> to vector<8x8xf32>
    %298 = arith.subf %294, %297 : vector<8x8xf32>
    %299 = math.exp %298 : vector<8x8xf32>
    %cst_125 = arith.constant dense<0.000000e+00> : vector<8xf32>
    %300 = vector.multi_reduction <add>, %299, %cst_125 [1] : vector<8x8xf32> to vector<8xf32>
    %301 = vector.shape_cast %300 : vector<8xf32> to vector<8x1xf32>
    %302 = tpu.reciprocal %301 {approx = true} : vector<8x1xf32> -> vector<8x1xf32>
    %303 = vector.broadcast %302 : vector<8x1xf32> to vector<8x8xf32>
    %304 = arith.mulf %299, %303 : vector<8x8xf32>
    %cst_126 = arith.constant dense<0.000000e+00> : vector<8x8xf32>
    %305 = tpu.matmul %304, %292, %cst_126 {dimension_numbers = #tpu.dot_dimension_numbers<[1], [0], [0], [1], [0, 0, 1, 1], [], []>} : vector<8x8xf32>, vector<8x8xf32>, vector<8x8xf32> -> vector<8x8xf32>
    %c1_127 = arith.constant 1 : index
    %c0_128 = arith.constant 0 : index
    %c0_129 = arith.constant 0 : index
    %306 = vector.load %arg5[%c1_127, %c0_128, %c0_129] : memref<2x32x32xf32, #tpu.memory_space<vmem>>, vector<1x32x32xf32>
    %307 = vector.shape_cast %306 : vector<1x32x32xf32> to vector<32x32xf32>
    %308 = vector.extract_strided_slice %307 {offsets = [16, 0], sizes = [8, 32], strides = [1, 1]} : vector<32x32xf32> to vector<8x32xf32>
    %309 = arith.truncf %305 : vector<8x8xf32> to vector<8x8xbf16>
    %310 = arith.truncf %308 : vector<8x32xf32> to vector<8x32xbf16>
    %cst_130 = arith.constant dense<0.000000e+00> : vector<8x32xf32>
    %311 = tpu.matmul %309, %310, %cst_130 {dimension_numbers = #tpu.dot_dimension_numbers<[1], [0], [0], [1], [0, 0, 1, 1], [], []>} : vector<8x8xbf16>, vector<8x32xbf16>, vector<8x32xf32> -> vector<8x32xf32>
    %312 = arith.addf %289, %311 : vector<8x32xf32>
    %313 = vector.extract_strided_slice %236 {offsets = [0, 24], sizes = [8, 8], strides = [1, 1]} : vector<8x32xf32> to vector<8x8xf32>
    %314 = vector.extract_strided_slice %237 {offsets = [0, 24], sizes = [8, 8], strides = [1, 1]} : vector<8x32xf32> to vector<8x8xf32>
    %315 = vector.extract_strided_slice %238 {offsets = [0, 24], sizes = [8, 8], strides = [1, 1]} : vector<8x32xf32> to vector<8x8xf32>
    %cst_131 = arith.constant dense<0.000000e+00> : vector<8x8xf32>
    %316 = tpu.matmul %313, %314, %cst_131 {dimension_numbers = #tpu.dot_dimension_numbers<[1], [1], [0], [0], [0, 0, 1, 0], [], []>} : vector<8x8xf32>, vector<8x8xf32>, vector<8x8xf32> -> vector<8x8xf32>
    %317 = arith.addf %316, %7 : vector<8x8xf32>
    %cst_132 = arith.constant dense<0xFF800000> : vector<8xf32>
    %318 = vector.multi_reduction <maximumf>, %317, %cst_132 [1] : vector<8x8xf32> to vector<8xf32>
    %319 = vector.shape_cast %318 : vector<8xf32> to vector<8x1xf32>
    %320 = vector.broadcast %319 : vector<8x1xf32> to vector<8x8xf32>
    %321 = arith.subf %317, %320 : vector<8x8xf32>
    %322 = math.exp %321 : vector<8x8xf32>
    %cst_133 = arith.constant dense<0.000000e+00> : vector<8xf32>
    %323 = vector.multi_reduction <add>, %322, %cst_133 [1] : vector<8x8xf32> to vector<8xf32>
    %324 = vector.shape_cast %323 : vector<8xf32> to vector<8x1xf32>
    %325 = tpu.reciprocal %324 {approx = true} : vector<8x1xf32> -> vector<8x1xf32>
    %326 = vector.broadcast %325 : vector<8x1xf32> to vector<8x8xf32>
    %327 = arith.mulf %322, %326 : vector<8x8xf32>
    %cst_134 = arith.constant dense<0.000000e+00> : vector<8x8xf32>
    %328 = tpu.matmul %327, %315, %cst_134 {dimension_numbers = #tpu.dot_dimension_numbers<[1], [0], [0], [1], [0, 0, 1, 1], [], []>} : vector<8x8xf32>, vector<8x8xf32>, vector<8x8xf32> -> vector<8x8xf32>
    %c1_135 = arith.constant 1 : index
    %c0_136 = arith.constant 0 : index
    %c0_137 = arith.constant 0 : index
    %329 = vector.load %arg5[%c1_135, %c0_136, %c0_137] : memref<2x32x32xf32, #tpu.memory_space<vmem>>, vector<1x32x32xf32>
    %330 = vector.shape_cast %329 : vector<1x32x32xf32> to vector<32x32xf32>
    %331 = vector.extract_strided_slice %330 {offsets = [24, 0], sizes = [8, 32], strides = [1, 1]} : vector<32x32xf32> to vector<8x32xf32>
    %332 = arith.truncf %328 : vector<8x8xf32> to vector<8x8xbf16>
    %333 = arith.truncf %331 : vector<8x32xf32> to vector<8x32xbf16>
    %cst_138 = arith.constant dense<0.000000e+00> : vector<8x32xf32>
    %334 = tpu.matmul %332, %333, %cst_138 {dimension_numbers = #tpu.dot_dimension_numbers<[1], [0], [0], [1], [0, 0, 1, 1], [], []>} : vector<8x8xbf16>, vector<8x32xbf16>, vector<8x32xf32> -> vector<8x32xf32>
    %335 = arith.addf %312, %334 : vector<8x32xf32>
    %336 = arith.addf %198, %335 : vector<8x32xf32>
    %c1_139 = arith.constant 1 : index
    %c0_140 = arith.constant 0 : index
    %c0_141 = arith.constant 0 : index
    %337 = vector.load %arg9[%c1_139, %c0_140, %c0_141] : memref<2x1x32xf32, #tpu.memory_space<vmem>>, vector<1x1x32xf32>
    %338 = vector.shape_cast %337 : vector<1x1x32xf32> to vector<1x32xf32>
    %c1_142 = arith.constant 1 : index
    %c0_143 = arith.constant 0 : index
    %c0_144 = arith.constant 0 : index
    %339 = vector.load %arg10[%c1_142, %c0_143, %c0_144] : memref<2x1x32xf32, #tpu.memory_space<vmem>>, vector<1x1x32xf32>
    %340 = vector.shape_cast %339 : vector<1x1x32xf32> to vector<1x32xf32>
    %cst_145 = arith.constant dense<0.000000e+00> : vector<8xf32>
    %341 = vector.multi_reduction <add>, %336, %cst_145 [1] : vector<8x32xf32> to vector<8xf32>
    %342 = vector.shape_cast %341 : vector<8xf32> to vector<8x1xf32>
    %cst_146 = arith.constant 3.200000e+01 : f32
    %343 = vector.broadcast %cst_146 : f32 to vector<8x1xf32>
    %344 = arith.divf %342, %343 : vector<8x1xf32>
    %345 = vector.broadcast %344 : vector<8x1xf32> to vector<8x32xf32>
    %346 = arith.subf %336, %345 : vector<8x32xf32>
    %347 = arith.mulf %346, %346 : vector<8x32xf32>
    %cst_147 = arith.constant dense<0.000000e+00> : vector<8xf32>
    %348 = vector.multi_reduction <add>, %347, %cst_147 [1] : vector<8x32xf32> to vector<8xf32>
    %349 = vector.shape_cast %348 : vector<8xf32> to vector<8x1xf32>
    %cst_148 = arith.constant 3.200000e+01 : f32
    %350 = vector.broadcast %cst_148 : f32 to vector<8x1xf32>
    %351 = arith.divf %349, %350 : vector<8x1xf32>
    %352 = vector.broadcast %344 : vector<8x1xf32> to vector<8x32xf32>
    %353 = arith.subf %336, %352 : vector<8x32xf32>
    %cst_149 = arith.constant 9.99999974E-6 : f32
    %354 = vector.broadcast %cst_149 : f32 to vector<8x1xf32>
    %355 = arith.addf %351, %354 : vector<8x1xf32>
    %356 = math.rsqrt %355 : vector<8x1xf32>
    %357 = vector.broadcast %356 : vector<8x1xf32> to vector<8x32xf32>
    %358 = arith.mulf %353, %357 : vector<8x32xf32>
    %359 = vector.broadcast %338 : vector<1x32xf32> to vector<8x32xf32>
    %360 = arith.mulf %358, %359 : vector<8x32xf32>
    %361 = vector.broadcast %340 : vector<1x32xf32> to vector<8x32xf32>
    %362 = arith.addf %360, %361 : vector<8x32xf32>
    %c1_150 = arith.constant 1 : index
    %c0_151 = arith.constant 0 : index
    %c0_152 = arith.constant 0 : index
    %363 = vector.load %arg11[%c1_150, %c0_151, %c0_152] : memref<2x32x128xf32, #tpu.memory_space<vmem>>, vector<1x32x128xf32>
    %364 = vector.shape_cast %363 : vector<1x32x128xf32> to vector<32x128xf32>
    %365 = arith.truncf %362 : vector<8x32xf32> to vector<8x32xbf16>
    %366 = arith.truncf %364 : vector<32x128xf32> to vector<32x128xbf16>
    %cst_153 = arith.constant dense<0.000000e+00> : vector<8x128xf32>
    %367 = tpu.matmul %365, %366, %cst_153 {dimension_numbers = #tpu.dot_dimension_numbers<[1], [0], [0], [1], [0, 0, 1, 1], [], []>} : vector<8x32xbf16>, vector<32x128xbf16>, vector<8x128xf32> -> vector<8x128xf32>
    %c1_154 = arith.constant 1 : index
    %c0_155 = arith.constant 0 : index
    %c0_156 = arith.constant 0 : index
    %368 = vector.load %arg12[%c1_154, %c0_155, %c0_156] : memref<2x1x128xf32, #tpu.memory_space<vmem>>, vector<1x1x128xf32>
    %369 = vector.shape_cast %368 : vector<1x1x128xf32> to vector<1x128xf32>
    %370 = vector.broadcast %369 : vector<1x128xf32> to vector<8x128xf32>
    %371 = arith.addf %367, %370 : vector<8x128xf32>
    %cst_157 = arith.constant 1.702000e+00 : f32
    %372 = vector.broadcast %cst_157 : f32 to vector<8x128xf32>
    %373 = arith.mulf %372, %371 : vector<8x128xf32>
    %374 = arith.negf %373 : vector<8x128xf32>
    %375 = math.exp %374 : vector<8x128xf32>
    %cst_158 = arith.constant 1.000000e+00 : f32
    %376 = vector.broadcast %cst_158 : f32 to vector<8x128xf32>
    %377 = arith.addf %376, %375 : vector<8x128xf32>
    %378 = arith.divf %376, %377 : vector<8x128xf32>
    %379 = arith.mulf %371, %378 : vector<8x128xf32>
    %c1_159 = arith.constant 1 : index
    %c0_160 = arith.constant 0 : index
    %c0_161 = arith.constant 0 : index
    %380 = vector.load %arg13[%c1_159, %c0_160, %c0_161] : memref<2x128x32xf32, #tpu.memory_space<vmem>>, vector<1x128x32xf32>
    %381 = vector.shape_cast %380 : vector<1x128x32xf32> to vector<128x32xf32>
    %382 = arith.truncf %379 : vector<8x128xf32> to vector<8x128xbf16>
    %383 = arith.truncf %381 : vector<128x32xf32> to vector<128x32xbf16>
    %cst_162 = arith.constant dense<0.000000e+00> : vector<8x32xf32>
    %384 = tpu.matmul %382, %383, %cst_162 {dimension_numbers = #tpu.dot_dimension_numbers<[1], [0], [0], [1], [0, 0, 1, 1], [], []>} : vector<8x128xbf16>, vector<128x32xbf16>, vector<8x32xf32> -> vector<8x32xf32>
    %385 = arith.addf %336, %384 : vector<8x32xf32>
    %c1_163 = arith.constant 1 : index
    %c0_164 = arith.constant 0 : index
    %c0_165 = arith.constant 0 : index
    %386 = vector.load %arg14[%c1_163, %c0_164, %c0_165] : memref<2x1x32xf32, #tpu.memory_space<vmem>>, vector<1x1x32xf32>
    %387 = vector.shape_cast %386 : vector<1x1x32xf32> to vector<1x32xf32>
    %388 = vector.broadcast %387 : vector<1x32xf32> to vector<8x32xf32>
    %389 = arith.addf %385, %388 : vector<8x32xf32>
    %c0_166 = arith.constant 0 : index
    %c0_167 = arith.constant 0 : index
    %390 = vector.load %arg15[%c0_166, %c0_167] : memref<1x32xf32, #tpu.memory_space<vmem>>, vector<1x32xf32>
    %c0_168 = arith.constant 0 : index
    %c0_169 = arith.constant 0 : index
    %391 = vector.load %arg16[%c0_168, %c0_169] : memref<1x32xf32, #tpu.memory_space<vmem>>, vector<1x32xf32>
    %cst_170 = arith.constant dense<0.000000e+00> : vector<8xf32>
    %392 = vector.multi_reduction <add>, %389, %cst_170 [1] : vector<8x32xf32> to vector<8xf32>
    %393 = vector.shape_cast %392 : vector<8xf32> to vector<8x1xf32>
    %cst_171 = arith.constant 3.200000e+01 : f32
    %394 = vector.broadcast %cst_171 : f32 to vector<8x1xf32>
    %395 = arith.divf %393, %394 : vector<8x1xf32>
    %396 = vector.broadcast %395 : vector<8x1xf32> to vector<8x32xf32>
    %397 = arith.subf %389, %396 : vector<8x32xf32>
    %398 = arith.mulf %397, %397 : vector<8x32xf32>
    %cst_172 = arith.constant dense<0.000000e+00> : vector<8xf32>
    %399 = vector.multi_reduction <add>, %398, %cst_172 [1] : vector<8x32xf32> to vector<8xf32>
    %400 = vector.shape_cast %399 : vector<8xf32> to vector<8x1xf32>
    %cst_173 = arith.constant 3.200000e+01 : f32
    %401 = vector.broadcast %cst_173 : f32 to vector<8x1xf32>
    %402 = arith.divf %400, %401 : vector<8x1xf32>
    %403 = vector.broadcast %395 : vector<8x1xf32> to vector<8x32xf32>
    %404 = arith.subf %389, %403 : vector<8x32xf32>
    %cst_174 = arith.constant 9.99999974E-6 : f32
    %405 = vector.broadcast %cst_174 : f32 to vector<8x1xf32>
    %406 = arith.addf %402, %405 : vector<8x1xf32>
    %407 = math.rsqrt %406 : vector<8x1xf32>
    %408 = vector.broadcast %407 : vector<8x1xf32> to vector<8x32xf32>
    %409 = arith.mulf %404, %408 : vector<8x32xf32>
    %410 = vector.broadcast %390 : vector<1x32xf32> to vector<8x32xf32>
    %411 = arith.mulf %409, %410 : vector<8x32xf32>
    %412 = vector.broadcast %391 : vector<1x32xf32> to vector<8x32xf32>
    %413 = arith.addf %411, %412 : vector<8x32xf32>
    %414 = arith.index_cast %arg0 : i32 to index
    %415 = memref.load %arg1[%414] : memref<2xi32, #tpu.memory_space<smem>>
    %416 = tpu.iota {dimensions = array<i32: 0>} : vector<8x1xi32>
    %417 = vector.broadcast %415 : i32 to vector<8x1xi32>
    %418 = arith.cmpi eq, %416, %417 : vector<8x1xi32>
    %419 = arith.extui %418 : vector<8x1xi1> to vector<8x1xi32>
    %420 = arith.sitofp %419 : vector<8x1xi32> to vector<8x1xf32>
    %421 = vector.broadcast %420 : vector<8x1xf32> to vector<8x32xf32>
    %422 = arith.mulf %421, %413 : vector<8x32xf32>
    %cst_175 = arith.constant dense<0.000000e+00> : vector<32xf32>
    %423 = vector.multi_reduction <add>, %422, %cst_175 [0] : vector<8x32xf32> to vector<32xf32>
    %424 = vector.shape_cast %423 : vector<32xf32> to vector<1x32xf32>
    %c0_176 = arith.constant 0 : index
    %c0_177 = arith.constant 0 : index
    %425 = vector.load %arg17[%c0_176, %c0_177] : memref<32x16xf32, #tpu.memory_space<vmem>>, vector<32x16xf32>
    %426 = arith.truncf %424 : vector<1x32xf32> to vector<1x32xbf16>
    %427 = arith.truncf %425 : vector<32x16xf32> to vector<32x16xbf16>
    %cst_178 = arith.constant dense<0.000000e+00> : vector<1x16xf32>
    %428 = tpu.matmul %426, %427, %cst_178 {dimension_numbers = #tpu.dot_dimension_numbers<[1], [0], [0], [1], [0, 0, 1, 1], [], []>} : vector<1x32xbf16>, vector<32x16xbf16>, vector<1x16xf32> -> vector<1x16xf32>
    %c0_179 = arith.constant 0 : index
    %c0_180 = arith.constant 0 : index
    %c0_181 = arith.constant 0 : index
    %429 = vector.load %arg18[%c0_179, %c0_180, %c0_181] : memref<1x1x16xf32, #tpu.memory_space<vmem>>, vector<1x1x16xf32>
    %430 = vector.shape_cast %429 : vector<1x1x16xf32> to vector<1x16xf32>
    %431 = vector.shape_cast %428 : vector<1x16xf32> to vector<1x1x16xf32>
    tpu.vector_store %arg18[%c0_179, %c0_180, %c0_181], %431 {strides = array<i32>} : memref<1x1x16xf32, #tpu.memory_space<vmem>>, vector<1x1x16xf32>,
    return
  }
  func.func @transform_0(%arg0: i32, %arg1: memref<2xi32, #tpu.memory_space<smem>>) -> (i32, i32, i32) {
    %c0_i32 = arith.constant 0 : i32
    %c0_i32_0 = arith.constant 0 : i32
    %c0_i32_1 = arith.constant 0 : i32
    return %arg0, %c0_i32, %c0_i32_0 : i32, i32, i32
  }
  func.func @transform_1(%arg0: i32, %arg1: memref<2xi32, #tpu.memory_space<smem>>) -> (i32, i32, i32) {
    %c0_i32 = arith.constant 0 : i32
    %c0_i32_0 = arith.constant 0 : i32
    %c0_i32_1 = arith.constant 0 : i32
    %c0_i32_2 = arith.constant 0 : i32
    return %c0_i32, %c0_i32_0, %c0_i32_1 : i32, i32, i32
  }
  func.func @transform_2(%arg0: i32, %arg1: memref<2xi32, #tpu.memory_space<smem>>) -> (i32, i32, i32) {
    %c0_i32 = arith.constant 0 : i32
    %c0_i32_0 = arith.constant 0 : i32
    %c0_i32_1 = arith.constant 0 : i32
    %c0_i32_2 = arith.constant 0 : i32
    return %c0_i32, %c0_i32_0, %c0_i32_1 : i32, i32, i32
  }
  func.func @transform_3(%arg0: i32, %arg1: memref<2xi32, #tpu.memory_space<smem>>) -> (i32, i32, i32) {
    %c0_i32 = arith.constant 0 : i32
    %c0_i32_0 = arith.constant 0 : i32
    %c0_i32_1 = arith.constant 0 : i32
    %c0_i32_2 = arith.constant 0 : i32
    return %c0_i32, %c0_i32_0, %c0_i32_1 : i32, i32, i32
  }
  func.func @transform_4(%arg0: i32, %arg1: memref<2xi32, #tpu.memory_space<smem>>) -> (i32, i32, i32) {
    %c0_i32 = arith.constant 0 : i32
    %c0_i32_0 = arith.constant 0 : i32
    %c0_i32_1 = arith.constant 0 : i32
    %c0_i32_2 = arith.constant 0 : i32
    return %c0_i32, %c0_i32_0, %c0_i32_1 : i32, i32, i32
  }
  func.func @transform_5(%arg0: i32, %arg1: memref<2xi32, #tpu.memory_space<smem>>) -> (i32, i32, i32) {
    %c0_i32 = arith.constant 0 : i32
    %c0_i32_0 = arith.constant 0 : i32
    %c0_i32_1 = arith.constant 0 : i32
    %c0_i32_2 = arith.constant 0 : i32
    return %c0_i32, %c0_i32_0, %c0_i32_1 : i32, i32, i32
  }
  func.func @transform_6(%arg0: i32, %arg1: memref<2xi32, #tpu.memory_space<smem>>) -> (i32, i32, i32) {
    %c0_i32 = arith.constant 0 : i32
    %c0_i32_0 = arith.constant 0 : i32
    %c0_i32_1 = arith.constant 0 : i32
    %c0_i32_2 = arith.constant 0 : i32
    return %c0_i32, %c0_i32_0, %c0_i32_1 : i32, i32, i32
  }
  func.func @transform_7(%arg0: i32, %arg1: memref<2xi32, #tpu.memory_space<smem>>) -> (i32, i32, i32) {
    %c0_i32 = arith.constant 0 : i32
    %c0_i32_0 = arith.constant 0 : i32
    %c0_i32_1 = arith.constant 0 : i32
    %c0_i32_2 = arith.constant 0 : i32
    return %c0_i32, %c0_i32_0, %c0_i32_1 : i32, i32, i32
  }
  func.func @transform_8(%arg0: i32, %arg1: memref<2xi32, #tpu.memory_space<smem>>) -> (i32, i32, i32) {
    %c0_i32 = arith.constant 0 : i32
    %c0_i32_0 = arith.constant 0 : i32
    %c0_i32_1 = arith.constant 0 : i32
    %c0_i32_2 = arith.constant 0 : i32
    return %c0_i32, %c0_i32_0, %c0_i32_1 : i32, i32, i32
  }
  func.func @transform_9(%arg0: i32, %arg1: memref<2xi32, #tpu.memory_space<smem>>) -> (i32, i32, i32) {
    %c0_i32 = arith.constant 0 : i32
    %c0_i32_0 = arith.constant 0 : i32
    %c0_i32_1 = arith.constant 0 : i32
    %c0_i32_2 = arith.constant 0 : i32
    return %c0_i32, %c0_i32_0, %c0_i32_1 : i32, i32, i32
  }
  func.func @transform_10(%arg0: i32, %arg1: memref<2xi32, #tpu.memory_space<smem>>) -> (i32, i32, i32) {
    %c0_i32 = arith.constant 0 : i32
    %c0_i32_0 = arith.constant 0 : i32
    %c0_i32_1 = arith.constant 0 : i32
    %c0_i32_2 = arith.constant 0 : i32
    return %c0_i32, %c0_i32_0, %c0_i32_1 : i32, i32, i32
  }
  func.func @transform_11(%arg0: i32, %arg1: memref<2xi32, #tpu.memory_space<smem>>) -> (i32, i32, i32) {
    %c0_i32 = arith.constant 0 : i32
    %c0_i32_0 = arith.constant 0 : i32
    %c0_i32_1 = arith.constant 0 : i32
    %c0_i32_2 = arith.constant 0 : i32
    return %c0_i32, %c0_i32_0, %c0_i32_1 : i32, i32, i32
  }
  func.func @transform_12(%arg0: i32, %arg1: memref<2xi32, #tpu.memory_space<smem>>) -> (i32, i32, i32) {
    %c0_i32 = arith.constant 0 : i32
    %c0_i32_0 = arith.constant 0 : i32
    %c0_i32_1 = arith.constant 0 : i32
    %c0_i32_2 = arith.constant 0 : i32
    return %c0_i32, %c0_i32_0, %c0_i32_1 : i32, i32, i32
  }
  func.func @transform_13(%arg0: i32, %arg1: memref<2xi32, #tpu.memory_space<smem>>) -> (i32, i32) {
    %c0_i32 = arith.constant 0 : i32
    %c0_i32_0 = arith.constant 0 : i32
    %c0_i32_1 = arith.constant 0 : i32
    return %c0_i32, %c0_i32_0 : i32, i32
  }
  func.func @transform_14(%arg0: i32, %arg1: memref<2xi32, #tpu.memory_space<smem>>) -> (i32, i32) {
    %c0_i32 = arith.constant 0 : i32
    %c0_i32_0 = arith.constant 0 : i32
    %c0_i32_1 = arith.constant 0 : i32
    return %c0_i32, %c0_i32_0 : i32, i32
  }
  func.func @transform_15(%arg0: i32, %arg1: memref<2xi32, #tpu.memory_space<smem>>) -> (i32, i32) {
    %c0_i32 = arith.constant 0 : i32
    %c0_i32_0 = arith.constant 0 : i32
    %c0_i32_1 = arith.constant 0 : i32
    return %c0_i32, %c0_i32_0 : i32, i32
  }
  func.func @transform_16(%arg0: i32, %arg1: memref<2xi32, #tpu.memory_space<smem>>) -> (i32, i32, i32) {
    %c0_i32 = arith.constant 0 : i32
    %c0_i32_0 = arith.constant 0 : i32
    %c0_i32_1 = arith.constant 0 : i32
    return %arg0, %c0_i32, %c0_i32_0 : i32, i32, i32
  }
}

</mosaic_0001>

<llo_original>
// kernel: clip_text_encoder.1
$region0: #{clip_text_encoder.1}
  #allocation0 [shape = 'u32[]', space=smem, size = 0x4, offset = 0x4, fixed_abs, tag = 'smem constant byte address 0x4 - core index']
  #allocation1 [shape = 'u32[144,128]{1,0:T(1,128)}', space=vmem, size = 0x12000, scoped, tag = 'internal scratch']
  #allocation2 [shape = 's32[1]{0}', space=sflag, size = 0x4, scoped, tag = 'scoped memory for clip_text_encoder.1']
  #allocation3 [shape = 'u8[512]{0}', space=smem, size = 0x200, scoped, tag = 'prefetched SMEM operand 0']
  %s0 = inlined_call_operand.vmem [shape: s32[2], index: 0, kind: input, shape index: {}]
  %s1 = inlined_call_operand.vmem [shape: f32[2,8,32], index: 1, kind: input, shape index: {}]
  %s2 = inlined_call_operand.vmem [shape: f32[2,32,96], index: 2, kind: input, shape index: {}]
  %s3 = inlined_call_operand.vmem [shape: f32[2,1,96], index: 3, kind: input, shape index: {}]
  %s4 = inlined_call_operand.vmem [shape: f32[2,32,32], index: 4, kind: input, shape index: {}]
  %s5 = inlined_call_operand.vmem [shape: f32[2,1,32], index: 5, kind: input, shape index: {}]
  %s6 = inlined_call_operand.vmem [shape: f32[2,1,32], index: 6, kind: input, shape index: {}]
  %s7 = inlined_call_operand.vmem [shape: f32[2,1,32], index: 7, kind: input, shape index: {}]
  %s8 = inlined_call_operand.vmem [shape: f32[2,1,32], index: 8, kind: input, shape index: {}]
  %s9 = inlined_call_operand.vmem [shape: f32[2,1,32], index: 9, kind: input, shape index: {}]
  %s10 = inlined_call_operand.vmem [shape: f32[2,32,128], index: 10, kind: input, shape index: {}]
  %s11 = inlined_call_operand.vmem [shape: f32[2,1,128], index: 11, kind: input, shape index: {}]
  %s12 = inlined_call_operand.vmem [shape: f32[2,128,32], index: 12, kind: input, shape index: {}]
  %s13 = inlined_call_operand.vmem [shape: f32[2,1,32], index: 13, kind: input, shape index: {}]
  %s14 = inlined_call_operand.vmem [shape: f32[1,32], index: 14, kind: input, shape index: {}]
  %s15 = inlined_call_operand.vmem [shape: f32[1,32], index: 15, kind: input, shape index: {}]
  %s16 = inlined_call_operand.vmem [shape: f32[32,16], index: 16, kind: input, shape index: {}]
  %s17 = inlined_call_operand.hbm [shape: f32[2,1,16], index: 17, kind: output, shape index: {}]
  %s18 = sld [smem:[#allocation0]]
  $region97: #{clip_text_encoder.1} parent=0
    _
  %s20 = ssub.s32 1, %s18
  %s21 = scalar_select 0, %s20, %s18
  %s22 = sshll.u32 %s0, 4
  %s23 = int_to_ptr.vmem [resolvable:$true] %s22
  %25 = dma.vmem_to_smem %s23, 16, [#allocation3], [#allocation2]
  %26 = dma.done [#allocation2], 16
  %27 = sfence
  $region1: #{clip_text_encoder.1} parent=0
    #allocation4 [shape = 'u8[1024]{0}', space=vmem, size = 0x400, scoped, tag = 'output window, operand 0']
    #allocation5 [shape = 's32[2]{0}', space=sflag, size = 0x8, scoped, tag = 'scoped memory for clip_text_encoder.1']
    %28 = vsyncpa [#allocation5], 0
    %s29 = scalar_lea.sflag [#allocation5], 1
    %30 = vsyncpa %s29, 0
    loop: start=0, step=1, limit=4
    $region2: #{clip_text_encoder.1} parent=1 // loop_pre_header
      _
    $region3: #{clip_text_encoder.1} parent=1 // loop_header
      %s32 = sphi 0, %s36
      %p33 = scmp.ge.s32.totalorder %s32, 4
      %s42 = sphi 0, %s44
      %s45 = sphi 0, %s42
      %s46 = sphi 0, %s45
      %s62 = sphi 0, %s46
      %s66 = sphi 0, %s66
      %s68 = sphi 0, %s66
      %s69 = sphi 0, %s68
      %s83 = sphi 0, %s69
      %s87 = sphi 0, %s87
      %s89 = sphi 0, %s87
      %s90 = sphi 0, %s89
      %s104 = sphi 0, %s90
      %s108 = sphi 0, %s108
      %s110 = sphi 0, %s108
      %s111 = sphi 0, %s110
      %s125 = sphi 0, %s111
      %s129 = sphi 0, %s129
      %s131 = sphi 0, %s129
      %s132 = sphi 0, %s131
      %s146 = sphi 0, %s132
      %s150 = sphi 0, %s150
      %s152 = sphi 0, %s150
      %s153 = sphi 0, %s152
      %s167 = sphi 0, %s153
      %s171 = sphi 0, %s171
      %s173 = sphi 0, %s171
      %s174 = sphi 0, %s173
      %s188 = sphi 0, %s174
      %s192 = sphi 0, %s192
      %s194 = sphi 0, %s192
      %s195 = sphi 0, %s194
      %s209 = sphi 0, %s195
      %s213 = sphi 0, %s213
      %s215 = sphi 0, %s213
      %s216 = sphi 0, %s215
      %s230 = sphi 0, %s216
      %s234 = sphi 0, %s234
      %s236 = sphi 0, %s234
      %s237 = sphi 0, %s236
      %s251 = sphi 0, %s237
      %s255 = sphi 0, %s255
      %s257 = sphi 0, %s255
      %s258 = sphi 0, %s257
      %s272 = sphi 0, %s258
      %s276 = sphi 0, %s276
      %s278 = sphi 0, %s276
      %s279 = sphi 0, %s278
      %s293 = sphi 0, %s279
      %s297 = sphi 0, %s297
      %s299 = sphi 0, %s297
      %s300 = sphi 0, %s299
      %s314 = sphi 0, %s300
      %s318 = sphi 0, %s318
      %s320 = sphi 0, %s318
      %s321 = sphi 0, %s320
      %s335 = sphi 0, %s321
      %s339 = sphi 0, %s339
      %s341 = sphi 0, %s339
      %s342 = sphi 0, %s341
      %s356 = sphi 0, %s342
      %s360 = sphi 0, %s360
      %s362 = sphi 0, %s360
      %s363 = sphi 0, %s362
      %s377 = sphi 0, %s363
      %s383 = sphi 0, %s385
      %s386 = sphi 0, %s383
      %s387 = sphi 0, %s386
      %s403 = sphi 0, %s387
    $region4: #{clip_text_encoder.1} parent=1 // loop_header_branch
      %35 = sbr.rel (%p33) target = $region8
    $region5: #{clip_text_encoder.1} parent=1 // loop_body
      %s37 = ssub.s32 %s32, 1
      %s38 = ssub.s32 %s32, 2
      %s39 = sadd.s32 %s32, 1
      %s40 = ssub.s32 %s32, %s39
      %p41 = scmp.eq.s32.totalorder %s40, 0
      %s43 = sadd.s32 %s42, 1
      %s44 = scalar_select %p41, %s42, %s43
      %p47 = pneg %p41
      %p48 = scmp.eq.s32.totalorder %s32, 1
      %p49 = por %p47, %p48
      %p50 = scmp.ne.s32.totalorder %s42, %s45
      %p51 = scmp.eq.s32.totalorder %s32, 0
      %p52 = por %p50, %p51
      %p53 = scmp.ne.s32.totalorder %s42, %s45
      %p54 = scmp.eq.s32.totalorder %s37, 1
      %p55 = por %p53, %p54
      %p56 = scmp.ne.s32.totalorder %s45, %s46
      %p57 = scmp.eq.s32.totalorder %s37, 0
      %p58 = por %p56, %p57
      %p59 = scmp.ne.s32.totalorder %s45, %s46
      %p60 = scmp.eq.s32.totalorder %s38, 1
      %p61 = por %p59, %p60
      %p63 = scmp.ne.s32.totalorder %s46, %s62
      %p64 = scmp.eq.s32.totalorder %s38, 0
      %p65 = por %p63, %p64
      %s67 = sadd.s32 %s66, 1
      %p70 = scmp.eq.s32.totalorder %s32, 1
      %p71 = scmp.ne.s32.totalorder %s66, %s68
      %p72 = scmp.eq.s32.totalorder %s32, 0
      %p73 = por %p71, %p72
      %p74 = scmp.ne.s32.totalorder %s66, %s68
      %p75 = scmp.eq.s32.totalorder %s37, 1
      %p76 = por %p74, %p75
      %p77 = scmp.ne.s32.totalorder %s68, %s69
      %p78 = scmp.eq.s32.totalorder %s37, 0
      %p79 = por %p77, %p78
      %p80 = scmp.ne.s32.totalorder %s68, %s69
      %p81 = scmp.eq.s32.totalorder %s38, 1
      %p82 = por %p80, %p81
      %p84 = scmp.ne.s32.totalorder %s69, %s83
      %p85 = scmp.eq.s32.totalorder %s38, 0
      %p86 = por %p84, %p85
      %s88 = sadd.s32 %s87, 1
      %p91 = scmp.eq.s32.totalorder %s32, 1
      %p92 = scmp.ne.s32.totalorder %s87, %s89
      %p93 = scmp.eq.s32.totalorder %s32, 0
      %p94 = por %p92, %p93
      %p95 = scmp.ne.s32.totalorder %s87, %s89
      %p96 = scmp.eq.s32.totalorder %s37, 1
      %p97 = por %p95, %p96
      %p98 = scmp.ne.s32.totalorder %s89, %s90
      %p99 = scmp.eq.s32.totalorder %s37, 0
      %p100 = por %p98, %p99
      %p101 = scmp.ne.s32.totalorder %s89, %s90
      %p102 = scmp.eq.s32.totalorder %s38, 1
      %p103 = por %p101, %p102
      %p105 = scmp.ne.s32.totalorder %s90, %s104
      %p106 = scmp.eq.s32.totalorder %s38, 0
      %p107 = por %p105, %p106
      %s109 = sadd.s32 %s108, 1
      %p112 = scmp.eq.s32.totalorder %s32, 1
      %p113 = scmp.ne.s32.totalorder %s108, %s110
      %p114 = scmp.eq.s32.totalorder %s32, 0
      %p115 = por %p113, %p114
      %p116 = scmp.ne.s32.totalorder %s108, %s110
      %p117 = scmp.eq.s32.totalorder %s37, 1
      %p118 = por %p116, %p117
      %p119 = scmp.ne.s32.totalorder %s110, %s111
      %p120 = scmp.eq.s32.totalorder %s37, 0
      %p121 = por %p119, %p120
      %p122 = scmp.ne.s32.totalorder %s110, %s111
      %p123 = scmp.eq.s32.totalorder %s38, 1
      %p124 = por %p122, %p123
      %p126 = scmp.ne.s32.totalorder %s111, %s125
      %p127 = scmp.eq.s32.totalorder %s38, 0
      %p128 = por %p126, %p127
      %s130 = sadd.s32 %s129, 1
      %p133 = scmp.eq.s32.totalorder %s32, 1
      %p134 = scmp.ne.s32.totalorder %s129, %s131
      %p135 = scmp.eq.s32.totalorder %s32, 0
      %p136 = por %p134, %p135
      %p137 = scmp.ne.s32.totalorder %s129, %s131
      %p138 = scmp.eq.s32.totalorder %s37, 1
      %p139 = por %p137, %p138
      %p140 = scmp.ne.s32.totalorder %s131, %s132
      %p141 = scmp.eq.s32.totalorder %s37, 0
      %p142 = por %p140, %p141
      %p143 = scmp.ne.s32.totalorder %s131, %s132
      %p144 = scmp.eq.s32.totalorder %s38, 1
      %p145 = por %p143, %p144
      %p147 = scmp.ne.s32.totalorder %s132, %s146
      %p148 = scmp.eq.s32.totalorder %s38, 0
      %p149 = por %p147, %p148
      %s151 = sadd.s32 %s150, 1
      %p154 = scmp.eq.s32.totalorder %s32, 1
      %p155 = scmp.ne.s32.totalorder %s150, %s152
      %p156 = scmp.eq.s32.totalorder %s32, 0
      %p157 = por %p155, %p156
      %p158 = scmp.ne.s32.totalorder %s150, %s152
      %p159 = scmp.eq.s32.totalorder %s37, 1
      %p160 = por %p158, %p159
      %p161 = scmp.ne.s32.totalorder %s152, %s153
      %p162 = scmp.eq.s32.totalorder %s37, 0
      %p163 = por %p161, %p162
      %p164 = scmp.ne.s32.totalorder %s152, %s153
      %p165 = scmp.eq.s32.totalorder %s38, 1
      %p166 = por %p164, %p165
      %p168 = scmp.ne.s32.totalorder %s153, %s167
      %p169 = scmp.eq.s32.totalorder %s38, 0
      %p170 = por %p168, %p169
      %s172 = sadd.s32 %s171, 1
      %p175 = scmp.eq.s32.totalorder %s32, 1
      %p176 = scmp.ne.s32.totalorder %s171, %s173
      %p177 = scmp.eq.s32.totalorder %s32, 0
      %p178 = por %p176, %p177
      %p179 = scmp.ne.s32.totalorder %s171, %s173
      %p180 = scmp.eq.s32.totalorder %s37, 1
      %p181 = por %p179, %p180
      %p182 = scmp.ne.s32.totalorder %s173, %s174
      %p183 = scmp.eq.s32.totalorder %s37, 0
      %p184 = por %p182, %p183
      %p185 = scmp.ne.s32.totalorder %s173, %s174
      %p186 = scmp.eq.s32.totalorder %s38, 1
      %p187 = por %p185, %p186
      %p189 = scmp.ne.s32.totalorder %s174, %s188
      %p190 = scmp.eq.s32.totalorder %s38, 0
      %p191 = por %p189, %p190
      %s193 = sadd.s32 %s192, 1
      %p196 = scmp.eq.s32.totalorder %s32, 1
      %p197 = scmp.ne.s32.totalorder %s192, %s194
      %p198 = scmp.eq.s32.totalorder %s32, 0
      %p199 = por %p197, %p198
      %p200 = scmp.ne.s32.totalorder %s192, %s194
      %p201 = scmp.eq.s32.totalorder %s37, 1
      %p202 = por %p200, %p201
      %p203 = scmp.ne.s32.totalorder %s194, %s195
      %p204 = scmp.eq.s32.totalorder %s37, 0
      %p205 = por %p203, %p204
      %p206 = scmp.ne.s32.totalorder %s194, %s195
      %p207 = scmp.eq.s32.totalorder %s38, 1
      %p208 = por %p206, %p207
      %p210 = scmp.ne.s32.totalorder %s195, %s209
      %p211 = scmp.eq.s32.totalorder %s38, 0
      %p212 = por %p210, %p211
      %s214 = sadd.s32 %s213, 1
      %p217 = scmp.eq.s32.totalorder %s32, 1
      %p218 = scmp.ne.s32.totalorder %s213, %s215
      %p219 = scmp.eq.s32.totalorder %s32, 0
      %p220 = por %p218, %p219
      %p221 = scmp.ne.s32.totalorder %s213, %s215
      %p222 = scmp.eq.s32.totalorder %s37, 1
      %p223 = por %p221, %p222
      %p224 = scmp.ne.s32.totalorder %s215, %s216
      %p225 = scmp.eq.s32.totalorder %s37, 0
      %p226 = por %p224, %p225
      %p227 = scmp.ne.s32.totalorder %s215, %s216
      %p228 = scmp.eq.s32.totalorder %s38, 1
      %p229 = por %p227, %p228
      %p231 = scmp.ne.s32.totalorder %s216, %s230
      %p232 = scmp.eq.s32.totalorder %s38, 0
      %p233 = por %p231, %p232
      %s235 = sadd.s32 %s234, 1
      %p238 = scmp.eq.s32.totalorder %s32, 1
      %p239 = scmp.ne.s32.totalorder %s234, %s236
      %p240 = scmp.eq.s32.totalorder %s32, 0
      %p241 = por %p239, %p240
      %p242 = scmp.ne.s32.totalorder %s234, %s236
      %p243 = scmp.eq.s32.totalorder %s37, 1
      %p244 = por %p242, %p243
      %p245 = scmp.ne.s32.totalorder %s236, %s237
      %p246 = scmp.eq.s32.totalorder %s37, 0
      %p247 = por %p245, %p246
      %p248 = scmp.ne.s32.totalorder %s236, %s237
      %p249 = scmp.eq.s32.totalorder %s38, 1
      %p250 = por %p248, %p249
      %p252 = scmp.ne.s32.totalorder %s237, %s251
      %p253 = scmp.eq.s32.totalorder %s38, 0
      %p254 = por %p252, %p253
      %s256 = sadd.s32 %s255, 1
      %p259 = scmp.eq.s32.totalorder %s32, 1
      %p260 = scmp.ne.s32.totalorder %s255, %s257
      %p261 = scmp.eq.s32.totalorder %s32, 0
      %p262 = por %p260, %p261
      %p263 = scmp.ne.s32.totalorder %s255, %s257
      %p264 = scmp.eq.s32.totalorder %s37, 1
      %p265 = por %p263, %p264
      %p266 = scmp.ne.s32.totalorder %s257, %s258
      %p267 = scmp.eq.s32.totalorder %s37, 0
      %p268 = por %p266, %p267
      %p269 = scmp.ne.s32.totalorder %s257, %s258
      %p270 = scmp.eq.s32.totalorder %s38, 1
      %p271 = por %p269, %p270
      %p273 = scmp.ne.s32.totalorder %s258, %s272
      %p274 = scmp.eq.s32.totalorder %s38, 0
      %p275 = por %p273, %p274
      %s277 = sadd.s32 %s276, 1
      %p280 = scmp.eq.s32.totalorder %s32, 1
      %p281 = scmp.ne.s32.totalorder %s276, %s278
      %p282 = scmp.eq.s32.totalorder %s32, 0
      %p283 = por %p281, %p282
      %p284 = scmp.ne.s32.totalorder %s276, %s278
      %p285 = scmp.eq.s32.totalorder %s37, 1
      %p286 = por %p284, %p285
      %p287 = scmp.ne.s32.totalorder %s278, %s279
      %p288 = scmp.eq.s32.totalorder %s37, 0
      %p289 = por %p287, %p288
      %p290 = scmp.ne.s32.totalorder %s278, %s279
      %p291 = scmp.eq.s32.totalorder %s38, 1
      %p292 = por %p290, %p291
      %p294 = scmp.ne.s32.totalorder %s279, %s293
      %p295 = scmp.eq.s32.totalorder %s38, 0
      %p296 = por %p294, %p295
      %s298 = sadd.s32 %s297, 1
      %p301 = scmp.eq.s32.totalorder %s32, 1
      %p302 = scmp.ne.s32.totalorder %s297, %s299
      %p303 = scmp.eq.s32.totalorder %s32, 0
      %p304 = por %p302, %p303
      %p305 = scmp.ne.s32.totalorder %s297, %s299
      %p306 = scmp.eq.s32.totalorder %s37, 1
      %p307 = por %p305, %p306
      %p308 = scmp.ne.s32.totalorder %s299, %s300
      %p309 = scmp.eq.s32.totalorder %s37, 0
      %p310 = por %p308, %p309
      %p311 = scmp.ne.s32.totalorder %s299, %s300
      %p312 = scmp.eq.s32.totalorder %s38, 1
      %p313 = por %p311, %p312
      %p315 = scmp.ne.s32.totalorder %s300, %s314
      %p316 = scmp.eq.s32.totalorder %s38, 0
      %p317 = por %p315, %p316
      %s319 = sadd.s32 %s318, 1
      %p322 = scmp.eq.s32.totalorder %s32, 1
      %p323 = scmp.ne.s32.totalorder %s318, %s320
      %p324 = scmp.eq.s32.totalorder %s32, 0
      %p325 = por %p323, %p324
      %p326 = scmp.ne.s32.totalorder %s318, %s320
      %p327 = scmp.eq.s32.totalorder %s37, 1
      %p328 = por %p326, %p327
      %p329 = scmp.ne.s32.totalorder %s320, %s321
      %p330 = scmp.eq.s32.totalorder %s37, 0
      %p331 = por %p329, %p330
      %p332 = scmp.ne.s32.totalorder %s320, %s321
      %p333 = scmp.eq.s32.totalorder %s38, 1
      %p334 = por %p332, %p333
      %p336 = scmp.ne.s32.totalorder %s321, %s335
      %p337 = scmp.eq.s32.totalorder %s38, 0
      %p338 = por %p336, %p337
      %s340 = sadd.s32 %s339, 1
      %p343 = scmp.eq.s32.totalorder %s32, 1
      %p344 = scmp.ne.s32.totalorder %s339, %s341
      %p345 = scmp.eq.s32.totalorder %s32, 0
      %p346 = por %p344, %p345
      %p347 = scmp.ne.s32.totalorder %s339, %s341
      %p348 = scmp.eq.s32.totalorder %s37, 1
      %p349 = por %p347, %p348
      %p350 = scmp.ne.s32.totalorder %s341, %s342
      %p351 = scmp.eq.s32.totalorder %s37, 0
      %p352 = por %p350, %p351
      %p353 = scmp.ne.s32.totalorder %s341, %s342
      %p354 = scmp.eq.s32.totalorder %s38, 1
      %p355 = por %p353, %p354
      %p357 = scmp.ne.s32.totalorder %s342, %s356
      %p358 = scmp.eq.s32.totalorder %s38, 0
      %p359 = por %p357, %p358
      %s361 = sadd.s32 %s360, 1
      %p364 = scmp.eq.s32.totalorder %s32, 1
      %p365 = scmp.ne.s32.totalorder %s360, %s362
      %p366 = scmp.eq.s32.totalorder %s32, 0
      %p367 = por %p365, %p366
      %p368 = scmp.ne.s32.totalorder %s360, %s362
      %p369 = scmp.eq.s32.totalorder %s37, 1
      %p370 = por %p368, %p369
      %p371 = scmp.ne.s32.totalorder %s362, %s363
      %p372 = scmp.eq.s32.totalorder %s37, 0
      %p373 = por %p371, %p372
      %p374 = scmp.ne.s32.totalorder %s362, %s363
      %p375 = scmp.eq.s32.totalorder %s38, 1
      %p376 = por %p374, %p375
      %p378 = scmp.ne.s32.totalorder %s363, %s377
      %p379 = scmp.eq.s32.totalorder %s38, 0
      %p380 = por %p378, %p379
      %s381 = ssub.s32 %s32, %s39
      %p382 = scmp.eq.s32.totalorder %s381, 0
      %s384 = sadd.s32 %s383, 1
      %s385 = scalar_select %p382, %s383, %s384
      %p388 = pneg %p382
      %p389 = scmp.eq.s32.totalorder %s32, 1
      %p390 = por %p388, %p389
      %p391 = scmp.ne.s32.totalorder %s383, %s386
      %p392 = scmp.eq.s32.totalorder %s32, 0
      %p393 = por %p391, %p392
      %p394 = scmp.ne.s32.totalorder %s383, %s386
      %p395 = scmp.eq.s32.totalorder %s37, 1
      %p396 = por %p394, %p395
      %p397 = scmp.ne.s32.totalorder %s386, %s387
      %p398 = scmp.eq.s32.totalorder %s37, 0
      %p399 = por %p397, %p398
      %p400 = scmp.ne.s32.totalorder %s386, %s387
      %p401 = scmp.eq.s32.totalorder %s38, 1
      %p402 = por %p400, %p401
      %p404 = scmp.ne.s32.totalorder %s387, %s403
      %p405 = scmp.eq.s32.totalorder %s38, 0
      %p406 = por %p404, %p405
      %p407 = scmp.le.s32.totalorder 1, %s32
      %p408 = scmp.lt.s32.totalorder %s32, 3
      %p409 = pnand %p407, %p408
      %p410 = pneg %p409
      // Predicated region
      $region9: #{clip_text_encoder.1} parent=5 // pred_check
        _
      $region10: #{clip_text_encoder.1} parent=5 // pred_check_branch
        %412 = sbr.rel (%p409) target = $region12
      $region11: #{clip_text_encoder.1} parent=5 // pred_region
        %s413 = ssub.s32 %s32, 1
        // Predicated region
        $region13: #{clip_text_encoder.1} parent=11 // pred_check
          %p414 = pneg %p79
        $region14: #{clip_text_encoder.1} parent=11 // pred_check_branch
          %416 = sbr.rel (%p414) target = $region16
        $region15: #{clip_text_encoder.1} parent=11 // pred_region
          _
        $region16: #{clip_text_encoder.1} parent=11 // pred_fallthru
          _
        // Predicated region
        $region17: #{clip_text_encoder.1} parent=11 // pred_check
          %p417 = pneg %p100
        $region18: #{clip_text_encoder.1} parent=11 // pred_check_branch
          %419 = sbr.rel (%p417) target = $region20
        $region19: #{clip_text_encoder.1} parent=11 // pred_region
          _
        $region20: #{clip_text_encoder.1} parent=11 // pred_fallthru
          _
        // Predicated region
        $region21: #{clip_text_encoder.1} parent=11 // pred_check
          %p420 = pneg %p121
        $region22: #{clip_text_encoder.1} parent=11 // pred_check_branch
          %422 = sbr.rel (%p420) target = $region24
        $region23: #{clip_text_encoder.1} parent=11 // pred_region
          _
        $region24: #{clip_text_encoder.1} parent=11 // pred_fallthru
          _
        // Predicated region
        $region25: #{clip_text_encoder.1} parent=11 // pred_check
          %p423 = pneg %p142
        $region26: #{clip_text_encoder.1} parent=11 // pred_check_branch
          %425 = sbr.rel (%p423) target = $region28
        $region27: #{clip_text_encoder.1} parent=11 // pred_region
          _
        $region28: #{clip_text_encoder.1} parent=11 // pred_fallthru
          _
        // Predicated region
        $region29: #{clip_text_encoder.1} parent=11 // pred_check
          %p426 = pneg %p163
        $region30: #{clip_text_encoder.1} parent=11 // pred_check_branch
          %428 = sbr.rel (%p426) target = $region32
        $region31: #{clip_text_encoder.1} parent=11 // pred_region
          _
        $region32: #{clip_text_encoder.1} parent=11 // pred_fallthru
          _
        // Predicated region
        $region33: #{clip_text_encoder.1} parent=11 // pred_check
          %p429 = pneg %p184
        $region34: #{clip_text_encoder.1} parent=11 // pred_check_branch
          %431 = sbr.rel (%p429) target = $region36
        $region35: #{clip_text_encoder.1} parent=11 // pred_region
          _
        $region36: #{clip_text_encoder.1} parent=11 // pred_fallthru
          _
        // Predicated region
        $region37: #{clip_text_encoder.1} parent=11 // pred_check
          %p432 = pneg %p205
        $region38: #{clip_text_encoder.1} parent=11 // pred_check_branch
          %434 = sbr.rel (%p432) target = $region40
        $region39: #{clip_text_encoder.1} parent=11 // pred_region
          _
        $region40: #{clip_text_encoder.1} parent=11 // pred_fallthru
          _
        // Predicated region
        $region41: #{clip_text_encoder.1} parent=11 // pred_check
          %p435 = pneg %p226
        $region42: #{clip_text_encoder.1} parent=11 // pred_check_branch
          %437 = sbr.rel (%p435) target = $region44
        $region43: #{clip_text_encoder.1} parent=11 // pred_region
          _
        $region44: #{clip_text_encoder.1} parent=11 // pred_fallthru
          _
        // Predicated region
        $region45: #{clip_text_encoder.1} parent=11 // pred_check
          %p438 = pneg %p247
        $region46: #{clip_text_encoder.1} parent=11 // pred_check_branch
          %440 = sbr.rel (%p438) target = $region48
        $region47: #{clip_text_encoder.1} parent=11 // pred_region
          _
        $region48: #{clip_text_encoder.1} parent=11 // pred_fallthru
          _
        // Predicated region
        $region49: #{clip_text_encoder.1} parent=11 // pred_check
          %p441 = pneg %p268
        $region50: #{clip_text_encoder.1} parent=11 // pred_check_branch
          %443 = sbr.rel (%p441) target = $region52
        $region51: #{clip_text_encoder.1} parent=11 // pred_region
          _
        $region52: #{clip_text_encoder.1} parent=11 // pred_fallthru
          _
        // Predicated region
        $region53: #{clip_text_encoder.1} parent=11 // pred_check
          %p444 = pneg %p289
        $region54: #{clip_text_encoder.1} parent=11 // pred_check_branch
          %446 = sbr.rel (%p444) target = $region56
        $region55: #{clip_text_encoder.1} parent=11 // pred_region
          _
        $region56: #{clip_text_encoder.1} parent=11 // pred_fallthru
          _
        // Predicated region
        $region57: #{clip_text_encoder.1} parent=11 // pred_check
          %p447 = pneg %p310
        $region58: #{clip_text_encoder.1} parent=11 // pred_check_branch
          %449 = sbr.rel (%p447) target = $region60
        $region59: #{clip_text_encoder.1} parent=11 // pred_region
          _
        $region60: #{clip_text_encoder.1} parent=11 // pred_fallthru
          _
        // Predicated region
        $region61: #{clip_text_encoder.1} parent=11 // pred_check
          %p450 = pneg %p331
        $region62: #{clip_text_encoder.1} parent=11 // pred_check_branch
          %452 = sbr.rel (%p450) target = $region64
        $region63: #{clip_text_encoder.1} parent=11 // pred_region
          _
        $region64: #{clip_text_encoder.1} parent=11 // pred_fallthru
          _
        // Predicated region
        $region65: #{clip_text_encoder.1} parent=11 // pred_check
          %p453 = pneg %p352
        $region66: #{clip_text_encoder.1} parent=11 // pred_check_branch
          %455 = sbr.rel (%p453) target = $region68
        $region67: #{clip_text_encoder.1} parent=11 // pred_region
          _
        $region68: #{clip_text_encoder.1} parent=11 // pred_fallthru
          _
        // Predicated region
        $region69: #{clip_text_encoder.1} parent=11 // pred_check
          %p456 = pneg %p373
        $region70: #{clip_text_encoder.1} parent=11 // pred_check_branch
          %458 = sbr.rel (%p456) target = $region72
        $region71: #{clip_text_encoder.1} parent=11 // pred_region
          _
        $region72: #{clip_text_encoder.1} parent=11 // pred_fallthru
          _
      $region12: #{clip_text_encoder.1} parent=5 // pred_fallthru
        _
      %p459 = scmp.lt.s32.totalorder %s32, 2
      // Predicated region
      $region73: #{clip_text_encoder.1} parent=5 // pred_check
        %p460 = pneg %p459
      $region74: #{clip_text_encoder.1} parent=5 // pred_check_branch
        %462 = sbr.rel (%p460) target = $region76
      $region75: #{clip_text_encoder.1} parent=5 // pred_region
        // Predicated region
        $region77: #{clip_text_encoder.1} parent=75 // pred_check
          %p463 = pneg %p52
        $region78: #{clip_text_encoder.1} parent=75 // pred_check_branch
          %465 = sbr.rel (%p463) target = $region80
        $region79: #{clip_text_encoder.1} parent=75 // pred_region
          %p466 = scmp.lt.s32.totalorder %s32, 1
          %s467 = scalar_select %p466, %s32, 1
          %s468 = smul.addr %s467, 8
          %s469 = scalar_lea.vmem %s1, %s468
        $region80: #{clip_text_encoder.1} parent=75 // pred_fallthru
          _
      $region76: #{clip_text_encoder.1} parent=5 // pred_fallthru
        _
      %p470 = scmp.le.s32.totalorder 1, %s32
      %p471 = scmp.lt.s32.totalorder %s32, 3
      %p472 = pnand %p470, %p471
      %p473 = pneg %p472
      // Predicated region
      $region81: #{clip_text_encoder.1} parent=5 // pred_check
        _
      $region82: #{clip_text_encoder.1} parent=5 // pred_check_branch
        %475 = sbr.rel (%p472) target = $region84
      $region83: #{clip_text_encoder.1} parent=5 // pred_region
        %s476 = ssub.s32 %s32, 1
        %p477 = scmp.lt.s32.totalorder %s37, 1
        %s478 = scalar_select %p477, %s37, 1
        %s479 = smul.addr %s478, 8
        %s480 = scalar_lea.vmem %s1, %s479
        %p481 = pneg %p58
        %p482 = pneg %p55
        %p483 = pneg %p79
        %p484 = pneg %p76
        %p485 = pneg %p100
        %p486 = pneg %p97
        %p487 = pneg %p121
        %p488 = pneg %p118
        %p489 = pneg %p142
        %p490 = pneg %p139
        %p491 = pneg %p163
        %p492 = pneg %p160
        %p493 = pneg %p184
        %p494 = pneg %p181
        %p495 = pneg %p205
        %p496 = pneg %p202
        %p497 = pneg %p226
        %p498 = pneg %p223
        %p499 = pneg %p247
        %p500 = pneg %p244
        %p501 = pneg %p268
        %p502 = pneg %p265
        %p503 = pneg %p289
        %p504 = pneg %p286
        %p505 = pneg %p310
        %p506 = pneg %p307
        %p507 = pneg %p331
        %p508 = pneg %p328
        %p509 = pneg %p352
        %p510 = pneg %p349
        %p511 = pneg %p373
        %p512 = pneg %p370
        %p513 = pneg %p399
        %p514 = pneg %p396
        %s515 = sand.u32 %s386, 1
        %s516 = scalar_lea.sflag [#allocation5], %s515
        %s517 = sand.u32 %s386, 1
        %s518 = scalar_lea.vmem [#allocation4], %s517
        %p519 = scmp.lt.s32.totalorder %s37, 1
        %s520 = scalar_select %p519, %s37, 1
        %s521 = smul.addr %s520, 8
        %s522 = scalar_lea.vmem %s1, %s521
        %v524 = vld [vmem:[%s522] sm:$0xff]
        %v525 = vlaneseq
        %v526 = vshrl.u32 %v525, 7
        %v527 = vlaneseq
        %v528 = vand.u32 %v527, 127
        %vm529 = vcmp.le.s32.totalorder %v528, %v526
        %v530 = vsel %vm529, 0.0, -1e+09
        %v531 = vld [vmem:[%s6] sm:$0x1]
        %v532 = vld [vmem:[%s7] sm:$0x1]
        %vm533 = vcmask 261120
        %v534 = vsel %vm533, %v524, 0.0
        %535 = vadd.xlane.f32.xlu0 %v534
        %v536 = vpop.xlane.xlu0 %535
        %v537 = vrcp.pop 32.0
        %v538 = vmul.f32 %v536, %v537
        %v539 = vsub.f32 %v524, %v538
        %v540 = vmul.f32 %v539, %v539
        %v541 = vsel %vm533, %v540, 0.0
        %542 = vadd.xlane.f32.xlu0 %v541
        %v543 = vpop.xlane.xlu0 %542
        %v544 = vmul.f32 %v543, %v537
        %v545 = vadd.f32 %v544, 1e-05
        %v546 = vrsqrt.pop %v545
        %v547 = vmul.f32 %v539, %v546
        %v549 = vlaneseq
        %v550 = vshrl.u32 %v549, 7
        %v551 = vsub.s32 0, %v550
        %v552 = vrot.slane %v531, %v551
        %v554 = vmul.f32 %v547, %v552
        %v556 = vlaneseq
        %v557 = vshrl.u32 %v556, 7
        %v558 = vsub.s32 0, %v557
        %v559 = vrot.slane %v532, %v558
        %v561 = vadd.f32 %v554, %v559
        %v562 = vld [vmem:[%s2] sm:$0xff]
        %v563 = vld [vmem:[%s2 + $0x8] sm:$0xff]
        %v564 = vld [vmem:[%s2 + $0x10] sm:$0xff]
        %v565 = vld [vmem:[%s2 + $0x18] sm:$0xff]
        %v566 = vpack.c.bf16 %v561, %v561
        %v567 = vpack.c.bf16 %v563, %v562
        %v568 = vpack.c.bf16 %v565, %v564
        %v569 = vld [vmem:[%s3] sm:$0x1]
        %v571 = vlaneseq
        %v572 = vshrl.u32 %v571, 7
        %v573 = vsub.s32 0, %v572
        %v574 = vrot.slane %v569, %v573
        %v577 = vsel %vm533, %v566, 0
        %579 = vmatprep.subr.bf16.mxu0 0
        %580 = vmatpush1.bf16.msra.mxu0 %v567
        %581 = vmatprep.subr.bf16.mxu0 0
        %582 = vmatpush1.bf16.msra.mxu0 %v568
        %583 = vmatprep.subr.bf16.mxu0 0
        %584 = vmatpush1.bf16.msra.mxu0 0
        %585 = vmatprep.subr.bf16.mxu0 0
        %586 = vmatpush1.bf16.msra.mxu0 0
        %587 = vmatprep.subr.bf16.mxu0 0
        %588 = vmatpush1.bf16.msra.mxu0 0
        %589 = vmatprep.subr.bf16.mxu0 0
        %590 = vmatpush1.bf16.msra.mxu0 0
        %591 = vmatprep.subr.bf16.mxu0 0
        %592 = vmatpush1.bf16.msra.mxu0 0
        %593 = vmatprep.subr.bf16.mxu0 0
        %594 = vmatpush1.bf16.msra.mxu0 0
        %595 = vmatprep.subr.bf16.mxu0 0
        %596 = vmatpush1.bf16.msra.mxu0 0
        %597 = vmatprep.subr.bf16.mxu0 0
        %598 = vmatpush1.bf16.msra.mxu0 0
        %599 = vmatprep.subr.bf16.mxu0 0
        %600 = vmatpush1.bf16.msra.mxu0 0
        %601 = vmatprep.subr.bf16.mxu0 0
        %602 = vmatpush1.bf16.msra.mxu0 0
        %603 = vmatprep.subr.bf16.mxu0 0
        %604 = vmatpush1.bf16.msra.mxu0 0
        %605 = vmatprep.subr.bf16.mxu0 0
        %606 = vmatpush1.bf16.msra.mxu0 0
        %607 = vmatprep.subr.bf16.mxu0 0
        %608 = vmatpush1.bf16.msra.mxu0 0
        %609 = vmatprep.subr.bf16.mxu0 0
        %610 = vmatpush1.bf16.msra.mxu0 0
        %611 = vmatprep.mubr.bf16.mxu0 0
        %612 = vmatmul.mubr.bf16.gmra.mrb[0].mxu0 %v577
        %v613 = vpop.f32.mrb[0].mxu0
        %v614 = vadd.f32 %v574, %v613
        %v615 = vpop.f32.mrb[0].mxu0
        %v616 = vpop.f32.mrb[0].mxu0
        %v617 = vpop.f32.mrb[0].mxu0
        %618 = vdwg.mxu0
        %v619 = vmul.f32 %v614, 0.35355338
        %v620 = vld [vmem:[%s5] sm:$0x1]
        %v622 = vlaneseq
        %v623 = vshrl.u32 %v622, 7
        %v624 = vsub.s32 0, %v623
        %v625 = vrot.slane %v620, %v624
        %v627 = vadd.f32 %v625, 0.0
        %629 = vrot.lane.b32.xlu0 %v614, 96
        %v630 = vpop.permute.xlu0 %629
        %vm631 = vcmask 64512
        %v633 = vsel %vm631, %v619, 0
        %v635 = vsel %vm631, %v630, 0
        %637 = vmatprep.subr.mxu0 0.0
        %638 = vmatpush1.xpose.msra.mxu0 %v635
        %639 = vmatprep.subr.mxu0 0.0
        %640 = vmatpush1.xpose.msra.mxu0 0.0
        %641 = vmatprep.subr.mxu0 0.0
        %642 = vmatpush1.xpose.msra.mxu0 0.0
        %643 = vmatprep.subr.mxu0 0.0
        %644 = vmatpush1.xpose.msra.mxu0 0.0
        %645 = vmatprep.subr.mxu0 0.0
        %646 = vmatpush1.xpose.msra.mxu0 0.0
        %647 = vmatprep.subr.mxu0 0.0
        %648 = vmatpush1.xpose.msra.mxu0 0.0
        %649 = vmatprep.subr.mxu0 0.0
        %650 = vmatpush1.xpose.msra.mxu0 0.0
        %651 = vmatprep.subr.mxu0 0.0
        %652 = vmatpush1.xpose.msra.mxu0 0.0
        %653 = vmatprep.subr.mxu0 0.0
        %654 = vmatpush1.xpose.msra.mxu0 0.0
        %655 = vmatprep.subr.mxu0 0.0
        %656 = vmatpush1.xpose.msra.mxu0 0.0
        %657 = vmatprep.subr.mxu0 0.0
        %658 = vmatpush1.xpose.msra.mxu0 0.0
        %659 = vmatprep.subr.mxu0 0.0
        %660 = vmatpush1.xpose.msra.mxu0 0.0
        %661 = vmatprep.subr.mxu0 0.0
        %662 = vmatpush1.xpose.msra.mxu0 0.0
        %663 = vmatprep.subr.mxu0 0.0
        %664 = vmatpush1.xpose.msra.mxu0 0.0
        %665 = vmatprep.subr.mxu0 0.0
        %666 = vmatpush1.xpose.msra.mxu0 0.0
        %667 = vmatprep.subr.mxu0 0.0
        %668 = vmatpush1.xpose.msra.mxu0 0.0
        %669 = vmatprep.subr.mxu0 0.0
        %670 = vmatpush1.xpose.msra.mxu0 0.0
        %671 = vmatprep.subr.mxu0 0.0
        %672 = vmatpush1.xpose.msra.mxu0 0.0
        %673 = vmatprep.subr.mxu0 0.0
        %674 = vmatpush1.xpose.msra.mxu0 0.0
        %675 = vmatprep.subr.mxu0 0.0
        %676 = vmatpush1.xpose.msra.mxu0 0.0
        %677 = vmatprep.subr.mxu0 0.0
        %678 = vmatpush1.xpose.msra.mxu0 0.0
        %679 = vmatprep.subr.mxu0 0.0
        %680 = vmatpush1.xpose.msra.mxu0 0.0
        %681 = vmatprep.subr.mxu0 0.0
        %682 = vmatpush1.xpose.msra.mxu0 0.0
        %683 = vmatprep.subr.mxu0 0.0
        %684 = vmatpush1.xpose.msra.mxu0 0.0
        %685 = vmatprep.subr.mxu0 0.0
        %686 = vmatpush1.xpose.msra.mxu0 0.0
        %687 = vmatprep.subr.mxu0 0.0
        %688 = vmatpush1.xpose.msra.mxu0 0.0
        %689 = vmatprep.subr.mxu0 0.0
        %690 = vmatpush1.xpose.msra.mxu0 0.0
        %691 = vmatprep.subr.mxu0 0.0
        %692 = vmatpush1.xpose.msra.mxu0 0.0
        %693 = vmatprep.subr.mxu0 0.0
        %694 = vmatpush1.xpose.msra.mxu0 0.0
        %695 = vmatprep.subr.mxu0 0.0
        %696 = vmatpush1.xpose.msra.mxu0 0.0
        %697 = vmatprep.subr.mxu0 0.0
        %698 = vmatpush1.xpose.msra.mxu0 0.0
        %699 = vmatprep.subr.mxu0 0.0
        %700 = vmatpush1.xpose.msra.mxu0 0.0
        %701 = vmatprep.mubr.f32.mxu0 0.0
        %702 = vmatmul.mubr.f32.gmra.mrb[0].mxu0 %v633
        %v703 = vpop.f32.mrb[0].mxu0
        %v704 = vadd.f32 %v530, %v703
        %v705 = vpop.f32.mrb[0].mxu0
        %706 = vdwg.mxu0
        %v707 = vsel %vm631, %v704, -inf
        %708 = vmax.xlane.f32.xlu0 %v707
        %v709 = vpop.xlane.xlu0 %708
        %v710 = vsub.f32 %v704, %v709
        %v711 = vmul.f32 %v710, 1.442695
        %v712 = vpow.pop %v711
        %v713 = vsel %vm631, %v712, 0.0
        %714 = vadd.xlane.f32.xlu0 %v713
        %v715 = vpop.xlane.xlu0 %714
        %v716 = vrcp.pop %v715
        %v717 = vmul.f32 %v712, %v716
        %718 = vrot.lane.b32.xlu0 %v614, 64
        %v719 = vpop.permute.xlu0 %718
        %v722 = vsel %vm631, %v717, 0
        %724 = vmatprep.subr.mxu0 0.0
        %725 = vmatpush1.msra.mxu0 %v719
        %726 = vmatprep.subr.mxu0 0.0
        %727 = vmatpush1.msra.mxu0 0.0
        %728 = vmatprep.subr.mxu0 0.0
        %729 = vmatpush1.msra.mxu0 0.0
        %730 = vmatprep.subr.mxu0 0.0
        %731 = vmatpush1.msra.mxu0 0.0
        %732 = vmatprep.subr.mxu0 0.0
        %733 = vmatpush1.msra.mxu0 0.0
        %734 = vmatprep.subr.mxu0 0.0
        %735 = vmatpush1.msra.mxu0 0.0
        %736 = vmatprep.subr.mxu0 0.0
        %737 = vmatpush1.msra.mxu0 0.0
        %738 = vmatprep.subr.mxu0 0.0
        %739 = vmatpush1.msra.mxu0 0.0
        %740 = vmatprep.subr.mxu0 0.0
        %741 = vmatpush1.msra.mxu0 0.0
        %742 = vmatprep.subr.mxu0 0.0
        %743 = vmatpush1.msra.mxu0 0.0
        %744 = vmatprep.subr.mxu0 0.0
        %745 = vmatpush1.msra.mxu0 0.0
        %746 = vmatprep.subr.mxu0 0.0
        %747 = vmatpush1.msra.mxu0 0.0
        %748 = vmatprep.subr.mxu0 0.0
        %749 = vmatpush1.msra.mxu0 0.0
        %750 = vmatprep.subr.mxu0 0.0
        %751 = vmatpush1.msra.mxu0 0.0
        %752 = vmatprep.subr.mxu0 0.0
        %753 = vmatpush1.msra.mxu0 0.0
        %754 = vmatprep.subr.mxu0 0.0
        %755 = vmatpush1.msra.mxu0 0.0
        %756 = vmatprep.subr.mxu0 0.0
        %757 = vmatpush1.msra.mxu0 0.0
        %758 = vmatprep.subr.mxu0 0.0
        %759 = vmatpush1.msra.mxu0 0.0
        %760 = vmatprep.subr.mxu0 0.0
        %761 = vmatpush1.msra.mxu0 0.0
        %762 = vmatprep.subr.mxu0 0.0
        %763 = vmatpush1.msra.mxu0 0.0
        %764 = vmatprep.subr.mxu0 0.0
        %765 = vmatpush1.msra.mxu0 0.0
        %766 = vmatprep.subr.mxu0 0.0
        %767 = vmatpush1.msra.mxu0 0.0
        %768 = vmatprep.subr.mxu0 0.0
        %769 = vmatpush1.msra.mxu0 0.0
        %770 = vmatprep.subr.mxu0 0.0
        %771 = vmatpush1.msra.mxu0 0.0
        %772 = vmatprep.subr.mxu0 0.0
        %773 = vmatpush1.msra.mxu0 0.0
        %774 = vmatprep.subr.mxu0 0.0
        %775 = vmatpush1.msra.mxu0 0.0
        %776 = vmatprep.subr.mxu0 0.0
        %777 = vmatpush1.msra.mxu0 0.0
        %778 = vmatprep.subr.mxu0 0.0
        %779 = vmatpush1.msra.mxu0 0.0
        %780 = vmatprep.subr.mxu0 0.0
        %781 = vmatpush1.msra.mxu0 0.0
        %782 = vmatprep.subr.mxu0 0.0
        %783 = vmatpush1.msra.mxu0 0.0
        %784 = vmatprep.subr.mxu0 0.0
        %785 = vmatpush1.msra.mxu0 0.0
        %786 = vmatprep.subr.mxu0 0.0
        %787 = vmatpush1.msra.mxu0 0.0
        %788 = vmatprep.mubr.f32.mxu0 0.0
        %789 = vmatmul.mubr.f32.gmra.mrb[0].mxu0 %v722
        %v790 = vpop.f32.mrb[0].mxu0
        %v791 = vadd.f32 0.0, %v790
        %v792 = vpop.f32.mrb[0].mxu0
        %793 = vdwg.mxu0
        %v794 = vld [vmem:[%s4] sm:$0xff]
        %v795 = vld [vmem:[%s4 + $0x8] sm:$0xff]
        %v796 = vld [vmem:[%s4 + $0x10] sm:$0xff]
        %v797 = vld [vmem:[%s4 + $0x18] sm:$0xff]
        %v798 = vpack.c.bf16 %v791, %v791
        %v799 = vpack.c.bf16 %v794, %v794
        %v801 = vsel %vm631, %v798, 0
        %vm803 = vcmask 1043456
        %v805 = vsel %vm803, %v799, 0
        %807 = vmatprep.subr.bf16.mxu0 0
        %808 = vmatpush1.bf16.msra.mxu0 %v805
        %809 = vmatprep.subr.bf16.mxu0 0
        %810 = vmatpush1.bf16.msra.mxu0 0
        %811 = vmatprep.subr.bf16.mxu0 0
        %812 = vmatpush1.bf16.msra.mxu0 0
        %813 = vmatprep.subr.bf16.mxu0 0
        %814 = vmatpush1.bf16.msra.mxu0 0
        %815 = vmatprep.subr.bf16.mxu0 0
        %816 = vmatpush1.bf16.msra.mxu0 0
        %817 = vmatprep.subr.bf16.mxu0 0
        %818 = vmatpush1.bf16.msra.mxu0 0
        %819 = vmatprep.subr.bf16.mxu0 0
        %820 = vmatpush1.bf16.msra.mxu0 0
        %821 = vmatprep.subr.bf16.mxu0 0
        %822 = vmatpush1.bf16.msra.mxu0 0
        %823 = vmatprep.subr.bf16.mxu0 0
        %824 = vmatpush1.bf16.msra.mxu0 0
        %825 = vmatprep.subr.bf16.mxu0 0
        %826 = vmatpush1.bf16.msra.mxu0 0
        %827 = vmatprep.subr.bf16.mxu0 0
        %828 = vmatpush1.bf16.msra.mxu0 0
        %829 = vmatprep.subr.bf16.mxu0 0
        %830 = vmatpush1.bf16.msra.mxu0 0
        %831 = vmatprep.subr.bf16.mxu0 0
        %832 = vmatpush1.bf16.msra.mxu0 0
        %833 = vmatprep.subr.bf16.mxu0 0
        %834 = vmatpush1.bf16.msra.mxu0 0
        %835 = vmatprep.subr.bf16.mxu0 0
        %836 = vmatpush1.bf16.msra.mxu0 0
        %837 = vmatprep.subr.bf16.mxu0 0
        %838 = vmatpush1.bf16.msra.mxu0 0
        %839 = vmatprep.mubr.bf16.mxu0 0
        %840 = vmatmul.mubr.bf16.gmra.mrb[0].mxu0 %v801
        %v841 = vpop.f32.mrb[0].mxu0
        %v842 = vadd.f32 0.0, %v841
        %v843 = vpop.f32.mrb[0].mxu0
        %v844 = vpop.f32.mrb[0].mxu0
        %v845 = vpop.f32.mrb[0].mxu0
        %846 = vdwg.mxu0
        %v847 = vadd.f32 %v627, %v842
        %848 = vrot.lane.b32.xlu0 %v619, 120
        %v849 = vpop.permute.xlu0 %848
        %850 = vrot.lane.b32.xlu0 %v614, 88
        %v851 = vpop.permute.xlu0 %850
        %v852 = vsel %vm631, %v849, 0
        %v854 = vsel %vm631, %v851, 0
        %856 = vmatprep.subr.mxu0 0.0
        %857 = vmatpush1.xpose.msra.mxu0 %v854
        %858 = vmatprep.subr.mxu0 0.0
        %859 = vmatpush1.xpose.msra.mxu0 0.0
        %860 = vmatprep.subr.mxu0 0.0
        %861 = vmatpush1.xpose.msra.mxu0 0.0
        %862 = vmatprep.subr.mxu0 0.0
        %863 = vmatpush1.xpose.msra.mxu0 0.0
        %864 = vmatprep.subr.mxu0 0.0
        %865 = vmatpush1.xpose.msra.mxu0 0.0
        %866 = vmatprep.subr.mxu0 0.0
        %867 = vmatpush1.xpose.msra.mxu0 0.0
        %868 = vmatprep.subr.mxu0 0.0
        %869 = vmatpush1.xpose.msra.mxu0 0.0
        %870 = vmatprep.subr.mxu0 0.0
        %871 = vmatpush1.xpose.msra.mxu0 0.0
        %872 = vmatprep.subr.mxu0 0.0
        %873 = vmatpush1.xpose.msra.mxu0 0.0
        %874 = vmatprep.subr.mxu0 0.0
        %875 = vmatpush1.xpose.msra.mxu0 0.0
        %876 = vmatprep.subr.mxu0 0.0
        %877 = vmatpush1.xpose.msra.mxu0 0.0
        %878 = vmatprep.subr.mxu0 0.0
        %879 = vmatpush1.xpose.msra.mxu0 0.0
        %880 = vmatprep.subr.mxu0 0.0
        %881 = vmatpush1.xpose.msra.mxu0 0.0
        %882 = vmatprep.subr.mxu0 0.0
        %883 = vmatpush1.xpose.msra.mxu0 0.0
        %884 = vmatprep.subr.mxu0 0.0
        %885 = vmatpush1.xpose.msra.mxu0 0.0
        %886 = vmatprep.subr.mxu0 0.0
        %887 = vmatpush1.xpose.msra.mxu0 0.0
        %888 = vmatprep.subr.mxu0 0.0
        %889 = vmatpush1.xpose.msra.mxu0 0.0
        %890 = vmatprep.subr.mxu0 0.0
        %891 = vmatpush1.xpose.msra.mxu0 0.0
        %892 = vmatprep.subr.mxu0 0.0
        %893 = vmatpush1.xpose.msra.mxu0 0.0
        %894 = vmatprep.subr.mxu0 0.0
        %895 = vmatpush1.xpose.msra.mxu0 0.0
        %896 = vmatprep.subr.mxu0 0.0
        %897 = vmatpush1.xpose.msra.mxu0 0.0
        %898 = vmatprep.subr.mxu0 0.0
        %899 = vmatpush1.xpose.msra.mxu0 0.0
        %900 = vmatprep.subr.mxu0 0.0
        %901 = vmatpush1.xpose.msra.mxu0 0.0
        %902 = vmatprep.subr.mxu0 0.0
        %903 = vmatpush1.xpose.msra.mxu0 0.0
        %904 = vmatprep.subr.mxu0 0.0
        %905 = vmatpush1.xpose.msra.mxu0 0.0
        %906 = vmatprep.subr.mxu0 0.0
        %907 = vmatpush1.xpose.msra.mxu0 0.0
        %908 = vmatprep.subr.mxu0 0.0
        %909 = vmatpush1.xpose.msra.mxu0 0.0
        %910 = vmatprep.subr.mxu0 0.0
        %911 = vmatpush1.xpose.msra.mxu0 0.0
        %912 = vmatprep.subr.mxu0 0.0
        %913 = vmatpush1.xpose.msra.mxu0 0.0
        %914 = vmatprep.subr.mxu0 0.0
        %915 = vmatpush1.xpose.msra.mxu0 0.0
        %916 = vmatprep.subr.mxu0 0.0
        %917 = vmatpush1.xpose.msra.mxu0 0.0
        %918 = vmatprep.subr.mxu0 0.0
        %919 = vmatpush1.xpose.msra.mxu0 0.0
        %920 = vmatprep.mubr.f32.mxu0 0.0
        %921 = vmatmul.mubr.f32.gmra.mrb[0].mxu0 %v852
        %v922 = vpop.f32.mrb[0].mxu0
        %v923 = vadd.f32 %v530, %v922
        %v924 = vpop.f32.mrb[0].mxu0
        %925 = vdwg.mxu0
        %v926 = vsel %vm631, %v923, -inf
        %927 = vmax.xlane.f32.xlu0 %v926
        %v928 = vpop.xlane.xlu0 %927
        %v929 = vsub.f32 %v923, %v928
        %v930 = vmul.f32 %v929, 1.442695
        %v931 = vpow.pop %v930
        %v932 = vsel %vm631, %v931, 0.0
        %933 = vadd.xlane.f32.xlu0 %v932
        %v934 = vpop.xlane.xlu0 %933
        %v935 = vrcp.pop %v934
        %v936 = vmul.f32 %v931, %v935
        %937 = vrot.lane.b32.xlu0 %v614, 56
        %v938 = vpop.permute.xlu0 %937
        %v941 = vsel %vm631, %v936, 0
        %943 = vmatprep.subr.mxu0 0.0
        %944 = vmatpush1.msra.mxu0 %v938
        %945 = vmatprep.subr.mxu0 0.0
        %946 = vmatpush1.msra.mxu0 0.0
        %947 = vmatprep.subr.mxu0 0.0
        %948 = vmatpush1.msra.mxu0 0.0
        %949 = vmatprep.subr.mxu0 0.0
        %950 = vmatpush1.msra.mxu0 0.0
        %951 = vmatprep.subr.mxu0 0.0
        %952 = vmatpush1.msra.mxu0 0.0
        %953 = vmatprep.subr.mxu0 0.0
        %954 = vmatpush1.msra.mxu0 0.0
        %955 = vmatprep.subr.mxu0 0.0
        %956 = vmatpush1.msra.mxu0 0.0
        %957 = vmatprep.subr.mxu0 0.0
        %958 = vmatpush1.msra.mxu0 0.0
        %959 = vmatprep.subr.mxu0 0.0
        %960 = vmatpush1.msra.mxu0 0.0
        %961 = vmatprep.subr.mxu0 0.0
        %962 = vmatpush1.msra.mxu0 0.0
        %963 = vmatprep.subr.mxu0 0.0
        %964 = vmatpush1.msra.mxu0 0.0
        %965 = vmatprep.subr.mxu0 0.0
        %966 = vmatpush1.msra.mxu0 0.0
        %967 = vmatprep.subr.mxu0 0.0
        %968 = vmatpush1.msra.mxu0 0.0
        %969 = vmatprep.subr.mxu0 0.0
        %970 = vmatpush1.msra.mxu0 0.0
        %971 = vmatprep.subr.mxu0 0.0
        %972 = vmatpush1.msra.mxu0 0.0
        %973 = vmatprep.subr.mxu0 0.0
        %974 = vmatpush1.msra.mxu0 0.0
        %975 = vmatprep.subr.mxu0 0.0
        %976 = vmatpush1.msra.mxu0 0.0
        %977 = vmatprep.subr.mxu0 0.0
        %978 = vmatpush1.msra.mxu0 0.0
        %979 = vmatprep.subr.mxu0 0.0
        %980 = vmatpush1.msra.mxu0 0.0
        %981 = vmatprep.subr.mxu0 0.0
        %982 = vmatpush1.msra.mxu0 0.0
        %983 = vmatprep.subr.mxu0 0.0
        %984 = vmatpush1.msra.mxu0 0.0
        %985 = vmatprep.subr.mxu0 0.0
        %986 = vmatpush1.msra.mxu0 0.0
        %987 = vmatprep.subr.mxu0 0.0
        %988 = vmatpush1.msra.mxu0 0.0
        %989 = vmatprep.subr.mxu0 0.0
        %990 = vmatpush1.msra.mxu0 0.0
        %991 = vmatprep.subr.mxu0 0.0
        %992 = vmatpush1.msra.mxu0 0.0
        %993 = vmatprep.subr.mxu0 0.0
        %994 = vmatpush1.msra.mxu0 0.0
        %995 = vmatprep.subr.mxu0 0.0
        %996 = vmatpush1.msra.mxu0 0.0
        %997 = vmatprep.subr.mxu0 0.0
        %998 = vmatpush1.msra.mxu0 0.0
        %999 = vmatprep.subr.mxu0 0.0
        %1000 = vmatpush1.msra.mxu0 0.0
        %1001 = vmatprep.subr.mxu0 0.0
        %1002 = vmatpush1.msra.mxu0 0.0
        %1003 = vmatprep.subr.mxu0 0.0
        %1004 = vmatpush1.msra.mxu0 0.0
        %1005 = vmatprep.subr.mxu0 0.0
        %1006 = vmatpush1.msra.mxu0 0.0
        %1007 = vmatprep.mubr.f32.mxu0 0.0
        %1008 = vmatmul.mubr.f32.gmra.mrb[0].mxu0 %v941
        %v1009 = vpop.f32.mrb[0].mxu0
        %v1010 = vadd.f32 0.0, %v1009
        %v1011 = vpop.f32.mrb[0].mxu0
        %1012 = vdwg.mxu0
        %v1013 = vpack.c.bf16 %v1010, %v1010
        %v1014 = vpack.c.bf16 %v795, %v795
        %v1016 = vsel %vm631, %v1013, 0
        %v1019 = vsel %vm803, %v1014, 0
        %1021 = vmatprep.subr.bf16.mxu0 0
        %1022 = vmatpush1.bf16.msra.mxu0 %v1019
        %1023 = vmatprep.subr.bf16.mxu0 0
        %1024 = vmatpush1.bf16.msra.mxu0 0
        %1025 = vmatprep.subr.bf16.mxu0 0
        %1026 = vmatpush1.bf16.msra.mxu0 0
        %1027 = vmatprep.subr.bf16.mxu0 0
        %1028 = vmatpush1.bf16.msra.mxu0 0
        %1029 = vmatprep.subr.bf16.mxu0 0
        %1030 = vmatpush1.bf16.msra.mxu0 0
        %1031 = vmatprep.subr.bf16.mxu0 0
        %1032 = vmatpush1.bf16.msra.mxu0 0
        %1033 = vmatprep.subr.bf16.mxu0 0
        %1034 = vmatpush1.bf16.msra.mxu0 0
        %1035 = vmatprep.subr.bf16.mxu0 0
        %1036 = vmatpush1.bf16.msra.mxu0 0
        %1037 = vmatprep.subr.bf16.mxu0 0
        %1038 = vmatpush1.bf16.msra.mxu0 0
        %1039 = vmatprep.subr.bf16.mxu0 0
        %1040 = vmatpush1.bf16.msra.mxu0 0
        %1041 = vmatprep.subr.bf16.mxu0 0
        %1042 = vmatpush1.bf16.msra.mxu0 0
        %1043 = vmatprep.subr.bf16.mxu0 0
        %1044 = vmatpush1.bf16.msra.mxu0 0
        %1045 = vmatprep.subr.bf16.mxu0 0
        %1046 = vmatpush1.bf16.msra.mxu0 0
        %1047 = vmatprep.subr.bf16.mxu0 0
        %1048 = vmatpush1.bf16.msra.mxu0 0
        %1049 = vmatprep.subr.bf16.mxu0 0
        %1050 = vmatpush1.bf16.msra.mxu0 0
        %1051 = vmatprep.subr.bf16.mxu0 0
        %1052 = vmatpush1.bf16.msra.mxu0 0
        %1053 = vmatprep.mubr.bf16.mxu0 0
        %1054 = vmatmul.mubr.bf16.gmra.mrb[0].mxu0 %v1016
        %v1055 = vpop.f32.mrb[0].mxu0
        %v1056 = vadd.f32 0.0, %v1055
        %v1057 = vpop.f32.mrb[0].mxu0
        %v1058 = vpop.f32.mrb[0].mxu0
        %v1059 = vpop.f32.mrb[0].mxu0
        %1060 = vdwg.mxu0
        %v1061 = vadd.f32 %v847, %v1056
        %1062 = vrot.lane.b32.xlu0 %v619, 112
        %v1063 = vpop.permute.xlu0 %1062
        %1064 = vrot.lane.b32.xlu0 %v614, 80
        %v1065 = vpop.permute.xlu0 %1064
        %v1066 = vsel %vm631, %v1063, 0
        %v1068 = vsel %vm631, %v1065, 0
        %1070 = vmatprep.subr.mxu0 0.0
        %1071 = vmatpush1.xpose.msra.mxu0 %v1068
        %1072 = vmatprep.subr.mxu0 0.0
        %1073 = vmatpush1.xpose.msra.mxu0 0.0
        %1074 = vmatprep.subr.mxu0 0.0
        %1075 = vmatpush1.xpose.msra.mxu0 0.0
        %1076 = vmatprep.subr.mxu0 0.0
        %1077 = vmatpush1.xpose.msra.mxu0 0.0
        %1078 = vmatprep.subr.mxu0 0.0
        %1079 = vmatpush1.xpose.msra.mxu0 0.0
        %1080 = vmatprep.subr.mxu0 0.0
        %1081 = vmatpush1.xpose.msra.mxu0 0.0
        %1082 = vmatprep.subr.mxu0 0.0
        %1083 = vmatpush1.xpose.msra.mxu0 0.0
        %1084 = vmatprep.subr.mxu0 0.0
        %1085 = vmatpush1.xpose.msra.mxu0 0.0
        %1086 = vmatprep.subr.mxu0 0.0
        %1087 = vmatpush1.xpose.msra.mxu0 0.0
        %1088 = vmatprep.subr.mxu0 0.0
        %1089 = vmatpush1.xpose.msra.mxu0 0.0
        %1090 = vmatprep.subr.mxu0 0.0
        %1091 = vmatpush1.xpose.msra.mxu0 0.0
        %1092 = vmatprep.subr.mxu0 0.0
        %1093 = vmatpush1.xpose.msra.mxu0 0.0
        %1094 = vmatprep.subr.mxu0 0.0
        %1095 = vmatpush1.xpose.msra.mxu0 0.0
        %1096 = vmatprep.subr.mxu0 0.0
        %1097 = vmatpush1.xpose.msra.mxu0 0.0
        %1098 = vmatprep.subr.mxu0 0.0
        %1099 = vmatpush1.xpose.msra.mxu0 0.0
        %1100 = vmatprep.subr.mxu0 0.0
        %1101 = vmatpush1.xpose.msra.mxu0 0.0
        %1102 = vmatprep.subr.mxu0 0.0
        %1103 = vmatpush1.xpose.msra.mxu0 0.0
        %1104 = vmatprep.subr.mxu0 0.0
        %1105 = vmatpush1.xpose.msra.mxu0 0.0
        %1106 = vmatprep.subr.mxu0 0.0
        %1107 = vmatpush1.xpose.msra.mxu0 0.0
        %1108 = vmatprep.subr.mxu0 0.0
        %1109 = vmatpush1.xpose.msra.mxu0 0.0
        %1110 = vmatprep.subr.mxu0 0.0
        %1111 = vmatpush1.xpose.msra.mxu0 0.0
        %1112 = vmatprep.subr.mxu0 0.0
        %1113 = vmatpush1.xpose.msra.mxu0 0.0
        %1114 = vmatprep.subr.mxu0 0.0
        %1115 = vmatpush1.xpose.msra.mxu0 0.0
        %1116 = vmatprep.subr.mxu0 0.0
        %1117 = vmatpush1.xpose.msra.mxu0 0.0
        %1118 = vmatprep.subr.mxu0 0.0
        %1119 = vmatpush1.xpose.msra.mxu0 0.0
        %1120 = vmatprep.subr.mxu0 0.0
        %1121 = vmatpush1.xpose.msra.mxu0 0.0
        %1122 = vmatprep.subr.mxu0 0.0
        %1123 = vmatpush1.xpose.msra.mxu0 0.0
        %1124 = vmatprep.subr.mxu0 0.0
        %1125 = vmatpush1.xpose.msra.mxu0 0.0
        %1126 = vmatprep.subr.mxu0 0.0
        %1127 = vmatpush1.xpose.msra.mxu0 0.0
        %1128 = vmatprep.subr.mxu0 0.0
        %1129 = vmatpush1.xpose.msra.mxu0 0.0
        %1130 = vmatprep.subr.mxu0 0.0
        %1131 = vmatpush1.xpose.msra.mxu0 0.0
        %1132 = vmatprep.subr.mxu0 0.0
        %1133 = vmatpush1.xpose.msra.mxu0 0.0
        %1134 = vmatprep.mubr.f32.mxu0 0.0
        %1135 = vmatmul.mubr.f32.gmra.mrb[0].mxu0 %v1066
        %v1136 = vpop.f32.mrb[0].mxu0
        %v1137 = vadd.f32 %v530, %v1136
        %v1138 = vpop.f32.mrb[0].mxu0
        %1139 = vdwg.mxu0
        %v1140 = vsel %vm631, %v1137, -inf
        %1141 = vmax.xlane.f32.xlu0 %v1140
        %v1142 = vpop.xlane.xlu0 %1141
        %v1143 = vsub.f32 %v1137, %v1142
        %v1144 = vmul.f32 %v1143, 1.442695
        %v1145 = vpow.pop %v1144
        %v1146 = vsel %vm631, %v1145, 0.0
        %1147 = vadd.xlane.f32.xlu0 %v1146
        %v1148 = vpop.xlane.xlu0 %1147
        %v1149 = vrcp.pop %v1148
        %v1150 = vmul.f32 %v1145, %v1149
        %1151 = vrot.lane.b32.xlu0 %v614, 48
        %v1152 = vpop.permute.xlu0 %1151
        %v1155 = vsel %vm631, %v1150, 0
        %1157 = vmatprep.subr.mxu0 0.0
        %1158 = vmatpush1.msra.mxu0 %v1152
        %1159 = vmatprep.subr.mxu0 0.0
        %1160 = vmatpush1.msra.mxu0 0.0
        %1161 = vmatprep.subr.mxu0 0.0
        %1162 = vmatpush1.msra.mxu0 0.0
        %1163 = vmatprep.subr.mxu0 0.0
        %1164 = vmatpush1.msra.mxu0 0.0
        %1165 = vmatprep.subr.mxu0 0.0
        %1166 = vmatpush1.msra.mxu0 0.0
        %1167 = vmatprep.subr.mxu0 0.0
        %1168 = vmatpush1.msra.mxu0 0.0
        %1169 = vmatprep.subr.mxu0 0.0
        %1170 = vmatpush1.msra.mxu0 0.0
        %1171 = vmatprep.subr.mxu0 0.0
        %1172 = vmatpush1.msra.mxu0 0.0
        %1173 = vmatprep.subr.mxu0 0.0
        %1174 = vmatpush1.msra.mxu0 0.0
        %1175 = vmatprep.subr.mxu0 0.0
        %1176 = vmatpush1.msra.mxu0 0.0
        %1177 = vmatprep.subr.mxu0 0.0
        %1178 = vmatpush1.msra.mxu0 0.0
        %1179 = vmatprep.subr.mxu0 0.0
        %1180 = vmatpush1.msra.mxu0 0.0
        %1181 = vmatprep.subr.mxu0 0.0
        %1182 = vmatpush1.msra.mxu0 0.0
        %1183 = vmatprep.subr.mxu0 0.0
        %1184 = vmatpush1.msra.mxu0 0.0
        %1185 = vmatprep.subr.mxu0 0.0
        %1186 = vmatpush1.msra.mxu0 0.0
        %1187 = vmatprep.subr.mxu0 0.0
        %1188 = vmatpush1.msra.mxu0 0.0
        %1189 = vmatprep.subr.mxu0 0.0
        %1190 = vmatpush1.msra.mxu0 0.0
        %1191 = vmatprep.subr.mxu0 0.0
        %1192 = vmatpush1.msra.mxu0 0.0
        %1193 = vmatprep.subr.mxu0 0.0
        %1194 = vmatpush1.msra.mxu0 0.0
        %1195 = vmatprep.subr.mxu0 0.0
        %1196 = vmatpush1.msra.mxu0 0.0
        %1197 = vmatprep.subr.mxu0 0.0
        %1198 = vmatpush1.msra.mxu0 0.0
        %1199 = vmatprep.subr.mxu0 0.0
        %1200 = vmatpush1.msra.mxu0 0.0
        %1201 = vmatprep.subr.mxu0 0.0
        %1202 = vmatpush1.msra.mxu0 0.0
        %1203 = vmatprep.subr.mxu0 0.0
        %1204 = vmatpush1.msra.mxu0 0.0
        %1205 = vmatprep.subr.mxu0 0.0
        %1206 = vmatpush1.msra.mxu0 0.0
        %1207 = vmatprep.subr.mxu0 0.0
        %1208 = vmatpush1.msra.mxu0 0.0
        %1209 = vmatprep.subr.mxu0 0.0
        %1210 = vmatpush1.msra.mxu0 0.0
        %1211 = vmatprep.subr.mxu0 0.0
        %1212 = vmatpush1.msra.mxu0 0.0
        %1213 = vmatprep.subr.mxu0 0.0
        %1214 = vmatpush1.msra.mxu0 0.0
        %1215 = vmatprep.subr.mxu0 0.0
        %1216 = vmatpush1.msra.mxu0 0.0
        %1217 = vmatprep.subr.mxu0 0.0
        %1218 = vmatpush1.msra.mxu0 0.0
        %1219 = vmatprep.subr.mxu0 0.0
        %1220 = vmatpush1.msra.mxu0 0.0
        %1221 = vmatprep.mubr.f32.mxu0 0.0
        %1222 = vmatmul.mubr.f32.gmra.mrb[0].mxu0 %v1155
        %v1223 = vpop.f32.mrb[0].mxu0
        %v1224 = vadd.f32 0.0, %v1223
        %v1225 = vpop.f32.mrb[0].mxu0
        %1226 = vdwg.mxu0
        %v1227 = vpack.c.bf16 %v1224, %v1224
        %v1228 = vpack.c.bf16 %v796, %v796
        %v1230 = vsel %vm631, %v1227, 0
        %v1233 = vsel %vm803, %v1228, 0
        %1235 = vmatprep.subr.bf16.mxu0 0
        %1236 = vmatpush1.bf16.msra.mxu0 %v1233
        %1237 = vmatprep.subr.bf16.mxu0 0
        %1238 = vmatpush1.bf16.msra.mxu0 0
        %1239 = vmatprep.subr.bf16.mxu0 0
        %1240 = vmatpush1.bf16.msra.mxu0 0
        %1241 = vmatprep.subr.bf16.mxu0 0
        %1242 = vmatpush1.bf16.msra.mxu0 0
        %1243 = vmatprep.subr.bf16.mxu0 0
        %1244 = vmatpush1.bf16.msra.mxu0 0
        %1245 = vmatprep.subr.bf16.mxu0 0
        %1246 = vmatpush1.bf16.msra.mxu0 0
        %1247 = vmatprep.subr.bf16.mxu0 0
        %1248 = vmatpush1.bf16.msra.mxu0 0
        %1249 = vmatprep.subr.bf16.mxu0 0
        %1250 = vmatpush1.bf16.msra.mxu0 0
        %1251 = vmatprep.subr.bf16.mxu0 0
        %1252 = vmatpush1.bf16.msra.mxu0 0
        %1253 = vmatprep.subr.bf16.mxu0 0
        %1254 = vmatpush1.bf16.msra.mxu0 0
        %1255 = vmatprep.subr.bf16.mxu0 0
        %1256 = vmatpush1.bf16.msra.mxu0 0
        %1257 = vmatprep.subr.bf16.mxu0 0
        %1258 = vmatpush1.bf16.msra.mxu0 0
        %1259 = vmatprep.subr.bf16.mxu0 0
        %1260 = vmatpush1.bf16.msra.mxu0 0
        %1261 = vmatprep.subr.bf16.mxu0 0
        %1262 = vmatpush1.bf16.msra.mxu0 0
        %1263 = vmatprep.subr.bf16.mxu0 0
        %1264 = vmatpush1.bf16.msra.mxu0 0
        %1265 = vmatprep.subr.bf16.mxu0 0
        %1266 = vmatpush1.bf16.msra.mxu0 0
        %1267 = vmatprep.mubr.bf16.mxu0 0
        %1268 = vmatmul.mubr.bf16.gmra.mrb[0].mxu0 %v1230
        %v1269 = vpop.f32.mrb[0].mxu0
        %v1270 = vadd.f32 0.0, %v1269
        %v1271 = vpop.f32.mrb[0].mxu0
        %v1272 = vpop.f32.mrb[0].mxu0
        %v1273 = vpop.f32.mrb[0].mxu0
        %1274 = vdwg.mxu0
        %v1275 = vadd.f32 %v1061, %v1270
        %1276 = vrot.lane.b32.xlu0 %v619, 104
        %v1277 = vpop.permute.xlu0 %1276
        %1278 = vrot.lane.b32.xlu0 %v614, 72
        %v1279 = vpop.permute.xlu0 %1278
        %v1280 = vsel %vm631, %v1277, 0
        %v1282 = vsel %vm631, %v1279, 0
        %1284 = vmatprep.subr.mxu0 0.0
        %1285 = vmatpush1.xpose.msra.mxu0 %v1282
        %1286 = vmatprep.subr.mxu0 0.0
        %1287 = vmatpush1.xpose.msra.mxu0 0.0
        %1288 = vmatprep.subr.mxu0 0.0
        %1289 = vmatpush1.xpose.msra.mxu0 0.0
        %1290 = vmatprep.subr.mxu0 0.0
        %1291 = vmatpush1.xpose.msra.mxu0 0.0
        %1292 = vmatprep.subr.mxu0 0.0
        %1293 = vmatpush1.xpose.msra.mxu0 0.0
        %1294 = vmatprep.subr.mxu0 0.0
        %1295 = vmatpush1.xpose.msra.mxu0 0.0
        %1296 = vmatprep.subr.mxu0 0.0
        %1297 = vmatpush1.xpose.msra.mxu0 0.0
        %1298 = vmatprep.subr.mxu0 0.0
        %1299 = vmatpush1.xpose.msra.mxu0 0.0
        %1300 = vmatprep.subr.mxu0 0.0
        %1301 = vmatpush1.xpose.msra.mxu0 0.0
        %1302 = vmatprep.subr.mxu0 0.0
        %1303 = vmatpush1.xpose.msra.mxu0 0.0
        %1304 = vmatprep.subr.mxu0 0.0
        %1305 = vmatpush1.xpose.msra.mxu0 0.0
        %1306 = vmatprep.subr.mxu0 0.0
        %1307 = vmatpush1.xpose.msra.mxu0 0.0
        %1308 = vmatprep.subr.mxu0 0.0
        %1309 = vmatpush1.xpose.msra.mxu0 0.0
        %1310 = vmatprep.subr.mxu0 0.0
        %1311 = vmatpush1.xpose.msra.mxu0 0.0
        %1312 = vmatprep.subr.mxu0 0.0
        %1313 = vmatpush1.xpose.msra.mxu0 0.0
        %1314 = vmatprep.subr.mxu0 0.0
        %1315 = vmatpush1.xpose.msra.mxu0 0.0
        %1316 = vmatprep.subr.mxu0 0.0
        %1317 = vmatpush1.xpose.msra.mxu0 0.0
        %1318 = vmatprep.subr.mxu0 0.0
        %1319 = vmatpush1.xpose.msra.mxu0 0.0
        %1320 = vmatprep.subr.mxu0 0.0
        %1321 = vmatpush1.xpose.msra.mxu0 0.0
        %1322 = vmatprep.subr.mxu0 0.0
        %1323 = vmatpush1.xpose.msra.mxu0 0.0
        %1324 = vmatprep.subr.mxu0 0.0
        %1325 = vmatpush1.xpose.msra.mxu0 0.0
        %1326 = vmatprep.subr.mxu0 0.0
        %1327 = vmatpush1.xpose.msra.mxu0 0.0
        %1328 = vmatprep.subr.mxu0 0.0
        %1329 = vmatpush1.xpose.msra.mxu0 0.0
        %1330 = vmatprep.subr.mxu0 0.0
        %1331 = vmatpush1.xpose.msra.mxu0 0.0
        %1332 = vmatprep.subr.mxu0 0.0
        %1333 = vmatpush1.xpose.msra.mxu0 0.0
        %1334 = vmatprep.subr.mxu0 0.0
        %1335 = vmatpush1.xpose.msra.mxu0 0.0
        %1336 = vmatprep.subr.mxu0 0.0
        %1337 = vmatpush1.xpose.msra.mxu0 0.0
        %1338 = vmatprep.subr.mxu0 0.0
        %1339 = vmatpush1.xpose.msra.mxu0 0.0
        %1340 = vmatprep.subr.mxu0 0.0
        %1341 = vmatpush1.xpose.msra.mxu0 0.0
        %1342 = vmatprep.subr.mxu0 0.0
        %1343 = vmatpush1.xpose.msra.mxu0 0.0
        %1344 = vmatprep.subr.mxu0 0.0
        %1345 = vmatpush1.xpose.msra.mxu0 0.0
        %1346 = vmatprep.subr.mxu0 0.0
        %1347 = vmatpush1.xpose.msra.mxu0 0.0
        %1348 = vmatprep.mubr.f32.mxu0 0.0
        %1349 = vmatmul.mubr.f32.gmra.mrb[0].mxu0 %v1280
        %v1350 = vpop.f32.mrb[0].mxu0
        %v1351 = vadd.f32 %v530, %v1350
        %v1352 = vpop.f32.mrb[0].mxu0
        %1353 = vdwg.mxu0
        %v1354 = vsel %vm631, %v1351, -inf
        %1355 = vmax.xlane.f32.xlu0 %v1354
        %v1356 = vpop.xlane.xlu0 %1355
        %v1357 = vsub.f32 %v1351, %v1356
        %v1358 = vmul.f32 %v1357, 1.442695
        %v1359 = vpow.pop %v1358
        %v1360 = vsel %vm631, %v1359, 0.0
        %1361 = vadd.xlane.f32.xlu0 %v1360
        %v1362 = vpop.xlane.xlu0 %1361
        %v1363 = vrcp.pop %v1362
        %v1364 = vmul.f32 %v1359, %v1363
        %1365 = vrot.lane.b32.xlu0 %v614, 40
        %v1366 = vpop.permute.xlu0 %1365
        %v1369 = vsel %vm631, %v1364, 0
        %1371 = vmatprep.subr.mxu0 0.0
        %1372 = vmatpush1.msra.mxu0 %v1366
        %1373 = vmatprep.subr.mxu0 0.0
        %1374 = vmatpush1.msra.mxu0 0.0
        %1375 = vmatprep.subr.mxu0 0.0
        %1376 = vmatpush1.msra.mxu0 0.0
        %1377 = vmatprep.subr.mxu0 0.0
        %1378 = vmatpush1.msra.mxu0 0.0
        %1379 = vmatprep.subr.mxu0 0.0
        %1380 = vmatpush1.msra.mxu0 0.0
        %1381 = vmatprep.subr.mxu0 0.0
        %1382 = vmatpush1.msra.mxu0 0.0
        %1383 = vmatprep.subr.mxu0 0.0
        %1384 = vmatpush1.msra.mxu0 0.0
        %1385 = vmatprep.subr.mxu0 0.0
        %1386 = vmatpush1.msra.mxu0 0.0
        %1387 = vmatprep.subr.mxu0 0.0
        %1388 = vmatpush1.msra.mxu0 0.0
        %1389 = vmatprep.subr.mxu0 0.0
        %1390 = vmatpush1.msra.mxu0 0.0
        %1391 = vmatprep.subr.mxu0 0.0
        %1392 = vmatpush1.msra.mxu0 0.0
        %1393 = vmatprep.subr.mxu0 0.0
        %1394 = vmatpush1.msra.mxu0 0.0
        %1395 = vmatprep.subr.mxu0 0.0
        %1396 = vmatpush1.msra.mxu0 0.0
        %1397 = vmatprep.subr.mxu0 0.0
        %1398 = vmatpush1.msra.mxu0 0.0
        %1399 = vmatprep.subr.mxu0 0.0
        %1400 = vmatpush1.msra.mxu0 0.0
        %1401 = vmatprep.subr.mxu0 0.0
        %1402 = vmatpush1.msra.mxu0 0.0
        %1403 = vmatprep.subr.mxu0 0.0
        %1404 = vmatpush1.msra.mxu0 0.0
        %1405 = vmatprep.subr.mxu0 0.0
        %1406 = vmatpush1.msra.mxu0 0.0
        %1407 = vmatprep.subr.mxu0 0.0
        %1408 = vmatpush1.msra.mxu0 0.0
        %1409 = vmatprep.subr.mxu0 0.0
        %1410 = vmatpush1.msra.mxu0 0.0
        %1411 = vmatprep.subr.mxu0 0.0
        %1412 = vmatpush1.msra.mxu0 0.0
        %1413 = vmatprep.subr.mxu0 0.0
        %1414 = vmatpush1.msra.mxu0 0.0
        %1415 = vmatprep.subr.mxu0 0.0
        %1416 = vmatpush1.msra.mxu0 0.0
        %1417 = vmatprep.subr.mxu0 0.0
        %1418 = vmatpush1.msra.mxu0 0.0
        %1419 = vmatprep.subr.mxu0 0.0
        %1420 = vmatpush1.msra.mxu0 0.0
        %1421 = vmatprep.subr.mxu0 0.0
        %1422 = vmatpush1.msra.mxu0 0.0
        %1423 = vmatprep.subr.mxu0 0.0
        %1424 = vmatpush1.msra.mxu0 0.0
        %1425 = vmatprep.subr.mxu0 0.0
        %1426 = vmatpush1.msra.mxu0 0.0
        %1427 = vmatprep.subr.mxu0 0.0
        %1428 = vmatpush1.msra.mxu0 0.0
        %1429 = vmatprep.subr.mxu0 0.0
        %1430 = vmatpush1.msra.mxu0 0.0
        %1431 = vmatprep.subr.mxu0 0.0
        %1432 = vmatpush1.msra.mxu0 0.0
        %1433 = vmatprep.subr.mxu0 0.0
        %1434 = vmatpush1.msra.mxu0 0.0
        %1435 = vmatprep.mubr.f32.mxu0 0.0
        %1436 = vmatmul.mubr.f32.gmra.mrb[0].mxu0 %v1369
        %v1437 = vpop.f32.mrb[0].mxu0
        %v1438 = vadd.f32 0.0, %v1437
        %v1439 = vpop.f32.mrb[0].mxu0
        %1440 = vdwg.mxu0
        %v1441 = vpack.c.bf16 %v1438, %v1438
        %v1442 = vpack.c.bf16 %v797, %v797
        %v1444 = vsel %vm631, %v1441, 0
        %v1447 = vsel %vm803, %v1442, 0
        %1449 = vmatprep.subr.bf16.mxu0 0
        %1450 = vmatpush1.bf16.msra.mxu0 %v1447
        %1451 = vmatprep.subr.bf16.mxu0 0
        %1452 = vmatpush1.bf16.msra.mxu0 0
        %1453 = vmatprep.subr.bf16.mxu0 0
        %1454 = vmatpush1.bf16.msra.mxu0 0
        %1455 = vmatprep.subr.bf16.mxu0 0
        %1456 = vmatpush1.bf16.msra.mxu0 0
        %1457 = vmatprep.subr.bf16.mxu0 0
        %1458 = vmatpush1.bf16.msra.mxu0 0
        %1459 = vmatprep.subr.bf16.mxu0 0
        %1460 = vmatpush1.bf16.msra.mxu0 0
        %1461 = vmatprep.subr.bf16.mxu0 0
        %1462 = vmatpush1.bf16.msra.mxu0 0
        %1463 = vmatprep.subr.bf16.mxu0 0
        %1464 = vmatpush1.bf16.msra.mxu0 0
        %1465 = vmatprep.subr.bf16.mxu0 0
        %1466 = vmatpush1.bf16.msra.mxu0 0
        %1467 = vmatprep.subr.bf16.mxu0 0
        %1468 = vmatpush1.bf16.msra.mxu0 0
        %1469 = vmatprep.subr.bf16.mxu0 0
        %1470 = vmatpush1.bf16.msra.mxu0 0
        %1471 = vmatprep.subr.bf16.mxu0 0
        %1472 = vmatpush1.bf16.msra.mxu0 0
        %1473 = vmatprep.subr.bf16.mxu0 0
        %1474 = vmatpush1.bf16.msra.mxu0 0
        %1475 = vmatprep.subr.bf16.mxu0 0
        %1476 = vmatpush1.bf16.msra.mxu0 0
        %1477 = vmatprep.subr.bf16.mxu0 0
        %1478 = vmatpush1.bf16.msra.mxu0 0
        %1479 = vmatprep.subr.bf16.mxu0 0
        %1480 = vmatpush1.bf16.msra.mxu0 0
        %1481 = vmatprep.mubr.bf16.mxu0 0
        %1482 = vmatmul.mubr.bf16.gmra.mrb[0].mxu0 %v1444
        %v1483 = vpop.f32.mrb[0].mxu0
        %v1484 = vadd.f32 0.0, %v1483
        %v1485 = vpop.f32.mrb[0].mxu0
        %v1486 = vpop.f32.mrb[0].mxu0
        %v1487 = vpop.f32.mrb[0].mxu0
        %1488 = vdwg.mxu0
        %v1489 = vadd.f32 %v1275, %v1484
        %v1490 = vadd.f32 %v524, %v1489
        %v1491 = vld [vmem:[%s8] sm:$0x1]
        %v1492 = vld [vmem:[%s9] sm:$0x1]
        %v1493 = vsel %vm533, %v1490, 0.0
        %1494 = vadd.xlane.f32.xlu0 %v1493
        %v1495 = vpop.xlane.xlu0 %1494
        %v1496 = vmul.f32 %v1495, %v537
        %v1497 = vsub.f32 %v1490, %v1496
        %v1498 = vmul.f32 %v1497, %v1497
        %v1499 = vsel %vm533, %v1498, 0.0
        %1500 = vadd.xlane.f32.xlu0 %v1499
        %v1501 = vpop.xlane.xlu0 %1500
        %v1502 = vmul.f32 %v1501, %v537
        %v1503 = vadd.f32 %v1502, 1e-05
        %v1504 = vrsqrt.pop %v1503
        %v1505 = vmul.f32 %v1497, %v1504
        %v1507 = vlaneseq
        %v1508 = vshrl.u32 %v1507, 7
        %v1509 = vsub.s32 0, %v1508
        %v1510 = vrot.slane %v1491, %v1509
        %v1512 = vmul.f32 %v1505, %v1510
        %v1514 = vlaneseq
        %v1515 = vshrl.u32 %v1514, 7
        %v1516 = vsub.s32 0, %v1515
        %v1517 = vrot.slane %v1492, %v1516
        %v1519 = vadd.f32 %v1512, %v1517
        %v1520 = vld [vmem:[%s10] sm:$0xff]
        %v1521 = vld [vmem:[%s10 + $0x8] sm:$0xff]
        %v1522 = vld [vmem:[%s10 + $0x10] sm:$0xff]
        %v1523 = vld [vmem:[%s10 + $0x18] sm:$0xff]
        %v1524 = vpack.c.bf16 %v1519, %v1519
        %v1525 = vpack.c.bf16 %v1521, %v1520
        %v1526 = vpack.c.bf16 %v1523, %v1522
        %v1527 = vld [vmem:[%s11] sm:$0x1]
        %v1529 = vlaneseq
        %v1530 = vshrl.u32 %v1529, 7
        %v1531 = vsub.s32 0, %v1530
        %v1532 = vrot.slane %v1527, %v1531
        %v1535 = vsel %vm533, %v1524, 0
        %1537 = vmatprep.subr.bf16.mxu0 0
        %1538 = vmatpush1.bf16.msra.mxu0 %v1525
        %1539 = vmatprep.subr.bf16.mxu0 0
        %1540 = vmatpush1.bf16.msra.mxu0 %v1526
        %1541 = vmatprep.subr.bf16.mxu0 0
        %1542 = vmatpush1.bf16.msra.mxu0 0
        %1543 = vmatprep.subr.bf16.mxu0 0
        %1544 = vmatpush1.bf16.msra.mxu0 0
        %1545 = vmatprep.subr.bf16.mxu0 0
        %1546 = vmatpush1.bf16.msra.mxu0 0
        %1547 = vmatprep.subr.bf16.mxu0 0
        %1548 = vmatpush1.bf16.msra.mxu0 0
        %1549 = vmatprep.subr.bf16.mxu0 0
        %1550 = vmatpush1.bf16.msra.mxu0 0
        %1551 = vmatprep.subr.bf16.mxu0 0
        %1552 = vmatpush1.bf16.msra.mxu0 0
        %1553 = vmatprep.subr.bf16.mxu0 0
        %1554 = vmatpush1.bf16.msra.mxu0 0
        %1555 = vmatprep.subr.bf16.mxu0 0
        %1556 = vmatpush1.bf16.msra.mxu0 0
        %1557 = vmatprep.subr.bf16.mxu0 0
        %1558 = vmatpush1.bf16.msra.mxu0 0
        %1559 = vmatprep.subr.bf16.mxu0 0
        %1560 = vmatpush1.bf16.msra.mxu0 0
        %1561 = vmatprep.subr.bf16.mxu0 0
        %1562 = vmatpush1.bf16.msra.mxu0 0
        %1563 = vmatprep.subr.bf16.mxu0 0
        %1564 = vmatpush1.bf16.msra.mxu0 0
        %1565 = vmatprep.subr.bf16.mxu0 0
        %1566 = vmatpush1.bf16.msra.mxu0 0
        %1567 = vmatprep.subr.bf16.mxu0 0
        %1568 = vmatpush1.bf16.msra.mxu0 0
        %1569 = vmatprep.mubr.bf16.mxu0 0
        %1570 = vmatmul.mubr.bf16.gmra.mrb[0].mxu0 %v1535
        %v1571 = vpop.f32.mrb[0].mxu0
        %v1572 = vadd.f32 %v1532, %v1571
        %v1573 = vpop.f32.mrb[0].mxu0
        %v1574 = vpop.f32.mrb[0].mxu0
        %v1575 = vpop.f32.mrb[0].mxu0
        %1576 = vdwg.mxu0
        %v1577 = vmul.f32 %v1572, 1.702
        %v1578 = vxor.u32 %v1577, 2147483648
        %v1579 = vmul.f32 %v1578, 1.442695
        %v1580 = vpow.pop %v1579
        %v1581 = vadd.f32 %v1580, 1.0
        %v1582 = vrcp.pop %v1581
        %v1583 = vmul.f32 1.0, %v1582
        %v1584 = vmul.f32 %v1572, %v1583
        %v1585 = vld [vmem:[%s12] sm:$0xff]
        %v1586 = vld [vmem:[%s12 + $0x8] sm:$0xff]
        %v1587 = vld [vmem:[%s12 + $0x10] sm:$0xff]
        %v1588 = vld [vmem:[%s12 + $0x18] sm:$0xff]
        %v1589 = vld [vmem:[%s12 + $0x20] sm:$0xff]
        %v1590 = vld [vmem:[%s12 + $0x28] sm:$0xff]
        %v1591 = vld [vmem:[%s12 + $0x30] sm:$0xff]
        %v1592 = vld [vmem:[%s12 + $0x38] sm:$0xff]
        %v1593 = vld [vmem:[%s12 + $0x40] sm:$0xff]
        %v1594 = vld [vmem:[%s12 + $0x48] sm:$0xff]
        %v1595 = vld [vmem:[%s12 + $0x50] sm:$0xff]
        %v1596 = vld [vmem:[%s12 + $0x58] sm:$0xff]
        %v1597 = vld [vmem:[%s12 + $0x60] sm:$0xff]
        %v1598 = vld [vmem:[%s12 + $0x68] sm:$0xff]
        %v1599 = vld [vmem:[%s12 + $0x70] sm:$0xff]
        %v1600 = vld [vmem:[%s12 + $0x78] sm:$0xff]
        %v1601 = vpack.c.bf16 %v1584, %v1584
        %v1602 = vpack.c.bf16 %v1586, %v1585
        %v1603 = vpack.c.bf16 %v1588, %v1587
        %v1604 = vpack.c.bf16 %v1590, %v1589
        %v1605 = vpack.c.bf16 %v1592, %v1591
        %v1606 = vpack.c.bf16 %v1594, %v1593
        %v1607 = vpack.c.bf16 %v1596, %v1595
        %v1608 = vpack.c.bf16 %v1598, %v1597
        %v1609 = vpack.c.bf16 %v1600, %v1599
        %1610 = vmatprep.subr.bf16.mxu0 0
        %1611 = vmatpush1.bf16.msra.mxu0 %v1602
        %1612 = vmatprep.subr.bf16.mxu0 0
        %1613 = vmatpush1.bf16.msra.mxu0 %v1603
        %1614 = vmatprep.subr.bf16.mxu0 0
        %1615 = vmatpush1.bf16.msra.mxu0 %v1604
        %1616 = vmatprep.subr.bf16.mxu0 0
        %1617 = vmatpush1.bf16.msra.mxu0 %v1605
        %1618 = vmatprep.subr.bf16.mxu0 0
        %1619 = vmatpush1.bf16.msra.mxu0 %v1606
        %1620 = vmatprep.subr.bf16.mxu0 0
        %1621 = vmatpush1.bf16.msra.mxu0 %v1607
        %1622 = vmatprep.subr.bf16.mxu0 0
        %1623 = vmatpush1.bf16.msra.mxu0 %v1608
        %1624 = vmatprep.subr.bf16.mxu0 0
        %1625 = vmatpush1.bf16.msra.mxu0 %v1609
        %1626 = vmatprep.subr.bf16.mxu0 0
        %1627 = vmatpush1.bf16.msra.mxu0 0
        %1628 = vmatprep.subr.bf16.mxu0 0
        %1629 = vmatpush1.bf16.msra.mxu0 0
        %1630 = vmatprep.subr.bf16.mxu0 0
        %1631 = vmatpush1.bf16.msra.mxu0 0
        %1632 = vmatprep.subr.bf16.mxu0 0
        %1633 = vmatpush1.bf16.msra.mxu0 0
        %1634 = vmatprep.subr.bf16.mxu0 0
        %1635 = vmatpush1.bf16.msra.mxu0 0
        %1636 = vmatprep.subr.bf16.mxu0 0
        %1637 = vmatpush1.bf16.msra.mxu0 0
        %1638 = vmatprep.subr.bf16.mxu0 0
        %1639 = vmatpush1.bf16.msra.mxu0 0
        %1640 = vmatprep.subr.bf16.mxu0 0
        %1641 = vmatpush1.bf16.msra.mxu0 0
        %1642 = vmatprep.mubr.bf16.mxu0 0
        %1643 = vmatmul.mubr.bf16.gmra.mrb[0].mxu0 %v1601
        %v1644 = vpop.f32.mrb[0].mxu0
        %v1645 = vadd.f32 0.0, %v1644
        %v1646 = vpop.f32.mrb[0].mxu0
        %v1647 = vpop.f32.mrb[0].mxu0
        %v1648 = vpop.f32.mrb[0].mxu0
        %1649 = vdwg.mxu0
        %v1650 = vadd.f32 %v1490, %v1645
        %v1651 = vld [vmem:[%s13] sm:$0x1]
        %v1653 = vlaneseq
        %v1654 = vshrl.u32 %v1653, 7
        %v1655 = vsub.s32 0, %v1654
        %v1656 = vrot.slane %v1651, %v1655
        %v1658 = vadd.f32 %v1650, %v1656
        %s1659 = scalar_lea.vmem %s6, 1
        %v1660 = vld [vmem:[%s1659] sm:$0x1]
        %s1661 = scalar_lea.vmem %s7, 1
        %v1662 = vld [vmem:[%s1661] sm:$0x1]
        %v1663 = vsel %vm533, %v1658, 0.0
        %1664 = vadd.xlane.f32.xlu0 %v1663
        %v1665 = vpop.xlane.xlu0 %1664
        %v1666 = vmul.f32 %v1665, %v537
        %v1667 = vsub.f32 %v1658, %v1666
        %v1668 = vmul.f32 %v1667, %v1667
        %v1669 = vsel %vm533, %v1668, 0.0
        %1670 = vadd.xlane.f32.xlu0 %v1669
        %v1671 = vpop.xlane.xlu0 %1670
        %v1672 = vmul.f32 %v1671, %v537
        %v1673 = vadd.f32 %v1672, 1e-05
        %v1674 = vrsqrt.pop %v1673
        %v1675 = vmul.f32 %v1667, %v1674
        %v1677 = vlaneseq
        %v1678 = vshrl.u32 %v1677, 7
        %v1679 = vsub.s32 0, %v1678
        %v1680 = vrot.slane %v1660, %v1679
        %v1682 = vmul.f32 %v1675, %v1680
        %v1684 = vlaneseq
        %v1685 = vshrl.u32 %v1684, 7
        %v1686 = vsub.s32 0, %v1685
        %v1687 = vrot.slane %v1662, %v1686
        %v1689 = vadd.f32 %v1682, %v1687
        %s1690 = scalar_lea.vmem %s2, 32
        %v1691 = vld [vmem:[%s1690] sm:$0xff]
        %v1692 = vld [vmem:[%s1690 + $0x8] sm:$0xff]
        %v1693 = vld [vmem:[%s1690 + $0x10] sm:$0xff]
        %v1694 = vld [vmem:[%s1690 + $0x18] sm:$0xff]
        %v1695 = vpack.c.bf16 %v1689, %v1689
        %v1696 = vpack.c.bf16 %v1692, %v1691
        %v1697 = vpack.c.bf16 %v1694, %v1693
        %s1698 = scalar_lea.vmem %s3, 1
        %v1699 = vld [vmem:[%s1698] sm:$0x1]
        %v1701 = vlaneseq
        %v1702 = vshrl.u32 %v1701, 7
        %v1703 = vsub.s32 0, %v1702
        %v1704 = vrot.slane %v1699, %v1703
        %v1707 = vsel %vm533, %v1695, 0
        %1709 = vmatprep.subr.bf16.mxu0 0
        %1710 = vmatpush1.bf16.msra.mxu0 %v1696
        %1711 = vmatprep.subr.bf16.mxu0 0
        %1712 = vmatpush1.bf16.msra.mxu0 %v1697
        %1713 = vmatprep.subr.bf16.mxu0 0
        %1714 = vmatpush1.bf16.msra.mxu0 0
        %1715 = vmatprep.subr.bf16.mxu0 0
        %1716 = vmatpush1.bf16.msra.mxu0 0
        %1717 = vmatprep.subr.bf16.mxu0 0
        %1718 = vmatpush1.bf16.msra.mxu0 0
        %1719 = vmatprep.subr.bf16.mxu0 0
        %1720 = vmatpush1.bf16.msra.mxu0 0
        %1721 = vmatprep.subr.bf16.mxu0 0
        %1722 = vmatpush1.bf16.msra.mxu0 0
        %1723 = vmatprep.subr.bf16.mxu0 0
        %1724 = vmatpush1.bf16.msra.mxu0 0
        %1725 = vmatprep.subr.bf16.mxu0 0
        %1726 = vmatpush1.bf16.msra.mxu0 0
        %1727 = vmatprep.subr.bf16.mxu0 0
        %1728 = vmatpush1.bf16.msra.mxu0 0
        %1729 = vmatprep.subr.bf16.mxu0 0
        %1730 = vmatpush1.bf16.msra.mxu0 0
        %1731 = vmatprep.subr.bf16.mxu0 0
        %1732 = vmatpush1.bf16.msra.mxu0 0
        %1733 = vmatprep.subr.bf16.mxu0 0
        %1734 = vmatpush1.bf16.msra.mxu0 0
        %1735 = vmatprep.subr.bf16.mxu0 0
        %1736 = vmatpush1.bf16.msra.mxu0 0
        %1737 = vmatprep.subr.bf16.mxu0 0
        %1738 = vmatpush1.bf16.msra.mxu0 0
        %1739 = vmatprep.subr.bf16.mxu0 0
        %1740 = vmatpush1.bf16.msra.mxu0 0
        %1741 = vmatprep.mubr.bf16.mxu0 0
        %1742 = vmatmul.mubr.bf16.gmra.mrb[0].mxu0 %v1707
        %v1743 = vpop.f32.mrb[0].mxu0
        %v1744 = vadd.f32 %v1704, %v1743
        %v1745 = vpop.f32.mrb[0].mxu0
        %v1746 = vpop.f32.mrb[0].mxu0
        %v1747 = vpop.f32.mrb[0].mxu0
        %1748 = vdwg.mxu0
        %v1749 = vmul.f32 %v1744, 0.35355338
        %s1750 = scalar_lea.vmem %s5, 1
        %v1751 = vld [vmem:[%s1750] sm:$0x1]
        %v1753 = vlaneseq
        %v1754 = vshrl.u32 %v1753, 7
        %v1755 = vsub.s32 0, %v1754
        %v1756 = vrot.slane %v1751, %v1755
        %v1758 = vadd.f32 %v1756, 0.0
        %1760 = vrot.lane.b32.xlu0 %v1744, 96
        %v1761 = vpop.permute.xlu0 %1760
        %v1763 = vsel %vm631, %v1749, 0
        %v1765 = vsel %vm631, %v1761, 0
        %1767 = vmatprep.subr.mxu0 0.0
        %1768 = vmatpush1.xpose.msra.mxu0 %v1765
        %1769 = vmatprep.subr.mxu0 0.0
        %1770 = vmatpush1.xpose.msra.mxu0 0.0
        %1771 = vmatprep.subr.mxu0 0.0
        %1772 = vmatpush1.xpose.msra.mxu0 0.0
        %1773 = vmatprep.subr.mxu0 0.0
        %1774 = vmatpush1.xpose.msra.mxu0 0.0
        %1775 = vmatprep.subr.mxu0 0.0
        %1776 = vmatpush1.xpose.msra.mxu0 0.0
        %1777 = vmatprep.subr.mxu0 0.0
        %1778 = vmatpush1.xpose.msra.mxu0 0.0
        %1779 = vmatprep.subr.mxu0 0.0
        %1780 = vmatpush1.xpose.msra.mxu0 0.0
        %1781 = vmatprep.subr.mxu0 0.0
        %1782 = vmatpush1.xpose.msra.mxu0 0.0
        %1783 = vmatprep.subr.mxu0 0.0
        %1784 = vmatpush1.xpose.msra.mxu0 0.0
        %1785 = vmatprep.subr.mxu0 0.0
        %1786 = vmatpush1.xpose.msra.mxu0 0.0
        %1787 = vmatprep.subr.mxu0 0.0
        %1788 = vmatpush1.xpose.msra.mxu0 0.0
        %1789 = vmatprep.subr.mxu0 0.0
        %1790 = vmatpush1.xpose.msra.mxu0 0.0
        %1791 = vmatprep.subr.mxu0 0.0
        %1792 = vmatpush1.xpose.msra.mxu0 0.0
        %1793 = vmatprep.subr.mxu0 0.0
        %1794 = vmatpush1.xpose.msra.mxu0 0.0
        %1795 = vmatprep.subr.mxu0 0.0
        %1796 = vmatpush1.xpose.msra.mxu0 0.0
        %1797 = vmatprep.subr.mxu0 0.0
        %1798 = vmatpush1.xpose.msra.mxu0 0.0
        %1799 = vmatprep.subr.mxu0 0.0
        %1800 = vmatpush1.xpose.msra.mxu0 0.0
        %1801 = vmatprep.subr.mxu0 0.0
        %1802 = vmatpush1.xpose.msra.mxu0 0.0
        %1803 = vmatprep.subr.mxu0 0.0
        %1804 = vmatpush1.xpose.msra.mxu0 0.0
        %1805 = vmatprep.subr.mxu0 0.0
        %1806 = vmatpush1.xpose.msra.mxu0 0.0
        %1807 = vmatprep.subr.mxu0 0.0
        %1808 = vmatpush1.xpose.msra.mxu0 0.0
        %1809 = vmatprep.subr.mxu0 0.0
        %1810 = vmatpush1.xpose.msra.mxu0 0.0
        %1811 = vmatprep.subr.mxu0 0.0
        %1812 = vmatpush1.xpose.msra.mxu0 0.0
        %1813 = vmatprep.subr.mxu0 0.0
        %1814 = vmatpush1.xpose.msra.mxu0 0.0
        %1815 = vmatprep.subr.mxu0 0.0
        %1816 = vmatpush1.xpose.msra.mxu0 0.0
        %1817 = vmatprep.subr.mxu0 0.0
        %1818 = vmatpush1.xpose.msra.mxu0 0.0
        %1819 = vmatprep.subr.mxu0 0.0
        %1820 = vmatpush1.xpose.msra.mxu0 0.0
        %1821 = vmatprep.subr.mxu0 0.0
        %1822 = vmatpush1.xpose.msra.mxu0 0.0
        %1823 = vmatprep.subr.mxu0 0.0
        %1824 = vmatpush1.xpose.msra.mxu0 0.0
        %1825 = vmatprep.subr.mxu0 0.0
        %1826 = vmatpush1.xpose.msra.mxu0 0.0
        %1827 = vmatprep.subr.mxu0 0.0
        %1828 = vmatpush1.xpose.msra.mxu0 0.0
        %1829 = vmatprep.subr.mxu0 0.0
        %1830 = vmatpush1.xpose.msra.mxu0 0.0
        %1831 = vmatprep.mubr.f32.mxu0 0.0
        %1832 = vmatmul.mubr.f32.gmra.mrb[0].mxu0 %v1763
        %v1833 = vpop.f32.mrb[0].mxu0
        %v1834 = vadd.f32 %v530, %v1833
        %v1835 = vpop.f32.mrb[0].mxu0
        %1836 = vdwg.mxu0
        %v1837 = vsel %vm631, %v1834, -inf
        %1838 = vmax.xlane.f32.xlu0 %v1837
        %v1839 = vpop.xlane.xlu0 %1838
        %v1840 = vsub.f32 %v1834, %v1839
        %v1841 = vmul.f32 %v1840, 1.442695
        %v1842 = vpow.pop %v1841
        %v1843 = vsel %vm631, %v1842, 0.0
        %1844 = vadd.xlane.f32.xlu0 %v1843
        %v1845 = vpop.xlane.xlu0 %1844
        %v1846 = vrcp.pop %v1845
        %v1847 = vmul.f32 %v1842, %v1846
        %1848 = vrot.lane.b32.xlu0 %v1744, 64
        %v1849 = vpop.permute.xlu0 %1848
        %v1852 = vsel %vm631, %v1847, 0
        %1854 = vmatprep.subr.mxu0 0.0
        %1855 = vmatpush1.msra.mxu0 %v1849
        %1856 = vmatprep.subr.mxu0 0.0
        %1857 = vmatpush1.msra.mxu0 0.0
        %1858 = vmatprep.subr.mxu0 0.0
        %1859 = vmatpush1.msra.mxu0 0.0
        %1860 = vmatprep.subr.mxu0 0.0
        %1861 = vmatpush1.msra.mxu0 0.0
        %1862 = vmatprep.subr.mxu0 0.0
        %1863 = vmatpush1.msra.mxu0 0.0
        %1864 = vmatprep.subr.mxu0 0.0
        %1865 = vmatpush1.msra.mxu0 0.0
        %1866 = vmatprep.subr.mxu0 0.0
        %1867 = vmatpush1.msra.mxu0 0.0
        %1868 = vmatprep.subr.mxu0 0.0
        %1869 = vmatpush1.msra.mxu0 0.0
        %1870 = vmatprep.subr.mxu0 0.0
        %1871 = vmatpush1.msra.mxu0 0.0
        %1872 = vmatprep.subr.mxu0 0.0
        %1873 = vmatpush1.msra.mxu0 0.0
        %1874 = vmatprep.subr.mxu0 0.0
        %1875 = vmatpush1.msra.mxu0 0.0
        %1876 = vmatprep.subr.mxu0 0.0
        %1877 = vmatpush1.msra.mxu0 0.0
        %1878 = vmatprep.subr.mxu0 0.0
        %1879 = vmatpush1.msra.mxu0 0.0
        %1880 = vmatprep.subr.mxu0 0.0
        %1881 = vmatpush1.msra.mxu0 0.0
        %1882 = vmatprep.subr.mxu0 0.0
        %1883 = vmatpush1.msra.mxu0 0.0
        %1884 = vmatprep.subr.mxu0 0.0
        %1885 = vmatpush1.msra.mxu0 0.0
        %1886 = vmatprep.subr.mxu0 0.0
        %1887 = vmatpush1.msra.mxu0 0.0
        %1888 = vmatprep.subr.mxu0 0.0
        %1889 = vmatpush1.msra.mxu0 0.0
        %1890 = vmatprep.subr.mxu0 0.0
        %1891 = vmatpush1.msra.mxu0 0.0
        %1892 = vmatprep.subr.mxu0 0.0
        %1893 = vmatpush1.msra.mxu0 0.0
        %1894 = vmatprep.subr.mxu0 0.0
        %1895 = vmatpush1.msra.mxu0 0.0
        %1896 = vmatprep.subr.mxu0 0.0
        %1897 = vmatpush1.msra.mxu0 0.0
        %1898 = vmatprep.subr.mxu0 0.0
        %1899 = vmatpush1.msra.mxu0 0.0
        %1900 = vmatprep.subr.mxu0 0.0
        %1901 = vmatpush1.msra.mxu0 0.0
        %1902 = vmatprep.subr.mxu0 0.0
        %1903 = vmatpush1.msra.mxu0 0.0
        %1904 = vmatprep.subr.mxu0 0.0
        %1905 = vmatpush1.msra.mxu0 0.0
        %1906 = vmatprep.subr.mxu0 0.0
        %1907 = vmatpush1.msra.mxu0 0.0
        %1908 = vmatprep.subr.mxu0 0.0
        %1909 = vmatpush1.msra.mxu0 0.0
        %1910 = vmatprep.subr.mxu0 0.0
        %1911 = vmatpush1.msra.mxu0 0.0
        %1912 = vmatprep.subr.mxu0 0.0
        %1913 = vmatpush1.msra.mxu0 0.0
        %1914 = vmatprep.subr.mxu0 0.0
        %1915 = vmatpush1.msra.mxu0 0.0
        %1916 = vmatprep.subr.mxu0 0.0
        %1917 = vmatpush1.msra.mxu0 0.0
        %1918 = vmatprep.mubr.f32.mxu0 0.0
        %1919 = vmatmul.mubr.f32.gmra.mrb[0].mxu0 %v1852
        %v1920 = vpop.f32.mrb[0].mxu0
        %v1921 = vadd.f32 0.0, %v1920
        %v1922 = vpop.f32.mrb[0].mxu0
        %1923 = vdwg.mxu0
        %s1924 = scalar_lea.vmem %s4, 32
        %v1925 = vld [vmem:[%s1924] sm:$0xff]
        %v1926 = vld [vmem:[%s1924 + $0x8] sm:$0xff]
        %v1927 = vld [vmem:[%s1924 + $0x10] sm:$0xff]
        %v1928 = vld [vmem:[%s1924 + $0x18] sm:$0xff]
        %v1929 = vpack.c.bf16 %v1921, %v1921
        %v1930 = vpack.c.bf16 %v1925, %v1925
        %v1932 = vsel %vm631, %v1929, 0
        %v1935 = vsel %vm803, %v1930, 0
        %1937 = vmatprep.subr.bf16.mxu0 0
        %1938 = vmatpush1.bf16.msra.mxu0 %v1935
        %1939 = vmatprep.subr.bf16.mxu0 0
        %1940 = vmatpush1.bf16.msra.mxu0 0
        %1941 = vmatprep.subr.bf16.mxu0 0
        %1942 = vmatpush1.bf16.msra.mxu0 0
        %1943 = vmatprep.subr.bf16.mxu0 0
        %1944 = vmatpush1.bf16.msra.mxu0 0
        %1945 = vmatprep.subr.bf16.mxu0 0
        %1946 = vmatpush1.bf16.msra.mxu0 0
        %1947 = vmatprep.subr.bf16.mxu0 0
        %1948 = vmatpush1.bf16.msra.mxu0 0
        %1949 = vmatprep.subr.bf16.mxu0 0
        %1950 = vmatpush1.bf16.msra.mxu0 0
        %1951 = vmatprep.subr.bf16.mxu0 0
        %1952 = vmatpush1.bf16.msra.mxu0 0
        %1953 = vmatprep.subr.bf16.mxu0 0
        %1954 = vmatpush1.bf16.msra.mxu0 0
        %1955 = vmatprep.subr.bf16.mxu0 0
        %1956 = vmatpush1.bf16.msra.mxu0 0
        %1957 = vmatprep.subr.bf16.mxu0 0
        %1958 = vmatpush1.bf16.msra.mxu0 0
        %1959 = vmatprep.subr.bf16.mxu0 0
        %1960 = vmatpush1.bf16.msra.mxu0 0
        %1961 = vmatprep.subr.bf16.mxu0 0
        %1962 = vmatpush1.bf16.msra.mxu0 0
        %1963 = vmatprep.subr.bf16.mxu0 0
        %1964 = vmatpush1.bf16.msra.mxu0 0
        %1965 = vmatprep.subr.bf16.mxu0 0
        %1966 = vmatpush1.bf16.msra.mxu0 0
        %1967 = vmatprep.subr.bf16.mxu0 0
        %1968 = vmatpush1.bf16.msra.mxu0 0
        %1969 = vmatprep.mubr.bf16.mxu0 0
        %1970 = vmatmul.mubr.bf16.gmra.mrb[0].mxu0 %v1932
        %v1971 = vpop.f32.mrb[0].mxu0
        %v1972 = vadd.f32 0.0, %v1971
        %v1973 = vpop.f32.mrb[0].mxu0
        %v1974 = vpop.f32.mrb[0].mxu0
        %v1975 = vpop.f32.mrb[0].mxu0
        %1976 = vdwg.mxu0
        %v1977 = vadd.f32 %v1758, %v1972
        %1978 = vrot.lane.b32.xlu0 %v1749, 120
        %v1979 = vpop.permute.xlu0 %1978
        %1980 = vrot.lane.b32.xlu0 %v1744, 88
        %v1981 = vpop.permute.xlu0 %1980
        %v1982 = vsel %vm631, %v1979, 0
        %v1984 = vsel %vm631, %v1981, 0
        %1986 = vmatprep.subr.mxu0 0.0
        %1987 = vmatpush1.xpose.msra.mxu0 %v1984
        %1988 = vmatprep.subr.mxu0 0.0
        %1989 = vmatpush1.xpose.msra.mxu0 0.0
        %1990 = vmatprep.subr.mxu0 0.0
        %1991 = vmatpush1.xpose.msra.mxu0 0.0
        %1992 = vmatprep.subr.mxu0 0.0
        %1993 = vmatpush1.xpose.msra.mxu0 0.0
        %1994 = vmatprep.subr.mxu0 0.0
        %1995 = vmatpush1.xpose.msra.mxu0 0.0
        %1996 = vmatprep.subr.mxu0 0.0
        %1997 = vmatpush1.xpose.msra.mxu0 0.0
        %1998 = vmatprep.subr.mxu0 0.0
        %1999 = vmatpush1.xpose.msra.mxu0 0.0
        %2000 = vmatprep.subr.mxu0 0.0
        %2001 = vmatpush1.xpose.msra.mxu0 0.0
        %2002 = vmatprep.subr.mxu0 0.0
        %2003 = vmatpush1.xpose.msra.mxu0 0.0
        %2004 = vmatprep.subr.mxu0 0.0
        %2005 = vmatpush1.xpose.msra.mxu0 0.0
        %2006 = vmatprep.subr.mxu0 0.0
        %2007 = vmatpush1.xpose.msra.mxu0 0.0
        %2008 = vmatprep.subr.mxu0 0.0
        %2009 = vmatpush1.xpose.msra.mxu0 0.0
        %2010 = vmatprep.subr.mxu0 0.0
        %2011 = vmatpush1.xpose.msra.mxu0 0.0
        %2012 = vmatprep.subr.mxu0 0.0
        %2013 = vmatpush1.xpose.msra.mxu0 0.0
        %2014 = vmatprep.subr.mxu0 0.0
        %2015 = vmatpush1.xpose.msra.mxu0 0.0
        %2016 = vmatprep.subr.mxu0 0.0
        %2017 = vmatpush1.xpose.msra.mxu0 0.0
        %2018 = vmatprep.subr.mxu0 0.0
        %2019 = vmatpush1.xpose.msra.mxu0 0.0
        %2020 = vmatprep.subr.mxu0 0.0
        %2021 = vmatpush1.xpose.msra.mxu0 0.0
        %2022 = vmatprep.subr.mxu0 0.0
        %2023 = vmatpush1.xpose.msra.mxu0 0.0
        %2024 = vmatprep.subr.mxu0 0.0
        %2025 = vmatpush1.xpose.msra.mxu0 0.0
        %2026 = vmatprep.subr.mxu0 0.0
        %2027 = vmatpush1.xpose.msra.mxu0 0.0
        %2028 = vmatprep.subr.mxu0 0.0
        %2029 = vmatpush1.xpose.msra.mxu0 0.0
        %2030 = vmatprep.subr.mxu0 0.0
        %2031 = vmatpush1.xpose.msra.mxu0 0.0
        %2032 = vmatprep.subr.mxu0 0.0
        %2033 = vmatpush1.xpose.msra.mxu0 0.0
        %2034 = vmatprep.subr.mxu0 0.0
        %2035 = vmatpush1.xpose.msra.mxu0 0.0
        %2036 = vmatprep.subr.mxu0 0.0
        %2037 = vmatpush1.xpose.msra.mxu0 0.0
        %2038 = vmatprep.subr.mxu0 0.0
        %2039 = vmatpush1.xpose.msra.mxu0 0.0
        %2040 = vmatprep.subr.mxu0 0.0
        %2041 = vmatpush1.xpose.msra.mxu0 0.0
        %2042 = vmatprep.subr.mxu0 0.0
        %2043 = vmatpush1.xpose.msra.mxu0 0.0
        %2044 = vmatprep.subr.mxu0 0.0
        %2045 = vmatpush1.xpose.msra.mxu0 0.0
        %2046 = vmatprep.subr.mxu0 0.0
        %2047 = vmatpush1.xpose.msra.mxu0 0.0
        %2048 = vmatprep.subr.mxu0 0.0
        %2049 = vmatpush1.xpose.msra.mxu0 0.0
        %2050 = vmatprep.mubr.f32.mxu0 0.0
        %2051 = vmatmul.mubr.f32.gmra.mrb[0].mxu0 %v1982
        %v2052 = vpop.f32.mrb[0].mxu0
        %v2053 = vadd.f32 %v530, %v2052
        %v2054 = vpop.f32.mrb[0].mxu0
        %2055 = vdwg.mxu0
        %v2056 = vsel %vm631, %v2053, -inf
        %2057 = vmax.xlane.f32.xlu0 %v2056
        %v2058 = vpop.xlane.xlu0 %2057
        %v2059 = vsub.f32 %v2053, %v2058
        %v2060 = vmul.f32 %v2059, 1.442695
        %v2061 = vpow.pop %v2060
        %v2062 = vsel %vm631, %v2061, 0.0
        %2063 = vadd.xlane.f32.xlu0 %v2062
        %v2064 = vpop.xlane.xlu0 %2063
        %v2065 = vrcp.pop %v2064
        %v2066 = vmul.f32 %v2061, %v2065
        %2067 = vrot.lane.b32.xlu0 %v1744, 56
        %v2068 = vpop.permute.xlu0 %2067
        %v2071 = vsel %vm631, %v2066, 0
        %2073 = vmatprep.subr.mxu0 0.0
        %2074 = vmatpush1.msra.mxu0 %v2068
        %2075 = vmatprep.subr.mxu0 0.0
        %2076 = vmatpush1.msra.mxu0 0.0
        %2077 = vmatprep.subr.mxu0 0.0
        %2078 = vmatpush1.msra.mxu0 0.0
        %2079 = vmatprep.subr.mxu0 0.0
        %2080 = vmatpush1.msra.mxu0 0.0
        %2081 = vmatprep.subr.mxu0 0.0
        %2082 = vmatpush1.msra.mxu0 0.0
        %2083 = vmatprep.subr.mxu0 0.0
        %2084 = vmatpush1.msra.mxu0 0.0
        %2085 = vmatprep.subr.mxu0 0.0
        %2086 = vmatpush1.msra.mxu0 0.0
        %2087 = vmatprep.subr.mxu0 0.0
        %2088 = vmatpush1.msra.mxu0 0.0
        %2089 = vmatprep.subr.mxu0 0.0
        %2090 = vmatpush1.msra.mxu0 0.0
        %2091 = vmatprep.subr.mxu0 0.0
        %2092 = vmatpush1.msra.mxu0 0.0
        %2093 = vmatprep.subr.mxu0 0.0
        %2094 = vmatpush1.msra.mxu0 0.0
        %2095 = vmatprep.subr.mxu0 0.0
        %2096 = vmatpush1.msra.mxu0 0.0
        %2097 = vmatprep.subr.mxu0 0.0
        %2098 = vmatpush1.msra.mxu0 0.0
        %2099 = vmatprep.subr.mxu0 0.0
        %2100 = vmatpush1.msra.mxu0 0.0
        %2101 = vmatprep.subr.mxu0 0.0
        %2102 = vmatpush1.msra.mxu0 0.0
        %2103 = vmatprep.subr.mxu0 0.0
        %2104 = vmatpush1.msra.mxu0 0.0
        %2105 = vmatprep.subr.mxu0 0.0
        %2106 = vmatpush1.msra.mxu0 0.0
        %2107 = vmatprep.subr.mxu0 0.0
        %2108 = vmatpush1.msra.mxu0 0.0
        %2109 = vmatprep.subr.mxu0 0.0
        %2110 = vmatpush1.msra.mxu0 0.0
        %2111 = vmatprep.subr.mxu0 0.0
        %2112 = vmatpush1.msra.mxu0 0.0
        %2113 = vmatprep.subr.mxu0 0.0
        %2114 = vmatpush1.msra.mxu0 0.0
        %2115 = vmatprep.subr.mxu0 0.0
        %2116 = vmatpush1.msra.mxu0 0.0
        %2117 = vmatprep.subr.mxu0 0.0
        %2118 = vmatpush1.msra.mxu0 0.0
        %2119 = vmatprep.subr.mxu0 0.0
        %2120 = vmatpush1.msra.mxu0 0.0
        %2121 = vmatprep.subr.mxu0 0.0
        %2122 = vmatpush1.msra.mxu0 0.0
        %2123 = vmatprep.subr.mxu0 0.0
        %2124 = vmatpush1.msra.mxu0 0.0
        %2125 = vmatprep.subr.mxu0 0.0
        %2126 = vmatpush1.msra.mxu0 0.0
        %2127 = vmatprep.subr.mxu0 0.0
        %2128 = vmatpush1.msra.mxu0 0.0
        %2129 = vmatprep.subr.mxu0 0.0
        %2130 = vmatpush1.msra.mxu0 0.0
        %2131 = vmatprep.subr.mxu0 0.0
        %2132 = vmatpush1.msra.mxu0 0.0
        %2133 = vmatprep.subr.mxu0 0.0
        %2134 = vmatpush1.msra.mxu0 0.0
        %2135 = vmatprep.subr.mxu0 0.0
        %2136 = vmatpush1.msra.mxu0 0.0
        %2137 = vmatprep.mubr.f32.mxu0 0.0
        %2138 = vmatmul.mubr.f32.gmra.mrb[0].mxu0 %v2071
        %v2139 = vpop.f32.mrb[0].mxu0
        %v2140 = vadd.f32 0.0, %v2139
        %v2141 = vpop.f32.mrb[0].mxu0
        %2142 = vdwg.mxu0
        %v2143 = vpack.c.bf16 %v2140, %v2140
        %v2144 = vpack.c.bf16 %v1926, %v1926
        %v2146 = vsel %vm631, %v2143, 0
        %v2149 = vsel %vm803, %v2144, 0
        %2151 = vmatprep.subr.bf16.mxu0 0
        %2152 = vmatpush1.bf16.msra.mxu0 %v2149
        %2153 = vmatprep.subr.bf16.mxu0 0
        %2154 = vmatpush1.bf16.msra.mxu0 0
        %2155 = vmatprep.subr.bf16.mxu0 0
        %2156 = vmatpush1.bf16.msra.mxu0 0
        %2157 = vmatprep.subr.bf16.mxu0 0
        %2158 = vmatpush1.bf16.msra.mxu0 0
        %2159 = vmatprep.subr.bf16.mxu0 0
        %2160 = vmatpush1.bf16.msra.mxu0 0
        %2161 = vmatprep.subr.bf16.mxu0 0
        %2162 = vmatpush1.bf16.msra.mxu0 0
        %2163 = vmatprep.subr.bf16.mxu0 0
        %2164 = vmatpush1.bf16.msra.mxu0 0
        %2165 = vmatprep.subr.bf16.mxu0 0
        %2166 = vmatpush1.bf16.msra.mxu0 0
        %2167 = vmatprep.subr.bf16.mxu0 0
        %2168 = vmatpush1.bf16.msra.mxu0 0
        %2169 = vmatprep.subr.bf16.mxu0 0
        %2170 = vmatpush1.bf16.msra.mxu0 0
        %2171 = vmatprep.subr.bf16.mxu0 0
        %2172 = vmatpush1.bf16.msra.mxu0 0
        %2173 = vmatprep.subr.bf16.mxu0 0
        %2174 = vmatpush1.bf16.msra.mxu0 0
        %2175 = vmatprep.subr.bf16.mxu0 0
        %2176 = vmatpush1.bf16.msra.mxu0 0
        %2177 = vmatprep.subr.bf16.mxu0 0
        %2178 = vmatpush1.bf16.msra.mxu0 0
        %2179 = vmatprep.subr.bf16.mxu0 0
        %2180 = vmatpush1.bf16.msra.mxu0 0
        %2181 = vmatprep.subr.bf16.mxu0 0
        %2182 = vmatpush1.bf16.msra.mxu0 0
        %2183 = vmatprep.mubr.bf16.mxu0 0
        %2184 = vmatmul.mubr.bf16.gmra.mrb[0].mxu0 %v2146
        %v2185 = vpop.f32.mrb[0].mxu0
        %v2186 = vadd.f32 0.0, %v2185
        %v2187 = vpop.f32.mrb[0].mxu0
        %v2188 = vpop.f32.mrb[0].mxu0
        %v2189 = vpop.f32.mrb[0].mxu0
        %2190 = vdwg.mxu0
        %v2191 = vadd.f32 %v1977, %v2186
        %2192 = vrot.lane.b32.xlu0 %v1749, 112
        %v2193 = vpop.permute.xlu0 %2192
        %2194 = vrot.lane.b32.xlu0 %v1744, 80
        %v2195 = vpop.permute.xlu0 %2194
        %v2196 = vsel %vm631, %v2193, 0
        %v2198 = vsel %vm631, %v2195, 0
        %2200 = vmatprep.subr.mxu0 0.0
        %2201 = vmatpush1.xpose.msra.mxu0 %v2198
        %2202 = vmatprep.subr.mxu0 0.0
        %2203 = vmatpush1.xpose.msra.mxu0 0.0
        %2204 = vmatprep.subr.mxu0 0.0
        %2205 = vmatpush1.xpose.msra.mxu0 0.0
        %2206 = vmatprep.subr.mxu0 0.0
        %2207 = vmatpush1.xpose.msra.mxu0 0.0
        %2208 = vmatprep.subr.mxu0 0.0
        %2209 = vmatpush1.xpose.msra.mxu0 0.0
        %2210 = vmatprep.subr.mxu0 0.0
        %2211 = vmatpush1.xpose.msra.mxu0 0.0
        %2212 = vmatprep.subr.mxu0 0.0
        %2213 = vmatpush1.xpose.msra.mxu0 0.0
        %2214 = vmatprep.subr.mxu0 0.0
        %2215 = vmatpush1.xpose.msra.mxu0 0.0
        %2216 = vmatprep.subr.mxu0 0.0
        %2217 = vmatpush1.xpose.msra.mxu0 0.0
        %2218 = vmatprep.subr.mxu0 0.0
        %2219 = vmatpush1.xpose.msra.mxu0 0.0
        %2220 = vmatprep.subr.mxu0 0.0
        %2221 = vmatpush1.xpose.msra.mxu0 0.0
        %2222 = vmatprep.subr.mxu0 0.0
        %2223 = vmatpush1.xpose.msra.mxu0 0.0
        %2224 = vmatprep.subr.mxu0 0.0
        %2225 = vmatpush1.xpose.msra.mxu0 0.0
        %2226 = vmatprep.subr.mxu0 0.0
        %2227 = vmatpush1.xpose.msra.mxu0 0.0
        %2228 = vmatprep.subr.mxu0 0.0
        %2229 = vmatpush1.xpose.msra.mxu0 0.0
        %2230 = vmatprep.subr.mxu0 0.0
        %2231 = vmatpush1.xpose.msra.mxu0 0.0
        %2232 = vmatprep.subr.mxu0 0.0
        %2233 = vmatpush1.xpose.msra.mxu0 0.0
        %2234 = vmatprep.subr.mxu0 0.0
        %2235 = vmatpush1.xpose.msra.mxu0 0.0
        %2236 = vmatprep.subr.mxu0 0.0
        %2237 = vmatpush1.xpose.msra.mxu0 0.0
        %2238 = vmatprep.subr.mxu0 0.0
        %2239 = vmatpush1.xpose.msra.mxu0 0.0
        %2240 = vmatprep.subr.mxu0 0.0
        %2241 = vmatpush1.xpose.msra.mxu0 0.0
        %2242 = vmatprep.subr.mxu0 0.0
        %2243 = vmatpush1.xpose.msra.mxu0 0.0
        %2244 = vmatprep.subr.mxu0 0.0
        %2245 = vmatpush1.xpose.msra.mxu0 0.0
        %2246 = vmatprep.subr.mxu0 0.0
        %2247 = vmatpush1.xpose.msra.mxu0 0.0
        %2248 = vmatprep.subr.mxu0 0.0
        %2249 = vmatpush1.xpose.msra.mxu0 0.0
        %2250 = vmatprep.subr.mxu0 0.0
        %2251 = vmatpush1.xpose.msra.mxu0 0.0
        %2252 = vmatprep.subr.mxu0 0.0
        %2253 = vmatpush1.xpose.msra.mxu0 0.0
        %2254 = vmatprep.subr.mxu0 0.0
        %2255 = vmatpush1.xpose.msra.mxu0 0.0
        %2256 = vmatprep.subr.mxu0 0.0
        %2257 = vmatpush1.xpose.msra.mxu0 0.0
        %2258 = vmatprep.subr.mxu0 0.0
        %2259 = vmatpush1.xpose.msra.mxu0 0.0
        %2260 = vmatprep.subr.mxu0 0.0
        %2261 = vmatpush1.xpose.msra.mxu0 0.0
        %2262 = vmatprep.subr.mxu0 0.0
        %2263 = vmatpush1.xpose.msra.mxu0 0.0
        %2264 = vmatprep.mubr.f32.mxu0 0.0
        %2265 = vmatmul.mubr.f32.gmra.mrb[0].mxu0 %v2196
        %v2266 = vpop.f32.mrb[0].mxu0
        %v2267 = vadd.f32 %v530, %v2266
        %v2268 = vpop.f32.mrb[0].mxu0
        %2269 = vdwg.mxu0
        %v2270 = vsel %vm631, %v2267, -inf
        %2271 = vmax.xlane.f32.xlu0 %v2270
        %v2272 = vpop.xlane.xlu0 %2271
        %v2273 = vsub.f32 %v2267, %v2272
        %v2274 = vmul.f32 %v2273, 1.442695
        %v2275 = vpow.pop %v2274
        %v2276 = vsel %vm631, %v2275, 0.0
        %2277 = vadd.xlane.f32.xlu0 %v2276
        %v2278 = vpop.xlane.xlu0 %2277
        %v2279 = vrcp.pop %v2278
        %v2280 = vmul.f32 %v2275, %v2279
        %2281 = vrot.lane.b32.xlu0 %v1744, 48
        %v2282 = vpop.permute.xlu0 %2281
        %v2285 = vsel %vm631, %v2280, 0
        %2287 = vmatprep.subr.mxu0 0.0
        %2288 = vmatpush1.msra.mxu0 %v2282
        %2289 = vmatprep.subr.mxu0 0.0
        %2290 = vmatpush1.msra.mxu0 0.0
        %2291 = vmatprep.subr.mxu0 0.0
        %2292 = vmatpush1.msra.mxu0 0.0
        %2293 = vmatprep.subr.mxu0 0.0
        %2294 = vmatpush1.msra.mxu0 0.0
        %2295 = vmatprep.subr.mxu0 0.0
        %2296 = vmatpush1.msra.mxu0 0.0
        %2297 = vmatprep.subr.mxu0 0.0
        %2298 = vmatpush1.msra.mxu0 0.0
        %2299 = vmatprep.subr.mxu0 0.0
        %2300 = vmatpush1.msra.mxu0 0.0
        %2301 = vmatprep.subr.mxu0 0.0
        %2302 = vmatpush1.msra.mxu0 0.0
        %2303 = vmatprep.subr.mxu0 0.0
        %2304 = vmatpush1.msra.mxu0 0.0
        %2305 = vmatprep.subr.mxu0 0.0
        %2306 = vmatpush1.msra.mxu0 0.0
        %2307 = vmatprep.subr.mxu0 0.0
        %2308 = vmatpush1.msra.mxu0 0.0
        %2309 = vmatprep.subr.mxu0 0.0
        %2310 = vmatpush1.msra.mxu0 0.0
        %2311 = vmatprep.subr.mxu0 0.0
        %2312 = vmatpush1.msra.mxu0 0.0
        %2313 = vmatprep.subr.mxu0 0.0
        %2314 = vmatpush1.msra.mxu0 0.0
        %2315 = vmatprep.subr.mxu0 0.0
        %2316 = vmatpush1.msra.mxu0 0.0
        %2317 = vmatprep.subr.mxu0 0.0
        %2318 = vmatpush1.msra.mxu0 0.0
        %2319 = vmatprep.subr.mxu0 0.0
        %2320 = vmatpush1.msra.mxu0 0.0
        %2321 = vmatprep.subr.mxu0 0.0
        %2322 = vmatpush1.msra.mxu0 0.0
        %2323 = vmatprep.subr.mxu0 0.0
        %2324 = vmatpush1.msra.mxu0 0.0
        %2325 = vmatprep.subr.mxu0 0.0
        %2326 = vmatpush1.msra.mxu0 0.0
        %2327 = vmatprep.subr.mxu0 0.0
        %2328 = vmatpush1.msra.mxu0 0.0
        %2329 = vmatprep.subr.mxu0 0.0
        %2330 = vmatpush1.msra.mxu0 0.0
        %2331 = vmatprep.subr.mxu0 0.0
        %2332 = vmatpush1.msra.mxu0 0.0
        %2333 = vmatprep.subr.mxu0 0.0
        %2334 = vmatpush1.msra.mxu0 0.0
        %2335 = vmatprep.subr.mxu0 0.0
        %2336 = vmatpush1.msra.mxu0 0.0
        %2337 = vmatprep.subr.mxu0 0.0
        %2338 = vmatpush1.msra.mxu0 0.0
        %2339 = vmatprep.subr.mxu0 0.0
        %2340 = vmatpush1.msra.mxu0 0.0
        %2341 = vmatprep.subr.mxu0 0.0
        %2342 = vmatpush1.msra.mxu0 0.0
        %2343 = vmatprep.subr.mxu0 0.0
        %2344 = vmatpush1.msra.mxu0 0.0
        %2345 = vmatprep.subr.mxu0 0.0
        %2346 = vmatpush1.msra.mxu0 0.0
        %2347 = vmatprep.subr.mxu0 0.0
        %2348 = vmatpush1.msra.mxu0 0.0
        %2349 = vmatprep.subr.mxu0 0.0
        %2350 = vmatpush1.msra.mxu0 0.0
        %2351 = vmatprep.mubr.f32.mxu0 0.0
        %2352 = vmatmul.mubr.f32.gmra.mrb[0].mxu0 %v2285
        %v2353 = vpop.f32.mrb[0].mxu0
        %v2354 = vadd.f32 0.0, %v2353
        %v2355 = vpop.f32.mrb[0].mxu0
        %2356 = vdwg.mxu0
        %v2357 = vpack.c.bf16 %v2354, %v2354
        %v2358 = vpack.c.bf16 %v1927, %v1927
        %v2360 = vsel %vm631, %v2357, 0
        %v2363 = vsel %vm803, %v2358, 0
        %2365 = vmatprep.subr.bf16.mxu0 0
        %2366 = vmatpush1.bf16.msra.mxu0 %v2363
        %2367 = vmatprep.subr.bf16.mxu0 0
        %2368 = vmatpush1.bf16.msra.mxu0 0
        %2369 = vmatprep.subr.bf16.mxu0 0
        %2370 = vmatpush1.bf16.msra.mxu0 0
        %2371 = vmatprep.subr.bf16.mxu0 0
        %2372 = vmatpush1.bf16.msra.mxu0 0
        %2373 = vmatprep.subr.bf16.mxu0 0
        %2374 = vmatpush1.bf16.msra.mxu0 0
        %2375 = vmatprep.subr.bf16.mxu0 0
        %2376 = vmatpush1.bf16.msra.mxu0 0
        %2377 = vmatprep.subr.bf16.mxu0 0
        %2378 = vmatpush1.bf16.msra.mxu0 0
        %2379 = vmatprep.subr.bf16.mxu0 0
        %2380 = vmatpush1.bf16.msra.mxu0 0
        %2381 = vmatprep.subr.bf16.mxu0 0
        %2382 = vmatpush1.bf16.msra.mxu0 0
        %2383 = vmatprep.subr.bf16.mxu0 0
        %2384 = vmatpush1.bf16.msra.mxu0 0
        %2385 = vmatprep.subr.bf16.mxu0 0
        %2386 = vmatpush1.bf16.msra.mxu0 0
        %2387 = vmatprep.subr.bf16.mxu0 0
        %2388 = vmatpush1.bf16.msra.mxu0 0
        %2389 = vmatprep.subr.bf16.mxu0 0
        %2390 = vmatpush1.bf16.msra.mxu0 0
        %2391 = vmatprep.subr.bf16.mxu0 0
        %2392 = vmatpush1.bf16.msra.mxu0 0
        %2393 = vmatprep.subr.bf16.mxu0 0
        %2394 = vmatpush1.bf16.msra.mxu0 0
        %2395 = vmatprep.subr.bf16.mxu0 0
        %2396 = vmatpush1.bf16.msra.mxu0 0
        %2397 = vmatprep.mubr.bf16.mxu0 0
        %2398 = vmatmul.mubr.bf16.gmra.mrb[0].mxu0 %v2360
        %v2399 = vpop.f32.mrb[0].mxu0
        %v2400 = vadd.f32 0.0, %v2399
        %v2401 = vpop.f32.mrb[0].mxu0
        %v2402 = vpop.f32.mrb[0].mxu0
        %v2403 = vpop.f32.mrb[0].mxu0
        %2404 = vdwg.mxu0
        %v2405 = vadd.f32 %v2191, %v2400
        %2406 = vrot.lane.b32.xlu0 %v1749, 104
        %v2407 = vpop.permute.xlu0 %2406
        %2408 = vrot.lane.b32.xlu0 %v1744, 72
        %v2409 = vpop.permute.xlu0 %2408
        %v2410 = vsel %vm631, %v2407, 0
        %v2412 = vsel %vm631, %v2409, 0
        %2414 = vmatprep.subr.mxu0 0.0
        %2415 = vmatpush1.xpose.msra.mxu0 %v2412
        %2416 = vmatprep.subr.mxu0 0.0
        %2417 = vmatpush1.xpose.msra.mxu0 0.0
        %2418 = vmatprep.subr.mxu0 0.0
        %2419 = vmatpush1.xpose.msra.mxu0 0.0
        %2420 = vmatprep.subr.mxu0 0.0
        %2421 = vmatpush1.xpose.msra.mxu0 0.0
        %2422 = vmatprep.subr.mxu0 0.0
        %2423 = vmatpush1.xpose.msra.mxu0 0.0
        %2424 = vmatprep.subr.mxu0 0.0
        %2425 = vmatpush1.xpose.msra.mxu0 0.0
        %2426 = vmatprep.subr.mxu0 0.0
        %2427 = vmatpush1.xpose.msra.mxu0 0.0
        %2428 = vmatprep.subr.mxu0 0.0
        %2429 = vmatpush1.xpose.msra.mxu0 0.0
        %2430 = vmatprep.subr.mxu0 0.0
        %2431 = vmatpush1.xpose.msra.mxu0 0.0
        %2432 = vmatprep.subr.mxu0 0.0
        %2433 = vmatpush1.xpose.msra.mxu0 0.0
        %2434 = vmatprep.subr.mxu0 0.0
        %2435 = vmatpush1.xpose.msra.mxu0 0.0
        %2436 = vmatprep.subr.mxu0 0.0
        %2437 = vmatpush1.xpose.msra.mxu0 0.0
        %2438 = vmatprep.subr.mxu0 0.0
        %2439 = vmatpush1.xpose.msra.mxu0 0.0
        %2440 = vmatprep.subr.mxu0 0.0
        %2441 = vmatpush1.xpose.msra.mxu0 0.0
        %2442 = vmatprep.subr.mxu0 0.0
        %2443 = vmatpush1.xpose.msra.mxu0 0.0
        %2444 = vmatprep.subr.mxu0 0.0
        %2445 = vmatpush1.xpose.msra.mxu0 0.0
        %2446 = vmatprep.subr.mxu0 0.0
        %2447 = vmatpush1.xpose.msra.mxu0 0.0
        %2448 = vmatprep.subr.mxu0 0.0
        %2449 = vmatpush1.xpose.msra.mxu0 0.0
        %2450 = vmatprep.subr.mxu0 0.0
        %2451 = vmatpush1.xpose.msra.mxu0 0.0
        %2452 = vmatprep.subr.mxu0 0.0
        %2453 = vmatpush1.xpose.msra.mxu0 0.0
        %2454 = vmatprep.subr.mxu0 0.0
        %2455 = vmatpush1.xpose.msra.mxu0 0.0
        %2456 = vmatprep.subr.mxu0 0.0
        %2457 = vmatpush1.xpose.msra.mxu0 0.0
        %2458 = vmatprep.subr.mxu0 0.0
        %2459 = vmatpush1.xpose.msra.mxu0 0.0
        %2460 = vmatprep.subr.mxu0 0.0
        %2461 = vmatpush1.xpose.msra.mxu0 0.0
        %2462 = vmatprep.subr.mxu0 0.0
        %2463 = vmatpush1.xpose.msra.mxu0 0.0
        %2464 = vmatprep.subr.mxu0 0.0
        %2465 = vmatpush1.xpose.msra.mxu0 0.0
        %2466 = vmatprep.subr.mxu0 0.0
        %2467 = vmatpush1.xpose.msra.mxu0 0.0
        %2468 = vmatprep.subr.mxu0 0.0
        %2469 = vmatpush1.xpose.msra.mxu0 0.0
        %2470 = vmatprep.subr.mxu0 0.0
        %2471 = vmatpush1.xpose.msra.mxu0 0.0
        %2472 = vmatprep.subr.mxu0 0.0
        %2473 = vmatpush1.xpose.msra.mxu0 0.0
        %2474 = vmatprep.subr.mxu0 0.0
        %2475 = vmatpush1.xpose.msra.mxu0 0.0
        %2476 = vmatprep.subr.mxu0 0.0
        %2477 = vmatpush1.xpose.msra.mxu0 0.0
        %2478 = vmatprep.mubr.f32.mxu0 0.0
        %2479 = vmatmul.mubr.f32.gmra.mrb[0].mxu0 %v2410
        %v2480 = vpop.f32.mrb[0].mxu0
        %v2481 = vadd.f32 %v530, %v2480
        %v2482 = vpop.f32.mrb[0].mxu0
        %2483 = vdwg.mxu0
        %v2484 = vsel %vm631, %v2481, -inf
        %2485 = vmax.xlane.f32.xlu0 %v2484
        %v2486 = vpop.xlane.xlu0 %2485
        %v2487 = vsub.f32 %v2481, %v2486
        %v2488 = vmul.f32 %v2487, 1.442695
        %v2489 = vpow.pop %v2488
        %v2490 = vsel %vm631, %v2489, 0.0
        %2491 = vadd.xlane.f32.xlu0 %v2490
        %v2492 = vpop.xlane.xlu0 %2491
        %v2493 = vrcp.pop %v2492
        %v2494 = vmul.f32 %v2489, %v2493
        %2495 = vrot.lane.b32.xlu0 %v1744, 40
        %v2496 = vpop.permute.xlu0 %2495
        %v2499 = vsel %vm631, %v2494, 0
        %2501 = vmatprep.subr.mxu0 0.0
        %2502 = vmatpush1.msra.mxu0 %v2496
        %2503 = vmatprep.subr.mxu0 0.0
        %2504 = vmatpush1.msra.mxu0 0.0
        %2505 = vmatprep.subr.mxu0 0.0
        %2506 = vmatpush1.msra.mxu0 0.0
        %2507 = vmatprep.subr.mxu0 0.0
        %2508 = vmatpush1.msra.mxu0 0.0
        %2509 = vmatprep.subr.mxu0 0.0
        %2510 = vmatpush1.msra.mxu0 0.0
        %2511 = vmatprep.subr.mxu0 0.0
        %2512 = vmatpush1.msra.mxu0 0.0
        %2513 = vmatprep.subr.mxu0 0.0
        %2514 = vmatpush1.msra.mxu0 0.0
        %2515 = vmatprep.subr.mxu0 0.0
        %2516 = vmatpush1.msra.mxu0 0.0
        %2517 = vmatprep.subr.mxu0 0.0
        %2518 = vmatpush1.msra.mxu0 0.0
        %2519 = vmatprep.subr.mxu0 0.0
        %2520 = vmatpush1.msra.mxu0 0.0
        %2521 = vmatprep.subr.mxu0 0.0
        %2522 = vmatpush1.msra.mxu0 0.0
        %2523 = vmatprep.subr.mxu0 0.0
        %2524 = vmatpush1.msra.mxu0 0.0
        %2525 = vmatprep.subr.mxu0 0.0
        %2526 = vmatpush1.msra.mxu0 0.0
        %2527 = vmatprep.subr.mxu0 0.0
        %2528 = vmatpush1.msra.mxu0 0.0
        %2529 = vmatprep.subr.mxu0 0.0
        %2530 = vmatpush1.msra.mxu0 0.0
        %2531 = vmatprep.subr.mxu0 0.0
        %2532 = vmatpush1.msra.mxu0 0.0
        %2533 = vmatprep.subr.mxu0 0.0
        %2534 = vmatpush1.msra.mxu0 0.0
        %2535 = vmatprep.subr.mxu0 0.0
        %2536 = vmatpush1.msra.mxu0 0.0
        %2537 = vmatprep.subr.mxu0 0.0
        %2538 = vmatpush1.msra.mxu0 0.0
        %2539 = vmatprep.subr.mxu0 0.0
        %2540 = vmatpush1.msra.mxu0 0.0
        %2541 = vmatprep.subr.mxu0 0.0
        %2542 = vmatpush1.msra.mxu0 0.0
        %2543 = vmatprep.subr.mxu0 0.0
        %2544 = vmatpush1.msra.mxu0 0.0
        %2545 = vmatprep.subr.mxu0 0.0
        %2546 = vmatpush1.msra.mxu0 0.0
        %2547 = vmatprep.subr.mxu0 0.0
        %2548 = vmatpush1.msra.mxu0 0.0
        %2549 = vmatprep.subr.mxu0 0.0
        %2550 = vmatpush1.msra.mxu0 0.0
        %2551 = vmatprep.subr.mxu0 0.0
        %2552 = vmatpush1.msra.mxu0 0.0
        %2553 = vmatprep.subr.mxu0 0.0
        %2554 = vmatpush1.msra.mxu0 0.0
        %2555 = vmatprep.subr.mxu0 0.0
        %2556 = vmatpush1.msra.mxu0 0.0
        %2557 = vmatprep.subr.mxu0 0.0
        %2558 = vmatpush1.msra.mxu0 0.0
        %2559 = vmatprep.subr.mxu0 0.0
        %2560 = vmatpush1.msra.mxu0 0.0
        %2561 = vmatprep.subr.mxu0 0.0
        %2562 = vmatpush1.msra.mxu0 0.0
        %2563 = vmatprep.subr.mxu0 0.0
        %2564 = vmatpush1.msra.mxu0 0.0
        %2565 = vmatprep.mubr.f32.mxu0 0.0
        %2566 = vmatmul.mubr.f32.gmra.mrb[0].mxu0 %v2499
        %v2567 = vpop.f32.mrb[0].mxu0
        %v2568 = vadd.f32 0.0, %v2567
        %v2569 = vpop.f32.mrb[0].mxu0
        %2570 = vdwg.mxu0
        %v2571 = vpack.c.bf16 %v2568, %v2568
        %v2572 = vpack.c.bf16 %v1928, %v1928
        %v2574 = vsel %vm631, %v2571, 0
        %v2577 = vsel %vm803, %v2572, 0
        %2579 = vmatprep.subr.bf16.mxu0 0
        %2580 = vmatpush1.bf16.msra.mxu0 %v2577
        %2581 = vmatprep.subr.bf16.mxu0 0
        %2582 = vmatpush1.bf16.msra.mxu0 0
        %2583 = vmatprep.subr.bf16.mxu0 0
        %2584 = vmatpush1.bf16.msra.mxu0 0
        %2585 = vmatprep.subr.bf16.mxu0 0
        %2586 = vmatpush1.bf16.msra.mxu0 0
        %2587 = vmatprep.subr.bf16.mxu0 0
        %2588 = vmatpush1.bf16.msra.mxu0 0
        %2589 = vmatprep.subr.bf16.mxu0 0
        %2590 = vmatpush1.bf16.msra.mxu0 0
        %2591 = vmatprep.subr.bf16.mxu0 0
        %2592 = vmatpush1.bf16.msra.mxu0 0
        %2593 = vmatprep.subr.bf16.mxu0 0
        %2594 = vmatpush1.bf16.msra.mxu0 0
        %2595 = vmatprep.subr.bf16.mxu0 0
        %2596 = vmatpush1.bf16.msra.mxu0 0
        %2597 = vmatprep.subr.bf16.mxu0 0
        %2598 = vmatpush1.bf16.msra.mxu0 0
        %2599 = vmatprep.subr.bf16.mxu0 0
        %2600 = vmatpush1.bf16.msra.mxu0 0
        %2601 = vmatprep.subr.bf16.mxu0 0
        %2602 = vmatpush1.bf16.msra.mxu0 0
        %2603 = vmatprep.subr.bf16.mxu0 0
        %2604 = vmatpush1.bf16.msra.mxu0 0
        %2605 = vmatprep.subr.bf16.mxu0 0
        %2606 = vmatpush1.bf16.msra.mxu0 0
        %2607 = vmatprep.subr.bf16.mxu0 0
        %2608 = vmatpush1.bf16.msra.mxu0 0
        %2609 = vmatprep.subr.bf16.mxu0 0
        %2610 = vmatpush1.bf16.msra.mxu0 0
        %2611 = vmatprep.mubr.bf16.mxu0 0
        %2612 = vmatmul.mubr.bf16.gmra.mrb[0].mxu0 %v2574
        %v2613 = vpop.f32.mrb[0].mxu0
        %v2614 = vadd.f32 0.0, %v2613
        %v2615 = vpop.f32.mrb[0].mxu0
        %v2616 = vpop.f32.mrb[0].mxu0
        %v2617 = vpop.f32.mrb[0].mxu0
        %2618 = vdwg.mxu0
        %v2619 = vadd.f32 %v2405, %v2614
        %v2620 = vadd.f32 %v1658, %v2619
        %s2621 = scalar_lea.vmem %s8, 1
        %v2622 = vld [vmem:[%s2621] sm:$0x1]
        %s2623 = scalar_lea.vmem %s9, 1
        %v2624 = vld [vmem:[%s2623] sm:$0x1]
        %v2625 = vsel %vm533, %v2620, 0.0
        %2626 = vadd.xlane.f32.xlu0 %v2625
        %v2627 = vpop.xlane.xlu0 %2626
        %v2628 = vmul.f32 %v2627, %v537
        %v2629 = vsub.f32 %v2620, %v2628
        %v2630 = vmul.f32 %v2629, %v2629
        %v2631 = vsel %vm533, %v2630, 0.0
        %2632 = vadd.xlane.f32.xlu0 %v2631
        %v2633 = vpop.xlane.xlu0 %2632
        %v2634 = vmul.f32 %v2633, %v537
        %v2635 = vadd.f32 %v2634, 1e-05
        %v2636 = vrsqrt.pop %v2635
        %v2637 = vmul.f32 %v2629, %v2636
        %v2639 = vlaneseq
        %v2640 = vshrl.u32 %v2639, 7
        %v2641 = vsub.s32 0, %v2640
        %v2642 = vrot.slane %v2622, %v2641
        %v2644 = vmul.f32 %v2637, %v2642
        %v2646 = vlaneseq
        %v2647 = vshrl.u32 %v2646, 7
        %v2648 = vsub.s32 0, %v2647
        %v2649 = vrot.slane %v2624, %v2648
        %v2651 = vadd.f32 %v2644, %v2649
        %s2652 = scalar_lea.vmem %s10, 32
        %v2653 = vld [vmem:[%s2652] sm:$0xff]
        %v2654 = vld [vmem:[%s2652 + $0x8] sm:$0xff]
        %v2655 = vld [vmem:[%s2652 + $0x10] sm:$0xff]
        %v2656 = vld [vmem:[%s2652 + $0x18] sm:$0xff]
        %v2657 = vpack.c.bf16 %v2651, %v2651
        %v2658 = vpack.c.bf16 %v2654, %v2653
        %v2659 = vpack.c.bf16 %v2656, %v2655
        %s2660 = scalar_lea.vmem %s11, 1
        %v2661 = vld [vmem:[%s2660] sm:$0x1]
        %v2663 = vlaneseq
        %v2664 = vshrl.u32 %v2663, 7
        %v2665 = vsub.s32 0, %v2664
        %v2666 = vrot.slane %v2661, %v2665
        %v2669 = vsel %vm533, %v2657, 0
        %2671 = vmatprep.subr.bf16.mxu0 0
        %2672 = vmatpush1.bf16.msra.mxu0 %v2658
        %2673 = vmatprep.subr.bf16.mxu0 0
        %2674 = vmatpush1.bf16.msra.mxu0 %v2659
        %2675 = vmatprep.subr.bf16.mxu0 0
        %2676 = vmatpush1.bf16.msra.mxu0 0
        %2677 = vmatprep.subr.bf16.mxu0 0
        %2678 = vmatpush1.bf16.msra.mxu0 0
        %2679 = vmatprep.subr.bf16.mxu0 0
        %2680 = vmatpush1.bf16.msra.mxu0 0
        %2681 = vmatprep.subr.bf16.mxu0 0
        %2682 = vmatpush1.bf16.msra.mxu0 0
        %2683 = vmatprep.subr.bf16.mxu0 0
        %2684 = vmatpush1.bf16.msra.mxu0 0
        %2685 = vmatprep.subr.bf16.mxu0 0
        %2686 = vmatpush1.bf16.msra.mxu0 0
        %2687 = vmatprep.subr.bf16.mxu0 0
        %2688 = vmatpush1.bf16.msra.mxu0 0
        %2689 = vmatprep.subr.bf16.mxu0 0
        %2690 = vmatpush1.bf16.msra.mxu0 0
        %2691 = vmatprep.subr.bf16.mxu0 0
        %2692 = vmatpush1.bf16.msra.mxu0 0
        %2693 = vmatprep.subr.bf16.mxu0 0
        %2694 = vmatpush1.bf16.msra.mxu0 0
        %2695 = vmatprep.subr.bf16.mxu0 0
        %2696 = vmatpush1.bf16.msra.mxu0 0
        %2697 = vmatprep.subr.bf16.mxu0 0
        %2698 = vmatpush1.bf16.msra.mxu0 0
        %2699 = vmatprep.subr.bf16.mxu0 0
        %2700 = vmatpush1.bf16.msra.mxu0 0
        %2701 = vmatprep.subr.bf16.mxu0 0
        %2702 = vmatpush1.bf16.msra.mxu0 0
        %2703 = vmatprep.mubr.bf16.mxu0 0
        %2704 = vmatmul.mubr.bf16.gmra.mrb[0].mxu0 %v2669
        %v2705 = vpop.f32.mrb[0].mxu0
        %v2706 = vadd.f32 %v2666, %v2705
        %v2707 = vpop.f32.mrb[0].mxu0
        %v2708 = vpop.f32.mrb[0].mxu0
        %v2709 = vpop.f32.mrb[0].mxu0
        %2710 = vdwg.mxu0
        %v2711 = vmul.f32 %v2706, 1.702
        %v2712 = vxor.u32 %v2711, 2147483648
        %v2713 = vmul.f32 %v2712, 1.442695
        %v2714 = vpow.pop %v2713
        %v2715 = vadd.f32 %v2714, 1.0
        %v2716 = vrcp.pop %v2715
        %v2717 = vmul.f32 1.0, %v2716
        %v2718 = vmul.f32 %v2706, %v2717
        %s2719 = scalar_lea.vmem %s12, 128
        %v2720 = vld [vmem:[%s2719] sm:$0xff]
        %v2721 = vld [vmem:[%s2719 + $0x8] sm:$0xff]
        %v2722 = vld [vmem:[%s2719 + $0x10] sm:$0xff]
        %v2723 = vld [vmem:[%s2719 + $0x18] sm:$0xff]
        %v2724 = vld [vmem:[%s2719 + $0x20] sm:$0xff]
        %v2725 = vld [vmem:[%s2719 + $0x28] sm:$0xff]
        %v2726 = vld [vmem:[%s2719 + $0x30] sm:$0xff]
        %v2727 = vld [vmem:[%s2719 + $0x38] sm:$0xff]
        %v2728 = vld [vmem:[%s2719 + $0x40] sm:$0xff]
        %v2729 = vld [vmem:[%s2719 + $0x48] sm:$0xff]
        %v2730 = vld [vmem:[%s2719 + $0x50] sm:$0xff]
        %v2731 = vld [vmem:[%s2719 + $0x58] sm:$0xff]
        %v2732 = vld [vmem:[%s2719 + $0x60] sm:$0xff]
        %v2733 = vld [vmem:[%s2719 + $0x68] sm:$0xff]
        %v2734 = vld [vmem:[%s2719 + $0x70] sm:$0xff]
        %v2735 = vld [vmem:[%s2719 + $0x78] sm:$0xff]
        %v2736 = vpack.c.bf16 %v2718, %v2718
        %v2737 = vpack.c.bf16 %v2721, %v2720
        %v2738 = vpack.c.bf16 %v2723, %v2722
        %v2739 = vpack.c.bf16 %v2725, %v2724
        %v2740 = vpack.c.bf16 %v2727, %v2726
        %v2741 = vpack.c.bf16 %v2729, %v2728
        %v2742 = vpack.c.bf16 %v2731, %v2730
        %v2743 = vpack.c.bf16 %v2733, %v2732
        %v2744 = vpack.c.bf16 %v2735, %v2734
        %2745 = vmatprep.subr.bf16.mxu0 0
        %2746 = vmatpush1.bf16.msra.mxu0 %v2737
        %2747 = vmatprep.subr.bf16.mxu0 0
        %2748 = vmatpush1.bf16.msra.mxu0 %v2738
        %2749 = vmatprep.subr.bf16.mxu0 0
        %2750 = vmatpush1.bf16.msra.mxu0 %v2739
        %2751 = vmatprep.subr.bf16.mxu0 0
        %2752 = vmatpush1.bf16.msra.mxu0 %v2740
        %2753 = vmatprep.subr.bf16.mxu0 0
        %2754 = vmatpush1.bf16.msra.mxu0 %v2741
        %2755 = vmatprep.subr.bf16.mxu0 0
        %2756 = vmatpush1.bf16.msra.mxu0 %v2742
        %2757 = vmatprep.subr.bf16.mxu0 0
        %2758 = vmatpush1.bf16.msra.mxu0 %v2743
        %2759 = vmatprep.subr.bf16.mxu0 0
        %2760 = vmatpush1.bf16.msra.mxu0 %v2744
        %2761 = vmatprep.subr.bf16.mxu0 0
        %2762 = vmatpush1.bf16.msra.mxu0 0
        %2763 = vmatprep.subr.bf16.mxu0 0
        %2764 = vmatpush1.bf16.msra.mxu0 0
        %2765 = vmatprep.subr.bf16.mxu0 0
        %2766 = vmatpush1.bf16.msra.mxu0 0
        %2767 = vmatprep.subr.bf16.mxu0 0
        %2768 = vmatpush1.bf16.msra.mxu0 0
        %2769 = vmatprep.subr.bf16.mxu0 0
        %2770 = vmatpush1.bf16.msra.mxu0 0
        %2771 = vmatprep.subr.bf16.mxu0 0
        %2772 = vmatpush1.bf16.msra.mxu0 0
        %2773 = vmatprep.subr.bf16.mxu0 0
        %2774 = vmatpush1.bf16.msra.mxu0 0
        %2775 = vmatprep.subr.bf16.mxu0 0
        %2776 = vmatpush1.bf16.msra.mxu0 0
        %2777 = vmatprep.mubr.bf16.mxu0 0
        %2778 = vmatmul.mubr.bf16.gmra.mrb[0].mxu0 %v2736
        %v2779 = vpop.f32.mrb[0].mxu0
        %v2780 = vadd.f32 0.0, %v2779
        %v2781 = vpop.f32.mrb[0].mxu0
        %v2782 = vpop.f32.mrb[0].mxu0
        %v2783 = vpop.f32.mrb[0].mxu0
        %2784 = vdwg.mxu0
        %v2785 = vadd.f32 %v2620, %v2780
        %s2786 = scalar_lea.vmem %s13, 1
        %v2787 = vld [vmem:[%s2786] sm:$0x1]
        %v2789 = vlaneseq
        %v2790 = vshrl.u32 %v2789, 7
        %v2791 = vsub.s32 0, %v2790
        %v2792 = vrot.slane %v2787, %v2791
        %v2794 = vadd.f32 %v2785, %v2792
        %v2795 = vld [vmem:[%s14] sm:$0x1]
        %v2796 = vld [vmem:[%s15] sm:$0x1]
        %v2797 = vsel %vm533, %v2794, 0.0
        %2798 = vadd.xlane.f32.xlu0 %v2797
        %v2799 = vpop.xlane.xlu0 %2798
        %v2800 = vmul.f32 %v2799, %v537
        %v2801 = vsub.f32 %v2794, %v2800
        %v2802 = vmul.f32 %v2801, %v2801
        %v2803 = vsel %vm533, %v2802, 0.0
        %2804 = vadd.xlane.f32.xlu0 %v2803
        %v2805 = vpop.xlane.xlu0 %2804
        %v2806 = vmul.f32 %v2805, %v537
        %v2807 = vadd.f32 %v2806, 1e-05
        %v2808 = vrsqrt.pop %v2807
        %v2809 = vmul.f32 %v2801, %v2808
        %v2811 = vlaneseq
        %v2812 = vshrl.u32 %v2811, 7
        %v2813 = vsub.s32 0, %v2812
        %v2814 = vrot.slane %v2795, %v2813
        %v2816 = vmul.f32 %v2809, %v2814
        %v2818 = vlaneseq
        %v2819 = vshrl.u32 %v2818, 7
        %v2820 = vsub.s32 0, %v2819
        %v2821 = vrot.slane %v2796, %v2820
        %v2823 = vadd.f32 %v2816, %v2821
        %s2824 = sld [smem:[#allocation3 + %s37]]
        %v2825 = vstv %s2824
        %vm2826 = vcmp.eq.s32.totalorder %v526, %v2825
        %v2827 = vsel %vm2826, 1, 0
        %v2828 = vcvt.s32.f32 %v2827
        %v2829 = vmul.f32 %v2828, %v2823
        %v2830 = vsel %vm533, %v2829, 0.0
        %v2831 = vrot.slane %v2830, 4
        %v2832 = vadd.f32 %v2830, %v2831
        %v2833 = vrot.slane %v2832, 2
        %v2834 = vadd.f32 %v2832, %v2833
        %v2835 = vrot.slane %v2834, 1
        %v2836 = vadd.f32 %v2834, %v2835
        %v2837 = vld [vmem:[%s16] sm:$0xff]
        %v2838 = vld [vmem:[%s16 + $0x8] sm:$0xff]
        %v2839 = vld [vmem:[%s16 + $0x10] sm:$0xff]
        %v2840 = vld [vmem:[%s16 + $0x18] sm:$0xff]
        %v2841 = vpack.c.bf16 %v2836, %v2836
        %v2842 = vpack.c.bf16 %v2838, %v2837
        %v2843 = vpack.c.bf16 %v2840, %v2839
        %v2845 = vsel %vm533, %v2841, 0
        %2847 = vmatprep.subr.bf16.mxu0 0
        %2848 = vmatpush1.bf16.msra.mxu0 %v2842
        %2849 = vmatprep.subr.bf16.mxu0 0
        %2850 = vmatpush1.bf16.msra.mxu0 %v2843
        %2851 = vmatprep.subr.bf16.mxu0 0
        %2852 = vmatpush1.bf16.msra.mxu0 0
        %2853 = vmatprep.subr.bf16.mxu0 0
        %2854 = vmatpush1.bf16.msra.mxu0 0
        %2855 = vmatprep.subr.bf16.mxu0 0
        %2856 = vmatpush1.bf16.msra.mxu0 0
        %2857 = vmatprep.subr.bf16.mxu0 0
        %2858 = vmatpush1.bf16.msra.mxu0 0
        %2859 = vmatprep.subr.bf16.mxu0 0
        %2860 = vmatpush1.bf16.msra.mxu0 0
        %2861 = vmatprep.subr.bf16.mxu0 0
        %2862 = vmatpush1.bf16.msra.mxu0 0
        %2863 = vmatprep.subr.bf16.mxu0 0
        %2864 = vmatpush1.bf16.msra.mxu0 0
        %2865 = vmatprep.subr.bf16.mxu0 0
        %2866 = vmatpush1.bf16.msra.mxu0 0
        %2867 = vmatprep.subr.bf16.mxu0 0
        %2868 = vmatpush1.bf16.msra.mxu0 0
        %2869 = vmatprep.subr.bf16.mxu0 0
        %2870 = vmatpush1.bf16.msra.mxu0 0
        %2871 = vmatprep.subr.bf16.mxu0 0
        %2872 = vmatpush1.bf16.msra.mxu0 0
        %2873 = vmatprep.subr.bf16.mxu0 0
        %2874 = vmatpush1.bf16.msra.mxu0 0
        %2875 = vmatprep.subr.bf16.mxu0 0
        %2876 = vmatpush1.bf16.msra.mxu0 0
        %2877 = vmatprep.subr.bf16.mxu0 0
        %2878 = vmatpush1.bf16.msra.mxu0 0
        %2879 = vmatprep.mubr.bf16.mxu0 0
        %2880 = vmatmul.mubr.bf16.gmra.mrb[0].mxu0 %v2845
        %v2881 = vpop.f32.mrb[0].mxu0
        %v2882 = vadd.f32 0.0, %v2881
        %v2883 = vpop.f32.mrb[0].mxu0
        %v2884 = vpop.f32.mrb[0].mxu0
        %v2885 = vpop.f32.mrb[0].mxu0
        %2886 = vdwg.mxu0
        %vm2887 = vcmask 122880
        %2888 = vst.msk [vmem:[%s518] sm:$0x1] %vm2887, %v2882
        %s2889 = sand.u32 %s386, 1
        %s2890 = scalar_lea.sflag [#allocation5], %s2889
        %s2891 = sand.u32 %s386, 1
        %s2892 = scalar_lea.vmem [#allocation4], %s2891
        // Predicated region
        $region85: #{clip_text_encoder.1} parent=83 // pred_check
          %p2893 = pneg %p396
        $region86: #{clip_text_encoder.1} parent=83 // pred_check_branch
          %2895 = sbr.rel (%p2893) target = $region88
        $region87: #{clip_text_encoder.1} parent=83 // pred_region
          %s2897 = ssub.s32 16, 16
          %2898 = vsyncadd %s2890, %s2897
          %s2899 = smul.addr %s37, 16
          %s2900 = scalar_lea.hbm %s17, %s2899
          %s2902 = sshll.u32 %s2892, 4
          %s2903 = int_to_ptr.vmem [resolvable:$true] %s2902
          %2905 = dma.vmem_to_hbm [thread:$0]  %s2903, 16, %s2900, %s2890
        $region88: #{clip_text_encoder.1} parent=83 // pred_fallthru
          _
      $region84: #{clip_text_encoder.1} parent=5 // pred_fallthru
        _
      %p2906 = scmp.le.s32.totalorder 2, %s32
      // Predicated region
      $region89: #{clip_text_encoder.1} parent=5 // pred_check
        %p2907 = pneg %p2906
      $region90: #{clip_text_encoder.1} parent=5 // pred_check_branch
        %2909 = sbr.rel (%p2907) target = $region92
      $region91: #{clip_text_encoder.1} parent=5 // pred_region
        %s2910 = ssub.s32 %s32, 2
        // Predicated region
        $region93: #{clip_text_encoder.1} parent=91 // pred_check
          %p2911 = pneg %p402
        $region94: #{clip_text_encoder.1} parent=91 // pred_check_branch
          %2913 = sbr.rel (%p2911) target = $region96
        $region95: #{clip_text_encoder.1} parent=91 // pred_region
          %s2914 = sand.u32 %s387, 1
          %s2915 = scalar_lea.sflag [#allocation5], %s2914
          %s2916 = sand.u32 %s387, 1
          %s2917 = scalar_lea.vmem [#allocation4], %s2916
          %2918 = dma.done %s2915, 16
        $region96: #{clip_text_encoder.1} parent=91 // pred_fallthru
          _
      $region92: #{clip_text_encoder.1} parent=5 // pred_fallthru
        _
    $region6: #{clip_text_encoder.1} parent=1 // loop_footer
      %s36 = sadd.s32 1, %s32
    $region7: #{clip_text_encoder.1} parent=1 // loop_footer_branch
      %31 = sbr.rel target = $region3
    $region8: #{clip_text_encoder.1} parent=1 // loop_exit
      _
    %2919 = vsyncpa [#allocation5], 1
    %s2920 = scalar_lea.sflag [#allocation5], 1
    %2921 = vsyncpa %s2920, 1

</llo_original>
